<compile_context>
chip_gen: v6e
topology: v6e:2x2x1
jax: 0.10.0
libtpu: 0.0.40
codegen_flags: <defaults>
</compile_context>

<pallas_src>
import jax
import jax.numpy as jnp
import numpy as np
from jax import lax
from jax.experimental import pallas as pl
from jax.experimental.pallas import tpu as pltpu


# ------------- Kernel 1: fused Conv1+ReLU -> Conv2+ReLU -> MaxPool2d(2) ----------
def conv_stack_kernel(x_ref, w1_ref, b1_ref, w2_ref, b2_ref, o_ref):
    # x_ref : (TM, 36)    bf16  overlapped stride-2 patches, rows = (sample, h*12+w)
    # w1_ref: (36, 1536)  bf16  conv1 kernel zero-embedded per pool quadrant,
    #                           quadrant q occupies lanes [q*384, q*384+288)
    # b1_ref: (1, 1536)   f32   conv1 bias tiled over the 9 conv2 taps (0 on padding)
    # w2_ref: (384, 64)   bf16  conv2 kernel reshaped (kh,kw,cin) x cout, rows 288:384 = 0
    # b2_ref: (1, 64)     f32
    # o_ref : (TM, 64)    bf16  pooled output, rows = (sample, h*12+w), cols = channel
    x = x_ref[...]                                                       # (TM, 36)
    # conv1 (+bias, ReLU) for every position conv2 needs, all 4 quadrants at once.
    h = jnp.dot(x, w1_ref[...], preferred_element_type=jnp.float32)      # (TM, 1536)
    h = jnp.maximum(h + b1_ref[...], 0.0).astype(jnp.bfloat16)

    w2 = w2_ref[...]                                                     # (384, 64)
    pooled = None
    for q in range(4):                       # pool-window quadrant (qh, qw)
        hq = h[:, q * 384:(q + 1) * 384]     # 128-lane aligned static slice
        z = jnp.dot(hq, w2, preferred_element_type=jnp.float32)          # (TM, 64)
        pooled = z if pooled is None else jnp.maximum(pooled, z)
    # MaxPool over quadrants done; bias + ReLU commute with the max.
    o_ref[...] = jnp.maximum(pooled + b2_ref[...], 0.0).astype(jnp.bfloat16)


def conv_stack(x36, w1qc, b1t, w2p, b2, tm):
    rows = x36.shape[0]                      # multiple of tm (padded by caller)
    flops = rows * (2 * 36 * 1536 + 2 * 4 * 384 * 64)
    bytes_accessed = (rows * 36 * 2 + rows * 64 * 2
                      + (36 * 1536 + 384 * 64) * 2 + (1536 + 64) * 4)
    return pl.pallas_call(
        conv_stack_kernel,
        out_shape=jax.ShapeDtypeStruct((rows, 64), jnp.bfloat16),
        grid=(rows // tm,),
        in_specs=[
            pl.BlockSpec((tm, 36), lambda i: (i, 0)),
            pl.BlockSpec((36, 1536), lambda i: (0, 0)),
            pl.BlockSpec((1, 1536), lambda i: (0, 0)),
            pl.BlockSpec((384, 64), lambda i: (0, 0)),
            pl.BlockSpec((1, 64), lambda i: (0, 0)),
        ],
        out_specs=pl.BlockSpec((tm, 64), lambda i: (i, 0)),
        compiler_params=pltpu.CompilerParams(
            dimension_semantics=("parallel",),
            vmem_limit_bytes=32 * 1024 * 1024),
        cost_estimate=pl.CostEstimate(flops=flops, transcendentals=0,
                                      bytes_accessed=bytes_accessed),
    )(x36, w1qc, b1t, w2p, b2)


# ------------ Kernel 2: Linear(9216->128) + ReLU + Linear(128->10) ---------------
def fc_kernel(x_ref, w1_ref, b1_ref, w2_ref, b2_ref, o_ref, acc_ref):
    # x_ref: (TB, 1152) bf16   w1_ref: (1152, 128) bf16   b1_ref: (1, 128) f32
    # w2_ref: (128, 10) bf16   b2_ref: (1, 10) f32
    # o_ref: (TB, 10) f32      acc_ref: (TB, 128) f32 scratch
    @pl.when(pl.program_id(1) == 0)
    def _():
        acc_ref[...] = jnp.zeros_like(acc_ref)

    acc_ref[...] += jnp.dot(x_ref[...], w1_ref[...],
                            preferred_element_type=jnp.float32)

    @pl.when(pl.program_id(1) == pl.num_programs(1) - 1)
    def _():
        h = jnp.maximum(acc_ref[...] + b1_ref[...], 0.0).astype(jnp.bfloat16)
        o_ref[...] = (jnp.dot(h, w2_ref[...], preferred_element_type=jnp.float32)
                      + b2_ref[...])


def fc_layers(flat, wf1p, bf1, wf2, bf2, tb):
    n, k_total = flat.shape                  # (N_pad, 9216), N_pad % tb == 0
    tk = 1152                                # 9216 / 8, multiple of 128
    flops = 2 * n * k_total * 128 + 2 * n * 128 * 10
    bytes_accessed = n * k_total * 2 + k_total * 128 * 2 + 128 * 10 * 2 + n * 10 * 4
    return pl.pallas_call(
        fc_kernel,
        out_shape=jax.ShapeDtypeStruct((n, 10), jnp.float32),
        grid=(n // tb, k_total // tk),       # K axis innermost (reduction)
        in_specs=[
            pl.BlockSpec((tb, tk), lambda b, k: (b, k)),
            pl.BlockSpec((tk, 128), lambda b, k: (k, 0)),
            pl.BlockSpec((1, 128), lambda b, k: (0, 0)),
            pl.BlockSpec((128, 10), lambda b, k: (0, 0)),
            pl.BlockSpec((1, 10), lambda b, k: (0, 0)),
        ],
        out_specs=pl.BlockSpec((tb, 10), lambda b, k: (b, 0)),
        scratch_shapes=[pltpu.VMEM((tb, 128), jnp.float32)],
        compiler_params=pltpu.CompilerParams(
            dimension_semantics=("parallel", "arbitrary")),
        cost_estimate=pl.CostEstimate(flops=flops, transcendentals=0,
                                      bytes_accessed=bytes_accessed),
    )(flat, wf1p, bf1, wf2, bf2)


# --------------------- One-time parameter re-layout (exact algebra) --------------
def prepare_params(params):
    w1, b1, w2, b2, wf1, bf1, wf2, bf2 = params
    # w1qc[r=(ch*6+cw), q*384 + (kh*3+kw)*32 + c] = w1[ch-qh-kh, cw-qw-kw, 0, c]
    # (zero elsewhere, incl. the 96 padding lanes per quadrant) so that
    # X36 @ w1qc gives the im2col of conv1's output for all 4 pool quadrants.
    w1_np = np.asarray(w1, np.float32)                 # (3,3,1,32) HWIO
    b1_np = np.asarray(b1, np.float32).reshape(32)
    w1qc = np.zeros((36, 1536), np.float32)
    b1t = np.zeros((1, 1536), np.float32)
    for qh in range(2):
        for qw in range(2):
            q = qh * 2 + qw
            for kh in range(3):
                for kw in range(3):
                    col0 = q * 384 + (kh * 3 + kw) * 32
                    b1t[0, col0:col0 + 32] = b1_np
                    for k1h in range(3):
                        for k1w in range(3):
                            r = (qh + kh + k1h) * 6 + (qw + kw + k1w)
                            w1qc[r, col0:col0 + 32] = w1_np[k1h, k1w, 0, :]
    # conv2 kernel as a (384, 64) matrix (rows 288:384 zero to match the padded
    # quadrant blocks), rows ordered (kh, kw, cin).
    w2p = np.zeros((384, 64), np.float32)
    w2p[:288, :] = np.asarray(w2, np.float32).reshape(288, 64)
    # Permute wf1 rows from PyTorch (C,H,W) flatten order to the kernel's (H,W,C).
    wf1p = (np.asarray(wf1, np.float32).reshape(64, 12, 12, 128)
            .transpose(1, 2, 0, 3).reshape(12 * 12 * 64, 128))
    return (jnp.asarray(w1qc, jnp.bfloat16),
            jnp.asarray(b1t, jnp.float32),
            jnp.asarray(w2p, jnp.bfloat16),
            jnp.asarray(b2, jnp.float32),
            jnp.asarray(wf1p, jnp.bfloat16),
            jnp.asarray(bf1, jnp.float32),
            jnp.asarray(wf2, jnp.bfloat16),
            jnp.asarray(bf2, jnp.float32))


# ------------------------------- Forward (glue) ----------------------------------
@jax.jit
def zknn_conv_forward(x, kparams):
    w1qc, b1t, w2p, b2, wf1p, bf1, wf2, bf2 = kparams
    n = x.shape[0]
    x2 = x[:, 0]                                       # (N, 28, 28)
    # Overlapped stride-2 patch slab (layout plumbing on a 3 KB/sample tensor):
    #   X36[n*144 + i*12+j, ch*6+cw] = x[n, 2i+ch, 2j+cw],  i,j in 0..11, ch,cw in 0..5
    cols = []
    for ch in range(6):
        for cw in range(6):
            cols.append(x2[:, ch:ch + 24:2, cw:cw + 24:2].reshape(n, 144))
    x36 = (jnp.stack(cols, axis=-1)
           .reshape(n * 144, 36).astype(jnp.bfloat16))  # (N*144, 36) bf16

    rows = n * 144
    tm = 144 * min(4, n)                               # <=576 rows/step (VMEM-safe)
    rows_pad = ((rows + tm - 1) // tm) * tm
    if rows_pad != rows:
        x36 = jnp.pad(x36, ((0, rows_pad - rows), (0, 0)))

    pooled = conv_stack(x36, w1qc, b1t, w2p, b2, tm)   # (rows_pad, 64) bf16
    flat = pooled[:rows].reshape(n, 144 * 64)          # (N, 9216), (H,W,C) order

    tb = min(256, n)                                   # batch tile for the FC call
    n_pad = ((n + tb - 1) // tb) * tb
    if n_pad != n:
        flat = jnp.pad(flat, ((0, n_pad - n), (0, 0)))
    out = fc_layers(flat, wf1p, bf1, wf2, bf2, tb)     # (N_pad, 10) f32
    return out[:n]


# --------------------------- Pure-JAX reference (check) --------------------------
def reference_forward(x, params):
    w1, b1, w2, b2, wf1, bf1, wf2, bf2 = params
    dn = ("NCHW", "HWIO", "NCHW")
    y = lax.conv_general_dilated(x, w1, (1, 1), "VALID", dimension_numbers=dn)
    y = jax.nn.relu(y + b1.reshape(1, 32, 1, 1))
    y = lax.conv_general_dilated(y, w2, (1, 1), "VALID", dimension_numbers=dn)
    y = jax.nn.relu(y + b2.reshape(1, 64, 1, 1))
    y = lax.reduce_window(y, -jnp.inf, lax.max, (1, 1, 2, 2), (1, 1, 2, 2), "VALID")
    flat = y.reshape(y.shape[0], -1)                   # PyTorch (C,H,W) flatten order
    h = jax.nn.relu(flat @ wf1 + bf1)
    return h @ wf2 + bf2


if __name__ == "__main__":
    key = jax.random.PRNGKey(0)
    ks = jax.random.split(key, 9)

    # Deterministic synthetic parameters (shapes from ZKNNNet_Conv.__init__)
    w1 = 0.10 * jax.random.normal(ks[1], (3, 3, 1, 32), jnp.float32)     # HWIO
    b1 = 0.05 * jax.random.normal(ks[2], (1, 32), jnp.float32)
    w2 = 0.05 * jax.random.normal(ks[3], (3, 3, 32, 64), jnp.float32)    # HWIO
    b2 = 0.05 * jax.random.normal(ks[4], (1, 64), jnp.float32)
    wf1 = 0.02 * jax.random.normal(ks[5], (12 * 12 * 64, 128), jnp.float32)
    bf1 = 0.05 * jax.random.normal(ks[6], (1, 128), jnp.float32)
    wf2 = 0.10 * jax.random.normal(ks[7], (128, 10), jnp.float32)
    bf2 = 0.05 * jax.random.normal(ks[8], (1, 10), jnp.float32)
    params = (w1, b1, w2, b2, wf1, bf1, wf2, bf2)
    kparams = prepare_params(params)

    # Input: batch=2, NCHW, 28x28 (spatial size implied by the 12*12*64 Linear)
    x = jax.random.normal(ks[0], (2, 1, 28, 28), jnp.float32)

    logits = jax.block_until_ready(zknn_conv_forward(x, kparams))
    assert logits.shape == (2, 10) and logits.dtype == jnp.float32

    ref = reference_forward(x, params)
    max_err = float(jnp.max(jnp.abs(logits - ref)))
    # Kernel stores activations/weights in bf16 (f32 MXU accumulation); reference is
    # f32 storage with TPU-default matmul precision. Logits are O(0.5), so allow a
    # modest absolute tolerance.
    assert max_err < 5e-2, f"mismatch vs reference: max abs err = {max_err}"

    print("KERNEL_OK")
</pallas_src>

<mosaic_0001>
module attributes {stable_mosaic.version = 11 : i64} {
  func.func @conv_stack_kernel(%arg0: i32, %arg1: memref<288x36xbf16, #tpu.memory_space<vmem>>, %arg2: memref<36x1536xbf16, #tpu.memory_space<vmem>>, %arg3: memref<1x1536xf32, #tpu.memory_space<vmem>>, %arg4: memref<384x64xbf16, #tpu.memory_space<vmem>>, %arg5: memref<1x64xf32, #tpu.memory_space<vmem>>, %arg6: memref<288x64xbf16, #tpu.memory_space<vmem>>) attributes {dimension_semantics = [#tpu.dimension_semantics<parallel>], iteration_bounds = array<i64: 1>, scalar_prefetch = 0 : i64, scratch_operands = 0 : i64, tpu.core_type = #tpu.core_type<tc>, window_params = [{transform_indices = @transform_0, window_bounds = array<i64: 288, 36>}, {pipeline_mode = #tpu.pipeline_mode<synchronous>, transform_indices = @transform_1, window_bounds = array<i64: 36, 1536>}, {pipeline_mode = #tpu.pipeline_mode<synchronous>, transform_indices = @transform_2, window_bounds = array<i64: 1, 1536>}, {pipeline_mode = #tpu.pipeline_mode<synchronous>, transform_indices = @transform_3, window_bounds = array<i64: 384, 64>}, {pipeline_mode = #tpu.pipeline_mode<synchronous>, transform_indices = @transform_4, window_bounds = array<i64: 1, 64>}, {transform_indices = @transform_5, window_bounds = array<i64: 288, 64>}]} {
    %c0 = arith.constant 0 : index
    %c0_0 = arith.constant 0 : index
    %0 = vector.load %arg1[%c0, %c0_0] : memref<288x36xbf16, #tpu.memory_space<vmem>>, vector<288x36xbf16>
    %c0_1 = arith.constant 0 : index
    %c0_2 = arith.constant 0 : index
    %1 = vector.load %arg2[%c0_1, %c0_2] : memref<36x1536xbf16, #tpu.memory_space<vmem>>, vector<36x1536xbf16>
    %cst = arith.constant dense<0.000000e+00> : vector<288x1536xf32>
    %2 = tpu.matmul %0, %1, %cst {dimension_numbers = #tpu.dot_dimension_numbers<[1], [0], [0], [1], [0, 0, 1, 1], [], []>} : vector<288x36xbf16>, vector<36x1536xbf16>, vector<288x1536xf32> -> vector<288x1536xf32>
    %c0_3 = arith.constant 0 : index
    %c0_4 = arith.constant 0 : index
    %3 = vector.load %arg3[%c0_3, %c0_4] : memref<1x1536xf32, #tpu.memory_space<vmem>>, vector<1x1536xf32>
    %4 = vector.broadcast %3 : vector<1x1536xf32> to vector<288x1536xf32>
    %5 = arith.addf %2, %4 : vector<288x1536xf32>
    %cst_5 = arith.constant 0.000000e+00 : f32
    %6 = vector.broadcast %cst_5 : f32 to vector<288x1536xf32>
    %7 = arith.maximumf %5, %6 : vector<288x1536xf32>
    %8 = arith.truncf %7 : vector<288x1536xf32> to vector<288x1536xbf16>
    %c0_6 = arith.constant 0 : index
    %c0_7 = arith.constant 0 : index
    %9 = vector.load %arg4[%c0_6, %c0_7] : memref<384x64xbf16, #tpu.memory_space<vmem>>, vector<384x64xbf16>
    %10 = vector.extract_strided_slice %8 {offsets = [0, 0], sizes = [288, 384], strides = [1, 1]} : vector<288x1536xbf16> to vector<288x384xbf16>
    %cst_8 = arith.constant dense<0.000000e+00> : vector<288x64xf32>
    %11 = tpu.matmul %10, %9, %cst_8 {dimension_numbers = #tpu.dot_dimension_numbers<[1], [0], [0], [1], [0, 0, 1, 1], [], []>} : vector<288x384xbf16>, vector<384x64xbf16>, vector<288x64xf32> -> vector<288x64xf32>
    %12 = vector.extract_strided_slice %8 {offsets = [0, 384], sizes = [288, 384], strides = [1, 1]} : vector<288x1536xbf16> to vector<288x384xbf16>
    %cst_9 = arith.constant dense<0.000000e+00> : vector<288x64xf32>
    %13 = tpu.matmul %12, %9, %cst_9 {dimension_numbers = #tpu.dot_dimension_numbers<[1], [0], [0], [1], [0, 0, 1, 1], [], []>} : vector<288x384xbf16>, vector<384x64xbf16>, vector<288x64xf32> -> vector<288x64xf32>
    %14 = arith.maximumf %11, %13 : vector<288x64xf32>
    %15 = vector.extract_strided_slice %8 {offsets = [0, 768], sizes = [288, 384], strides = [1, 1]} : vector<288x1536xbf16> to vector<288x384xbf16>
    %cst_10 = arith.constant dense<0.000000e+00> : vector<288x64xf32>
    %16 = tpu.matmul %15, %9, %cst_10 {dimension_numbers = #tpu.dot_dimension_numbers<[1], [0], [0], [1], [0, 0, 1, 1], [], []>} : vector<288x384xbf16>, vector<384x64xbf16>, vector<288x64xf32> -> vector<288x64xf32>
    %17 = arith.maximumf %14, %16 : vector<288x64xf32>
    %18 = vector.extract_strided_slice %8 {offsets = [0, 1152], sizes = [288, 384], strides = [1, 1]} : vector<288x1536xbf16> to vector<288x384xbf16>
    %cst_11 = arith.constant dense<0.000000e+00> : vector<288x64xf32>
    %19 = tpu.matmul %18, %9, %cst_11 {dimension_numbers = #tpu.dot_dimension_numbers<[1], [0], [0], [1], [0, 0, 1, 1], [], []>} : vector<288x384xbf16>, vector<384x64xbf16>, vector<288x64xf32> -> vector<288x64xf32>
    %20 = arith.maximumf %17, %19 : vector<288x64xf32>
    %c0_12 = arith.constant 0 : index
    %c0_13 = arith.constant 0 : index
    %21 = vector.load %arg5[%c0_12, %c0_13] : memref<1x64xf32, #tpu.memory_space<vmem>>, vector<1x64xf32>
    %22 = vector.broadcast %21 : vector<1x64xf32> to vector<288x64xf32>
    %23 = arith.addf %20, %22 : vector<288x64xf32>
    %cst_14 = arith.constant 0.000000e+00 : f32
    %24 = vector.broadcast %cst_14 : f32 to vector<288x64xf32>
    %25 = arith.maximumf %23, %24 : vector<288x64xf32>
    %26 = arith.truncf %25 : vector<288x64xf32> to vector<288x64xbf16>
    %c0_15 = arith.constant 0 : index
    %c0_16 = arith.constant 0 : index
    %27 = vector.load %arg6[%c0_15, %c0_16] : memref<288x64xbf16, #tpu.memory_space<vmem>>, vector<288x64xbf16>
    tpu.vector_store %arg6[%c0_15, %c0_16], %26 {strides = array<i32>} : memref<288x64xbf16, #tpu.memory_space<vmem>>, vector<288x64xbf16>,
    return
  }
  func.func @transform_0(%arg0: i32) -> (i32, i32) {
    %c0_i32 = arith.constant 0 : i32
    %c0_i32_0 = arith.constant 0 : i32
    return %arg0, %c0_i32 : i32, i32
  }
  func.func @transform_1(%arg0: i32) -> (i32, i32) {
    %c0_i32 = arith.constant 0 : i32
    %c0_i32_0 = arith.constant 0 : i32
    %c0_i32_1 = arith.constant 0 : i32
    return %c0_i32, %c0_i32_0 : i32, i32
  }
  func.func @transform_2(%arg0: i32) -> (i32, i32) {
    %c0_i32 = arith.constant 0 : i32
    %c0_i32_0 = arith.constant 0 : i32
    %c0_i32_1 = arith.constant 0 : i32
    return %c0_i32, %c0_i32_0 : i32, i32
  }
  func.func @transform_3(%arg0: i32) -> (i32, i32) {
    %c0_i32 = arith.constant 0 : i32
    %c0_i32_0 = arith.constant 0 : i32
    %c0_i32_1 = arith.constant 0 : i32
    return %c0_i32, %c0_i32_0 : i32, i32
  }
  func.func @transform_4(%arg0: i32) -> (i32, i32) {
    %c0_i32 = arith.constant 0 : i32
    %c0_i32_0 = arith.constant 0 : i32
    %c0_i32_1 = arith.constant 0 : i32
    return %c0_i32, %c0_i32_0 : i32, i32
  }
  func.func @transform_5(%arg0: i32) -> (i32, i32) {
    %c0_i32 = arith.constant 0 : i32
    %c0_i32_0 = arith.constant 0 : i32
    return %arg0, %c0_i32 : i32, i32
  }
}

module attributes {stable_mosaic.version = 11 : i64} {
  func.func @fc_kernel(%arg0: i32, %arg1: i32, %arg2: memref<2x1152xbf16, #tpu.memory_space<vmem>>, %arg3: memref<1152x128xbf16, #tpu.memory_space<vmem>>, %arg4: memref<1x128xf32, #tpu.memory_space<vmem>>, %arg5: memref<128x10xbf16, #tpu.memory_space<vmem>>, %arg6: memref<1x10xf32, #tpu.memory_space<vmem>>, %arg7: memref<2x10xf32, #tpu.memory_space<vmem>>, %arg8: memref<2x128xf32, #tpu.memory_space<vmem>>) attributes {dimension_semantics = [#tpu.dimension_semantics<parallel>, #tpu.dimension_semantics<arbitrary>], iteration_bounds = array<i64: 1, 8>, scalar_prefetch = 0 : i64, scratch_operands = 1 : i64, tpu.core_type = #tpu.core_type<tc>, window_params = [{transform_indices = @transform_0, window_bounds = array<i64: 2, 1152>}, {transform_indices = @transform_1, window_bounds = array<i64: 1152, 128>}, {pipeline_mode = #tpu.pipeline_mode<synchronous>, transform_indices = @transform_2, window_bounds = array<i64: 1, 128>}, {pipeline_mode = #tpu.pipeline_mode<synchronous>, transform_indices = @transform_3, window_bounds = array<i64: 128, 10>}, {pipeline_mode = #tpu.pipeline_mode<synchronous>, transform_indices = @transform_4, window_bounds = array<i64: 1, 10>}, {transform_indices = @transform_5, window_bounds = array<i64: 2, 10>}]} {
    %c0_i32 = arith.constant 0 : i32
    %0 = arith.cmpi eq, %arg1, %c0_i32 : i32
    %1 = arith.extui %0 : i1 to i32
    %c0_i32_0 = arith.constant 0 : i32
    %2 = arith.cmpi ne, %1, %c0_i32_0 : i32
    scf.if %2 {
      %cst_9 = arith.constant 0.000000e+00 : f32
      %12 = vector.broadcast %cst_9 : f32 to vector<2x128xf32>
      %c0_10 = arith.constant 0 : index
      %c0_11 = arith.constant 0 : index
      %13 = vector.load %arg8[%c0_10, %c0_11] : memref<2x128xf32, #tpu.memory_space<vmem>>, vector<2x128xf32>
      tpu.vector_store %arg8[%c0_10, %c0_11], %12 {strides = array<i32>} : memref<2x128xf32, #tpu.memory_space<vmem>>, vector<2x128xf32>,
    } else {
    }
    %c0 = arith.constant 0 : index
    %c0_1 = arith.constant 0 : index
    %3 = vector.load %arg8[%c0, %c0_1] : memref<2x128xf32, #tpu.memory_space<vmem>>, vector<2x128xf32>
    %c0_2 = arith.constant 0 : index
    %c0_3 = arith.constant 0 : index
    %4 = vector.load %arg2[%c0_2, %c0_3] : memref<2x1152xbf16, #tpu.memory_space<vmem>>, vector<2x1152xbf16>
    %c0_4 = arith.constant 0 : index
    %c0_5 = arith.constant 0 : index
    %5 = vector.load %arg3[%c0_4, %c0_5] : memref<1152x128xbf16, #tpu.memory_space<vmem>>, vector<1152x128xbf16>
    %cst = arith.constant dense<0.000000e+00> : vector<2x128xf32>
    %6 = tpu.matmul %4, %5, %cst {dimension_numbers = #tpu.dot_dimension_numbers<[1], [0], [0], [1], [0, 0, 1, 1], [], []>} : vector<2x1152xbf16>, vector<1152x128xbf16>, vector<2x128xf32> -> vector<2x128xf32>
    %7 = arith.addf %3, %6 : vector<2x128xf32>
    %c0_6 = arith.constant 0 : index
    %c0_7 = arith.constant 0 : index
    %8 = vector.load %arg8[%c0_6, %c0_7] : memref<2x128xf32, #tpu.memory_space<vmem>>, vector<2x128xf32>
    tpu.vector_store %arg8[%c0_6, %c0_7], %7 {strides = array<i32>} : memref<2x128xf32, #tpu.memory_space<vmem>>, vector<2x128xf32>,
    %c7_i32 = arith.constant 7 : i32
    %9 = arith.cmpi eq, %arg1, %c7_i32 : i32
    %10 = arith.extui %9 : i1 to i32
    %c0_i32_8 = arith.constant 0 : i32
    %11 = arith.cmpi ne, %10, %c0_i32_8 : i32
    scf.if %11 {
      %c0_9 = arith.constant 0 : index
      %c0_10 = arith.constant 0 : index
      %12 = vector.load %arg8[%c0_9, %c0_10] : memref<2x128xf32, #tpu.memory_space<vmem>>, vector<2x128xf32>
      %c0_11 = arith.constant 0 : index
      %c0_12 = arith.constant 0 : index
      %13 = vector.load %arg4[%c0_11, %c0_12] : memref<1x128xf32, #tpu.memory_space<vmem>>, vector<1x128xf32>
      %14 = vector.broadcast %13 : vector<1x128xf32> to vector<2x128xf32>
      %15 = arith.addf %12, %14 : vector<2x128xf32>
      %cst_13 = arith.constant 0.000000e+00 : f32
      %16 = vector.broadcast %cst_13 : f32 to vector<2x128xf32>
      %17 = arith.maximumf %15, %16 : vector<2x128xf32>
      %18 = arith.truncf %17 : vector<2x128xf32> to vector<2x128xbf16>
      %c0_14 = arith.constant 0 : index
      %c0_15 = arith.constant 0 : index
      %19 = vector.load %arg5[%c0_14, %c0_15] : memref<128x10xbf16, #tpu.memory_space<vmem>>, vector<128x10xbf16>
      %cst_16 = arith.constant dense<0.000000e+00> : vector<2x10xf32>
      %20 = tpu.matmul %18, %19, %cst_16 {dimension_numbers = #tpu.dot_dimension_numbers<[1], [0], [0], [1], [0, 0, 1, 1], [], []>} : vector<2x128xbf16>, vector<128x10xbf16>, vector<2x10xf32> -> vector<2x10xf32>
      %c0_17 = arith.constant 0 : index
      %c0_18 = arith.constant 0 : index
      %21 = vector.load %arg6[%c0_17, %c0_18] : memref<1x10xf32, #tpu.memory_space<vmem>>, vector<1x10xf32>
      %22 = vector.broadcast %21 : vector<1x10xf32> to vector<2x10xf32>
      %23 = arith.addf %20, %22 : vector<2x10xf32>
      %c0_19 = arith.constant 0 : index
      %c0_20 = arith.constant 0 : index
      %24 = vector.load %arg7[%c0_19, %c0_20] : memref<2x10xf32, #tpu.memory_space<vmem>>, vector<2x10xf32>
      tpu.vector_store %arg7[%c0_19, %c0_20], %23 {strides = array<i32>} : memref<2x10xf32, #tpu.memory_space<vmem>>, vector<2x10xf32>,
    } else {
    }
    return
  }
  func.func @transform_0(%arg0: i32, %arg1: i32) -> (i32, i32) {
    %c0_i32 = arith.constant 0 : i32
    return %arg0, %arg1 : i32, i32
  }
  func.func @transform_1(%arg0: i32, %arg1: i32) -> (i32, i32) {
    %c0_i32 = arith.constant 0 : i32
    %c0_i32_0 = arith.constant 0 : i32
    return %arg1, %c0_i32 : i32, i32
  }
  func.func @transform_2(%arg0: i32, %arg1: i32) -> (i32, i32) {
    %c0_i32 = arith.constant 0 : i32
    %c0_i32_0 = arith.constant 0 : i32
    %c0_i32_1 = arith.constant 0 : i32
    return %c0_i32, %c0_i32_0 : i32, i32
  }
  func.func @transform_3(%arg0: i32, %arg1: i32) -> (i32, i32) {
    %c0_i32 = arith.constant 0 : i32
    %c0_i32_0 = arith.constant 0 : i32
    %c0_i32_1 = arith.constant 0 : i32
    return %c0_i32, %c0_i32_0 : i32, i32
  }
  func.func @transform_4(%arg0: i32, %arg1: i32) -> (i32, i32) {
    %c0_i32 = arith.constant 0 : i32
    %c0_i32_0 = arith.constant 0 : i32
    %c0_i32_1 = arith.constant 0 : i32
    return %c0_i32, %c0_i32_0 : i32, i32
  }
  func.func @transform_5(%arg0: i32, %arg1: i32) -> (i32, i32) {
    %c0_i32 = arith.constant 0 : i32
    %c0_i32_0 = arith.constant 0 : i32
    return %arg0, %c0_i32 : i32, i32
  }
}

</mosaic_0001>

<llo_original>
// kernel: zknn_conv_forward.3
$region0: #{zknn_conv_forward.3}
  #allocation0 [shape = 'u32[]', space=smem, size = 0x4, offset = 0x4, fixed_abs, tag = 'smem constant byte address 0x4 - core index']
  #allocation1 [shape = 'u32[144,128]{1,0:T(1,128)}', space=vmem, size = 0x12000, scoped, tag = 'internal scratch']
  #allocation2 [shape = 'f32[2,128]{1,0:T(2,128)}', space=vmem, size = 0x400, scoped, tag = 'scratch operand']
  %s0 = inlined_call_operand.vmem [shape: bf16[2,9216], index: 0, kind: input, shape index: {}]
  %s1 = inlined_call_operand.hbm [shape: bf16[9216,128], index: 1, kind: input, shape index: {}]
  %s2 = inlined_call_operand.hbm [shape: f32[1,128], index: 2, kind: input, shape index: {}]
  %s3 = inlined_call_operand.vmem [shape: bf16[128,10], index: 3, kind: input, shape index: {}]
  %s4 = inlined_call_operand.hbm [shape: f32[1,10], index: 4, kind: input, shape index: {}]
  %s5 = inlined_call_operand.hbm [shape: f32[2,10], index: 5, kind: output, shape index: {}]
  %s6 = sld [smem:[#allocation0]]
  $region73: #{zknn_conv_forward.3} parent=0
    _
  %s8 = ssub.s32 1, %s6
  %s9 = scalar_select 0, %s8, %s6
  $region1: #{zknn_conv_forward.3} parent=0
    #allocation3 [shape = 'u8[589824]{0}', space=vmem, size = 0x90000, scoped, tag = 'input window, operand 1']
    #allocation4 [shape = 's32[2]{0}', space=sflag, size = 0x8, scoped, tag = 'scoped memory for zknn_conv_forward.3']
    #allocation5 [shape = 's32[2]{0}', space=sflag, size = 0x8, scoped, tag = 'scoped memory for zknn_conv_forward.3']
    #allocation6 [shape = 'u8[512]{0}', space=vmem, size = 0x400, scoped, tag = 'input window, operand 2, single buffered']
    #allocation7 [shape = 's32[1]{0}', space=sflag, size = 0x4, scoped, tag = 'scoped memory for zknn_conv_forward.3']
    #allocation8 [shape = 'u8[512]{0}', space=vmem, size = 0x400, scoped, tag = 'input window, operand 4, single buffered']
    #allocation9 [shape = 'u8[1024]{0}', space=vmem, size = 0x400, scoped, tag = 'output window, operand 0, single buffered']
    %10 = vsyncpa [#allocation4], 0
    %s11 = scalar_lea.sflag [#allocation4], 1
    %12 = vsyncpa %s11, 0
    %13 = vsyncpa [#allocation7], 0
    %14 = vsyncpa [#allocation5], 0
    loop: start=0, step=1, limit=10
    $region2: #{zknn_conv_forward.3} parent=1 // loop_pre_header
      _
    $region3: #{zknn_conv_forward.3} parent=1 // loop_header
      %s16 = sphi 0, %s20
      %p17 = scmp.ge.s32.totalorder %s16, 10
      %s23 = sphi 0, %s35
      %s24 = sphi 0, %s31
      %s25 = sphi 0, %s23
      %s26 = sphi 0, %s24
      %s27 = sphi 0, %s25
      %s28 = sphi 0, %s26
      %s40 = sphi 0, %s42
      %s43 = sphi 0, %s40
      %s44 = sphi 0, %s43
      %s60 = sphi 0, %s44
      %s66 = sphi 0, %s68
      %s69 = sphi 0, %s66
      %s70 = sphi 0, %s69
      %s86 = sphi 0, %s70
      %s90 = sphi 0, %s90
      %s92 = sphi 0, %s90
      %s93 = sphi 0, %s92
      %s107 = sphi 0, %s93
      %s111 = sphi 0, %s111
      %s113 = sphi 0, %s111
      %s114 = sphi 0, %s113
      %s128 = sphi 0, %s114
      %s132 = sphi 0, %s132
      %s134 = sphi 0, %s132
      %s135 = sphi 0, %s134
      %s149 = sphi 0, %s135
      %s155 = sphi 0, %s157
      %s158 = sphi 0, %s155
      %s159 = sphi 0, %s158
      %s175 = sphi 0, %s159
    $region4: #{zknn_conv_forward.3} parent=1 // loop_header_branch
      %19 = sbr.rel (%p17) target = $region8
    $region5: #{zknn_conv_forward.3} parent=1 // loop_body
      %s21 = ssub.s32 %s16, 1
      %s22 = ssub.s32 %s16, 2
      %s29 = sadd.s32 1, %s24
      %p30 = scmp.ge.s32.totalorder %s29, 8
      %s31 = scalar_select %p30, 0, %s29
      %s32 = sadd.s32 1, %s23
      %s33 = scalar_select %p30, %s32, %s23
      %p34 = scmp.ge.s32.totalorder %s33, 1
      %s35 = scalar_select %p34, 0, %s33
      %s36 = ssub.s32 %s23, %s35
      %s37 = ssub.s32 %s24, %s31
      %s38 = sor.u32 %s36, %s37
      %p39 = scmp.eq.s32.totalorder %s38, 0
      %s41 = sadd.s32 %s40, 1
      %s42 = scalar_select %p39, %s40, %s41
      %p45 = pneg %p39
      %p46 = scmp.eq.s32.totalorder %s16, 7
      %p47 = por %p45, %p46
      %p48 = scmp.ne.s32.totalorder %s40, %s43
      %p49 = scmp.eq.s32.totalorder %s16, 0
      %p50 = por %p48, %p49
      %p51 = scmp.ne.s32.totalorder %s40, %s43
      %p52 = scmp.eq.s32.totalorder %s21, 7
      %p53 = por %p51, %p52
      %p54 = scmp.ne.s32.totalorder %s43, %s44
      %p55 = scmp.eq.s32.totalorder %s21, 0
      %p56 = por %p54, %p55
      %p57 = scmp.ne.s32.totalorder %s43, %s44
      %p58 = scmp.eq.s32.totalorder %s22, 7
      %p59 = por %p57, %p58
      %p61 = scmp.ne.s32.totalorder %s44, %s60
      %p62 = scmp.eq.s32.totalorder %s22, 0
      %p63 = por %p61, %p62
      %s64 = ssub.s32 %s24, %s31
      %p65 = scmp.eq.s32.totalorder %s64, 0
      %s67 = sadd.s32 %s66, 1
      %s68 = scalar_select %p65, %s66, %s67
      %p71 = pneg %p65
      %p72 = scmp.eq.s32.totalorder %s16, 7
      %p73 = por %p71, %p72
      %p74 = scmp.ne.s32.totalorder %s66, %s69
      %p75 = scmp.eq.s32.totalorder %s16, 0
      %p76 = por %p74, %p75
      %p77 = scmp.ne.s32.totalorder %s66, %s69
      %p78 = scmp.eq.s32.totalorder %s21, 7
      %p79 = por %p77, %p78
      %p80 = scmp.ne.s32.totalorder %s69, %s70
      %p81 = scmp.eq.s32.totalorder %s21, 0
      %p82 = por %p80, %p81
      %p83 = scmp.ne.s32.totalorder %s69, %s70
      %p84 = scmp.eq.s32.totalorder %s22, 7
      %p85 = por %p83, %p84
      %p87 = scmp.ne.s32.totalorder %s70, %s86
      %p88 = scmp.eq.s32.totalorder %s22, 0
      %p89 = por %p87, %p88
      %s91 = sadd.s32 %s90, 1
      %p94 = scmp.eq.s32.totalorder %s16, 7
      %p95 = scmp.ne.s32.totalorder %s90, %s92
      %p96 = scmp.eq.s32.totalorder %s16, 0
      %p97 = por %p95, %p96
      %p98 = scmp.ne.s32.totalorder %s90, %s92
      %p99 = scmp.eq.s32.totalorder %s21, 7
      %p100 = por %p98, %p99
      %p101 = scmp.ne.s32.totalorder %s92, %s93
      %p102 = scmp.eq.s32.totalorder %s21, 0
      %p103 = por %p101, %p102
      %p104 = scmp.ne.s32.totalorder %s92, %s93
      %p105 = scmp.eq.s32.totalorder %s22, 7
      %p106 = por %p104, %p105
      %p108 = scmp.ne.s32.totalorder %s93, %s107
      %p109 = scmp.eq.s32.totalorder %s22, 0
      %p110 = por %p108, %p109
      %s112 = sadd.s32 %s111, 1
      %p115 = scmp.eq.s32.totalorder %s16, 7
      %p116 = scmp.ne.s32.totalorder %s111, %s113
      %p117 = scmp.eq.s32.totalorder %s16, 0
      %p118 = por %p116, %p117
      %p119 = scmp.ne.s32.totalorder %s111, %s113
      %p120 = scmp.eq.s32.totalorder %s21, 7
      %p121 = por %p119, %p120
      %p122 = scmp.ne.s32.totalorder %s113, %s114
      %p123 = scmp.eq.s32.totalorder %s21, 0
      %p124 = por %p122, %p123
      %p125 = scmp.ne.s32.totalorder %s113, %s114
      %p126 = scmp.eq.s32.totalorder %s22, 7
      %p127 = por %p125, %p126
      %p129 = scmp.ne.s32.totalorder %s114, %s128
      %p130 = scmp.eq.s32.totalorder %s22, 0
      %p131 = por %p129, %p130
      %s133 = sadd.s32 %s132, 1
      %p136 = scmp.eq.s32.totalorder %s16, 7
      %p137 = scmp.ne.s32.totalorder %s132, %s134
      %p138 = scmp.eq.s32.totalorder %s16, 0
      %p139 = por %p137, %p138
      %p140 = scmp.ne.s32.totalorder %s132, %s134
      %p141 = scmp.eq.s32.totalorder %s21, 7
      %p142 = por %p140, %p141
      %p143 = scmp.ne.s32.totalorder %s134, %s135
      %p144 = scmp.eq.s32.totalorder %s21, 0
      %p145 = por %p143, %p144
      %p146 = scmp.ne.s32.totalorder %s134, %s135
      %p147 = scmp.eq.s32.totalorder %s22, 7
      %p148 = por %p146, %p147
      %p150 = scmp.ne.s32.totalorder %s135, %s149
      %p151 = scmp.eq.s32.totalorder %s22, 0
      %p152 = por %p150, %p151
      %s153 = ssub.s32 %s23, %s35
      %p154 = scmp.eq.s32.totalorder %s153, 0
      %s156 = sadd.s32 %s155, 1
      %s157 = scalar_select %p154, %s155, %s156
      %p160 = pneg %p154
      %p161 = scmp.eq.s32.totalorder %s16, 7
      %p162 = por %p160, %p161
      %p163 = scmp.ne.s32.totalorder %s155, %s158
      %p164 = scmp.eq.s32.totalorder %s16, 0
      %p165 = por %p163, %p164
      %p166 = scmp.ne.s32.totalorder %s155, %s158
      %p167 = scmp.eq.s32.totalorder %s21, 7
      %p168 = por %p166, %p167
      %p169 = scmp.ne.s32.totalorder %s158, %s159
      %p170 = scmp.eq.s32.totalorder %s21, 0
      %p171 = por %p169, %p170
      %p172 = scmp.ne.s32.totalorder %s158, %s159
      %p173 = scmp.eq.s32.totalorder %s22, 7
      %p174 = por %p172, %p173
      %p176 = scmp.ne.s32.totalorder %s159, %s175
      %p177 = scmp.eq.s32.totalorder %s22, 0
      %p178 = por %p176, %p177
      %p179 = scmp.le.s32.totalorder 1, %s16
      %p180 = scmp.lt.s32.totalorder %s16, 9
      %p181 = pnand %p179, %p180
      %p182 = pneg %p181
      // Predicated region
      $region9: #{zknn_conv_forward.3} parent=5 // pred_check
        _
      $region10: #{zknn_conv_forward.3} parent=5 // pred_check_branch
        %184 = sbr.rel (%p181) target = $region12
      $region11: #{zknn_conv_forward.3} parent=5 // pred_region
        %s185 = ssub.s32 %s16, 1
        // Predicated region
        $region13: #{zknn_conv_forward.3} parent=11 // pred_check
          %p186 = pneg %p103
        $region14: #{zknn_conv_forward.3} parent=11 // pred_check_branch
          %188 = sbr.rel (%p186) target = $region16
        $region15: #{zknn_conv_forward.3} parent=11 // pred_region
          %s190 = ssub.s32 16, 16
          %191 = vsyncadd [#allocation7], %s190
          %s193 = sshll.u32 [#allocation6], 4
          %s194 = int_to_ptr.vmem [resolvable:$true] %s193
          %196 = dma.hbm_to_vmem [thread:$0]  %s2, 16, %s194, [#allocation7]
        $region16: #{zknn_conv_forward.3} parent=11 // pred_fallthru
          _
        // Predicated region
        $region17: #{zknn_conv_forward.3} parent=11 // pred_check
          %p197 = pneg %p124
        $region18: #{zknn_conv_forward.3} parent=11 // pred_check_branch
          %199 = sbr.rel (%p197) target = $region20
        $region19: #{zknn_conv_forward.3} parent=11 // pred_region
          _
        $region20: #{zknn_conv_forward.3} parent=11 // pred_fallthru
          _
        // Predicated region
        $region21: #{zknn_conv_forward.3} parent=11 // pred_check
          %p200 = pneg %p145
        $region22: #{zknn_conv_forward.3} parent=11 // pred_check_branch
          %202 = sbr.rel (%p200) target = $region24
        $region23: #{zknn_conv_forward.3} parent=11 // pred_region
          %s204 = ssub.s32 16, 16
          %205 = vsyncadd [#allocation7], %s204
          %s207 = sshll.u32 [#allocation8], 4
          %s208 = int_to_ptr.vmem [resolvable:$true] %s207
          %210 = dma.hbm_to_vmem [thread:$0]  %s4, 16, %s208, [#allocation7]
        $region24: #{zknn_conv_forward.3} parent=11 // pred_fallthru
          _
      $region12: #{zknn_conv_forward.3} parent=5 // pred_fallthru
        _
      %p211 = scmp.lt.s32.totalorder %s16, 8
      // Predicated region
      $region25: #{zknn_conv_forward.3} parent=5 // pred_check
        %p212 = pneg %p211
      $region26: #{zknn_conv_forward.3} parent=5 // pred_check_branch
        %214 = sbr.rel (%p212) target = $region28
      $region27: #{zknn_conv_forward.3} parent=5 // pred_region
        // Predicated region
        $region29: #{zknn_conv_forward.3} parent=27 // pred_check
          %p215 = pneg %p50
        $region30: #{zknn_conv_forward.3} parent=27 // pred_check_branch
          %217 = sbr.rel (%p215) target = $region32
        $region31: #{zknn_conv_forward.3} parent=27 // pred_region
          %s218 = smul.u32 9, %s24
          %p219 = scmp.lt.s32.totalorder %s23, 0
          %s220 = scalar_select %p219, %s23, 0
          %p221 = scmp.lt.s32.totalorder %s218, 71
          %s222 = scalar_select %p221, %s218, 71
          %s223 = smul.addr %s220, 72
          %s224 = sadd.s32 %s222, %s223
          %s225 = scalar_lea.vmem %s0, %s224
          %s226 = smul.u32 9, %s24
        $region32: #{zknn_conv_forward.3} parent=27 // pred_fallthru
          _
        // Predicated region
        $region33: #{zknn_conv_forward.3} parent=27 // pred_check
          %p227 = pneg %p76
        $region34: #{zknn_conv_forward.3} parent=27 // pred_check_branch
          %229 = sbr.rel (%p227) target = $region36
        $region35: #{zknn_conv_forward.3} parent=27 // pred_region
          %s230 = sand.u32 %s66, 1
          %s231 = scalar_lea.sflag [#allocation4], %s230
          %s232 = sand.u32 %s66, 1
          %s233 = smul.addr %s232, 576
          %s234 = scalar_lea.vmem [#allocation3], %s233
          %s235 = smul.u32 144, %s24
          %s237 = ssub.s32 9216, 9216
          %238 = vsyncadd %s231, %s237
          %s239 = smul.addr %s235, 64
          %s240 = scalar_lea.hbm %s1, %s239
          %s241 = sshll.u32 %s234, 4
          %s242 = int_to_ptr.vmem [resolvable:$true] %s241
          %247 = dma.hbm_to_vmem [thread:$0]  %s240, 9216, %s242, %s231, 64, 64, 4
        $region36: #{zknn_conv_forward.3} parent=27 // pred_fallthru
          _
      $region28: #{zknn_conv_forward.3} parent=5 // pred_fallthru
        _
      %p248 = scmp.le.s32.totalorder 1, %s16
      %p249 = scmp.lt.s32.totalorder %s16, 9
      %p250 = pnand %p248, %p249
      %p251 = pneg %p250
      // Predicated region
      $region37: #{zknn_conv_forward.3} parent=5 // pred_check
        _
      $region38: #{zknn_conv_forward.3} parent=5 // pred_check_branch
        %253 = sbr.rel (%p250) target = $region40
      $region39: #{zknn_conv_forward.3} parent=5 // pred_region
        %s254 = ssub.s32 %s16, 1
        %s255 = sand.u32 %s69, 1
        %s256 = scalar_lea.sflag [#allocation4], %s255
        %s257 = sand.u32 %s69, 1
        %s258 = smul.addr %s257, 576
        %s259 = scalar_lea.vmem [#allocation3], %s258
        // Predicated region
        $region41: #{zknn_conv_forward.3} parent=39 // pred_check
          %p260 = pneg %p82
        $region42: #{zknn_conv_forward.3} parent=39 // pred_check_branch
          %262 = sbr.rel (%p260) target = $region44
        $region43: #{zknn_conv_forward.3} parent=39 // pred_region
          %263 = dma.done %s256, 9216
        $region44: #{zknn_conv_forward.3} parent=39 // pred_fallthru
          _
        // Predicated region
        $region45: #{zknn_conv_forward.3} parent=39 // pred_check
          %p264 = pneg %p103
        $region46: #{zknn_conv_forward.3} parent=39 // pred_check_branch
          %266 = sbr.rel (%p264) target = $region48
        $region47: #{zknn_conv_forward.3} parent=39 // pred_region
          %267 = dma.done [#allocation7], 16
        $region48: #{zknn_conv_forward.3} parent=39 // pred_fallthru
          _
        // Predicated region
        $region49: #{zknn_conv_forward.3} parent=39 // pred_check
          %p268 = pneg %p145
        $region50: #{zknn_conv_forward.3} parent=39 // pred_check_branch
          %270 = sbr.rel (%p268) target = $region52
        $region51: #{zknn_conv_forward.3} parent=39 // pred_region
          %271 = dma.done [#allocation7], 16
        $region52: #{zknn_conv_forward.3} parent=39 // pred_fallthru
          _
        %s272 = smul.u32 9, %s26
        %p273 = scmp.lt.s32.totalorder %s25, 0
        %s274 = scalar_select %p273, %s25, 0
        %p275 = scmp.lt.s32.totalorder %s272, 71
        %s276 = scalar_select %p275, %s272, 71
        %s277 = smul.addr %s274, 72
        %s278 = sadd.s32 %s276, %s277
        %s279 = scalar_lea.vmem %s0, %s278
        %p280 = pneg %p56
        %p281 = pneg %p53
        %s282 = sand.u32 %s69, 1
        %s283 = scalar_lea.sflag [#allocation4], %s282
        %s284 = sand.u32 %s69, 1
        %s285 = smul.addr %s284, 576
        %s286 = scalar_lea.vmem [#allocation3], %s285
        %p287 = pneg %p82
        %p288 = pneg %p79
        %p289 = pneg %p103
        %p290 = pneg %p100
        %p291 = pneg %p124
        %p292 = pneg %p121
        %p293 = pneg %p145
        %p294 = pneg %p142
        %p295 = pneg %p171
        %p296 = pneg %p168
        %s297 = smul.u32 9, %s26
        %p298 = scmp.lt.s32.totalorder %s25, 0
        %s299 = scalar_select %p298, %s25, 0
        %p300 = scmp.lt.s32.totalorder %s297, 71
        %s301 = scalar_select %p300, %s297, 71
        %s302 = smul.addr %s299, 72
        %s303 = sadd.s32 %s301, %s302
        %s304 = scalar_lea.vmem %s0, %s303
        %s305 = smul.u32 9, %s26
        %s306 = smul.u32 144, %s26
        %p308 = scmp.eq.s32.totalorder %s26, 0
        // Predicated region
        $region53: #{zknn_conv_forward.3} parent=39 // pred_check
          %p309 = pneg %p308
        $region54: #{zknn_conv_forward.3} parent=39 // pred_check_branch
          %311 = sbr.rel (%p309) target = $region56
        $region55: #{zknn_conv_forward.3} parent=39 // pred_region
          %312 = vst [vmem:[#allocation2] sm:$0x3] 0.0
        $region56: #{zknn_conv_forward.3} parent=39 // pred_fallthru
          _
        %v313 = vld [vmem:[#allocation2] sm:$0x3]
        %v314 = vld [vmem:[%s304] sm:$0xff]
        %v315 = vld [vmem:[%s304 + $0x8] sm:$0x1]
        %v316 = vld [vmem:[%s259] sm:$0xf]
        %v317 = vld [vmem:[%s259 + $0x4] sm:$0xf]
        %v318 = vld [vmem:[%s259 + $0x8] sm:$0xf]
        %v319 = vld [vmem:[%s259 + $0xc] sm:$0xf]
        %v320 = vld [vmem:[%s259 + $0x10] sm:$0xf]
        %v321 = vld [vmem:[%s259 + $0x14] sm:$0xf]
        %v322 = vld [vmem:[%s259 + $0x18] sm:$0xf]
        %v323 = vld [vmem:[%s259 + $0x1c] sm:$0xf]
        %v324 = vld [vmem:[%s259 + $0x20] sm:$0xf]
        %v325 = vld [vmem:[%s259 + $0x24] sm:$0xf]
        %v326 = vld [vmem:[%s259 + $0x28] sm:$0xf]
        %v327 = vld [vmem:[%s259 + $0x2c] sm:$0xf]
        %v328 = vld [vmem:[%s259 + $0x30] sm:$0xf]
        %v329 = vld [vmem:[%s259 + $0x34] sm:$0xf]
        %v330 = vld [vmem:[%s259 + $0x38] sm:$0xf]
        %v331 = vld [vmem:[%s259 + $0x3c] sm:$0xf]
        %v332 = vld [vmem:[%s259 + $0x40] sm:$0xf]
        %v333 = vld [vmem:[%s259 + $0x44] sm:$0xf]
        %v334 = vld [vmem:[%s259 + $0x48] sm:$0xf]
        %v335 = vld [vmem:[%s259 + $0x4c] sm:$0xf]
        %v336 = vld [vmem:[%s259 + $0x50] sm:$0xf]
        %v337 = vld [vmem:[%s259 + $0x54] sm:$0xf]
        %v338 = vld [vmem:[%s259 + $0x58] sm:$0xf]
        %v339 = vld [vmem:[%s259 + $0x5c] sm:$0xf]
        %v340 = vld [vmem:[%s259 + $0x60] sm:$0xf]
        %v341 = vld [vmem:[%s259 + $0x64] sm:$0xf]
        %v342 = vld [vmem:[%s259 + $0x68] sm:$0xf]
        %v343 = vld [vmem:[%s259 + $0x6c] sm:$0xf]
        %v344 = vld [vmem:[%s259 + $0x70] sm:$0xf]
        %v345 = vld [vmem:[%s259 + $0x74] sm:$0xf]
        %v346 = vld [vmem:[%s259 + $0x78] sm:$0xf]
        %v347 = vld [vmem:[%s259 + $0x7c] sm:$0xf]
        %v348 = vld [vmem:[%s259 + $0x80] sm:$0xf]
        %v349 = vld [vmem:[%s259 + $0x84] sm:$0xf]
        %v350 = vld [vmem:[%s259 + $0x88] sm:$0xf]
        %v351 = vld [vmem:[%s259 + $0x8c] sm:$0xf]
        %v352 = vld [vmem:[%s259 + $0x90] sm:$0xf]
        %v353 = vld [vmem:[%s259 + $0x94] sm:$0xf]
        %v354 = vld [vmem:[%s259 + $0x98] sm:$0xf]
        %v355 = vld [vmem:[%s259 + $0x9c] sm:$0xf]
        %v356 = vld [vmem:[%s259 + $0xa0] sm:$0xf]
        %v357 = vld [vmem:[%s259 + $0xa4] sm:$0xf]
        %v358 = vld [vmem:[%s259 + $0xa8] sm:$0xf]
        %v359 = vld [vmem:[%s259 + $0xac] sm:$0xf]
        %v360 = vld [vmem:[%s259 + $0xb0] sm:$0xf]
        %v361 = vld [vmem:[%s259 + $0xb4] sm:$0xf]
        %v362 = vld [vmem:[%s259 + $0xb8] sm:$0xf]
        %v363 = vld [vmem:[%s259 + $0xbc] sm:$0xf]
        %v364 = vld [vmem:[%s259 + $0xc0] sm:$0xf]
        %v365 = vld [vmem:[%s259 + $0xc4] sm:$0xf]
        %v366 = vld [vmem:[%s259 + $0xc8] sm:$0xf]
        %v367 = vld [vmem:[%s259 + $0xcc] sm:$0xf]
        %v368 = vld [vmem:[%s259 + $0xd0] sm:$0xf]
        %v369 = vld [vmem:[%s259 + $0xd4] sm:$0xf]
        %v370 = vld [vmem:[%s259 + $0xd8] sm:$0xf]
        %v371 = vld [vmem:[%s259 + $0xdc] sm:$0xf]
        %v372 = vld [vmem:[%s259 + $0xe0] sm:$0xf]
        %v373 = vld [vmem:[%s259 + $0xe4] sm:$0xf]
        %v374 = vld [vmem:[%s259 + $0xe8] sm:$0xf]
        %v375 = vld [vmem:[%s259 + $0xec] sm:$0xf]
        %v376 = vld [vmem:[%s259 + $0xf0] sm:$0xf]
        %v377 = vld [vmem:[%s259 + $0xf4] sm:$0xf]
        %v378 = vld [vmem:[%s259 + $0xf8] sm:$0xf]
        %v379 = vld [vmem:[%s259 + $0xfc] sm:$0xf]
        %v380 = vld [vmem:[%s259 + $0x100] sm:$0xf]
        %v381 = vld [vmem:[%s259 + $0x104] sm:$0xf]
        %v382 = vld [vmem:[%s259 + $0x108] sm:$0xf]
        %v383 = vld [vmem:[%s259 + $0x10c] sm:$0xf]
        %v384 = vld [vmem:[%s259 + $0x110] sm:$0xf]
        %v385 = vld [vmem:[%s259 + $0x114] sm:$0xf]
        %v386 = vld [vmem:[%s259 + $0x118] sm:$0xf]
        %v387 = vld [vmem:[%s259 + $0x11c] sm:$0xf]
        %v388 = vld [vmem:[%s259 + $0x120] sm:$0xf]
        %v389 = vld [vmem:[%s259 + $0x124] sm:$0xf]
        %v390 = vld [vmem:[%s259 + $0x128] sm:$0xf]
        %v391 = vld [vmem:[%s259 + $0x12c] sm:$0xf]
        %v392 = vld [vmem:[%s259 + $0x130] sm:$0xf]
        %v393 = vld [vmem:[%s259 + $0x134] sm:$0xf]
        %v394 = vld [vmem:[%s259 + $0x138] sm:$0xf]
        %v395 = vld [vmem:[%s259 + $0x13c] sm:$0xf]
        %v396 = vld [vmem:[%s259 + $0x140] sm:$0xf]
        %v397 = vld [vmem:[%s259 + $0x144] sm:$0xf]
        %v398 = vld [vmem:[%s259 + $0x148] sm:$0xf]
        %v399 = vld [vmem:[%s259 + $0x14c] sm:$0xf]
        %v400 = vld [vmem:[%s259 + $0x150] sm:$0xf]
        %v401 = vld [vmem:[%s259 + $0x154] sm:$0xf]
        %v402 = vld [vmem:[%s259 + $0x158] sm:$0xf]
        %v403 = vld [vmem:[%s259 + $0x15c] sm:$0xf]
        %v404 = vld [vmem:[%s259 + $0x160] sm:$0xf]
        %v405 = vld [vmem:[%s259 + $0x164] sm:$0xf]
        %v406 = vld [vmem:[%s259 + $0x168] sm:$0xf]
        %v407 = vld [vmem:[%s259 + $0x16c] sm:$0xf]
        %v408 = vld [vmem:[%s259 + $0x170] sm:$0xf]
        %v409 = vld [vmem:[%s259 + $0x174] sm:$0xf]
        %v410 = vld [vmem:[%s259 + $0x178] sm:$0xf]
        %v411 = vld [vmem:[%s259 + $0x17c] sm:$0xf]
        %v412 = vld [vmem:[%s259 + $0x180] sm:$0xf]
        %v413 = vld [vmem:[%s259 + $0x184] sm:$0xf]
        %v414 = vld [vmem:[%s259 + $0x188] sm:$0xf]
        %v415 = vld [vmem:[%s259 + $0x18c] sm:$0xf]
        %v416 = vld [vmem:[%s259 + $0x190] sm:$0xf]
        %v417 = vld [vmem:[%s259 + $0x194] sm:$0xf]
        %v418 = vld [vmem:[%s259 + $0x198] sm:$0xf]
        %v419 = vld [vmem:[%s259 + $0x19c] sm:$0xf]
        %v420 = vld [vmem:[%s259 + $0x1a0] sm:$0xf]
        %v421 = vld [vmem:[%s259 + $0x1a4] sm:$0xf]
        %v422 = vld [vmem:[%s259 + $0x1a8] sm:$0xf]
        %v423 = vld [vmem:[%s259 + $0x1ac] sm:$0xf]
        %v424 = vld [vmem:[%s259 + $0x1b0] sm:$0xf]
        %v425 = vld [vmem:[%s259 + $0x1b4] sm:$0xf]
        %v426 = vld [vmem:[%s259 + $0x1b8] sm:$0xf]
        %v427 = vld [vmem:[%s259 + $0x1bc] sm:$0xf]
        %v428 = vld [vmem:[%s259 + $0x1c0] sm:$0xf]
        %v429 = vld [vmem:[%s259 + $0x1c4] sm:$0xf]
        %v430 = vld [vmem:[%s259 + $0x1c8] sm:$0xf]
        %v431 = vld [vmem:[%s259 + $0x1cc] sm:$0xf]
        %v432 = vld [vmem:[%s259 + $0x1d0] sm:$0xf]
        %v433 = vld [vmem:[%s259 + $0x1d4] sm:$0xf]
        %v434 = vld [vmem:[%s259 + $0x1d8] sm:$0xf]
        %v435 = vld [vmem:[%s259 + $0x1dc] sm:$0xf]
        %v436 = vld [vmem:[%s259 + $0x1e0] sm:$0xf]
        %v437 = vld [vmem:[%s259 + $0x1e4] sm:$0xf]
        %v438 = vld [vmem:[%s259 + $0x1e8] sm:$0xf]
        %v439 = vld [vmem:[%s259 + $0x1ec] sm:$0xf]
        %v440 = vld [vmem:[%s259 + $0x1f0] sm:$0xf]
        %v441 = vld [vmem:[%s259 + $0x1f4] sm:$0xf]
        %v442 = vld [vmem:[%s259 + $0x1f8] sm:$0xf]
        %v443 = vld [vmem:[%s259 + $0x1fc] sm:$0xf]
        %v444 = vld [vmem:[%s259 + $0x200] sm:$0xf]
        %v445 = vld [vmem:[%s259 + $0x204] sm:$0xf]
        %v446 = vld [vmem:[%s259 + $0x208] sm:$0xf]
        %v447 = vld [vmem:[%s259 + $0x20c] sm:$0xf]
        %v448 = vld [vmem:[%s259 + $0x210] sm:$0xf]
        %v449 = vld [vmem:[%s259 + $0x214] sm:$0xf]
        %v450 = vld [vmem:[%s259 + $0x218] sm:$0xf]
        %v451 = vld [vmem:[%s259 + $0x21c] sm:$0xf]
        %v452 = vld [vmem:[%s259 + $0x220] sm:$0xf]
        %v453 = vld [vmem:[%s259 + $0x224] sm:$0xf]
        %v454 = vld [vmem:[%s259 + $0x228] sm:$0xf]
        %v455 = vld [vmem:[%s259 + $0x22c] sm:$0xf]
        %v456 = vld [vmem:[%s259 + $0x230] sm:$0xf]
        %v457 = vld [vmem:[%s259 + $0x234] sm:$0xf]
        %v458 = vld [vmem:[%s259 + $0x238] sm:$0xf]
        %v459 = vld [vmem:[%s259 + $0x23c] sm:$0xf]
        %v462 = vcombine.high %v314, %v314
        %v464 = vunpack.c.l.s4 1966171168
        %v465 = vunpack.c.0.s8 %v464
        %v466 = vlaneseq
        %v467 = vshrl.u32 %v466, 7
        %v468 = vsub.s32 %v465, %v467
        %v469 = vrot.slane %v314, %v468
        %v471 = vunpack.c.l.s4 1966171168
        %v472 = vunpack.c.0.s8 %v471
        %v473 = vlaneseq
        %v474 = vshrl.u32 %v473, 7
        %v475 = vsub.s32 %v472, %v474
        %v476 = vrot.slane %v462, %v475
        %v477 = vcombine.high %v469, %v469
        %v478 = vcombine.high %v476, %v476
        %v480 = vunpack.c.l.s4 1966171168
        %v481 = vunpack.c.0.s8 %v480
        %v482 = vlaneseq
        %v483 = vshrl.u32 %v482, 7
        %v484 = vsub.s32 %v481, %v483
        %v485 = vrot.slane %v469, %v484
        %v487 = vunpack.c.l.s4 1966171168
        %v488 = vunpack.c.0.s8 %v487
        %v489 = vlaneseq
        %v490 = vshrl.u32 %v489, 7
        %v491 = vsub.s32 %v488, %v490
        %v492 = vrot.slane %v476, %v491
        %v494 = vunpack.c.l.s4 1966171168
        %v495 = vunpack.c.0.s8 %v494
        %v496 = vlaneseq
        %v497 = vshrl.u32 %v496, 7
        %v498 = vsub.s32 %v495, %v497
        %v499 = vrot.slane %v477, %v498
        %v501 = vunpack.c.l.s4 1966171168
        %v502 = vunpack.c.0.s8 %v501
        %v503 = vlaneseq
        %v504 = vshrl.u32 %v503, 7
        %v505 = vsub.s32 %v502, %v504
        %v506 = vrot.slane %v478, %v505
        %v507 = vcombine.high %v485, %v485
        %v508 = vcombine.high %v492, %v492
        %v509 = vcombine.high %v499, %v499
        %v510 = vcombine.high %v506, %v506
        %v512 = vunpack.c.l.s4 1966171168
        %v513 = vunpack.c.0.s8 %v512
        %v514 = vlaneseq
        %v515 = vshrl.u32 %v514, 7
        %v516 = vsub.s32 %v513, %v515
        %v517 = vrot.slane %v315, %v516
        %v519 = vunpack.c.l.s4 1966171168
        %v520 = vunpack.c.0.s8 %v519
        %v521 = vlaneseq
        %v522 = vshrl.u32 %v521, 7
        %v523 = vsub.s32 %v520, %v522
        %v524 = vrot.slane %v517, %v523
        %v678 = vunpack.c.l.b16 %v316
        %v679 = vunpack.c.l.b16 %v317
        %v680 = vunpack.c.l.b16 %v318
        %v681 = vunpack.c.l.b16 %v319
        %v682 = vunpack.c.l.b16 %v320
        %v683 = vunpack.c.l.b16 %v321
        %v684 = vunpack.c.l.b16 %v322
        %v685 = vunpack.c.l.b16 %v323
        %v686 = vunpack.c.l.b16 %v324
        %v687 = vunpack.c.l.b16 %v325
        %v688 = vunpack.c.l.b16 %v326
        %v689 = vunpack.c.l.b16 %v327
        %v690 = vunpack.c.l.b16 %v328
        %v691 = vunpack.c.l.b16 %v329
        %v692 = vunpack.c.l.b16 %v330
        %v693 = vunpack.c.l.b16 %v331
        %v694 = vunpack.c.l.b16 %v332
        %v695 = vunpack.c.l.b16 %v333
        %v696 = vunpack.c.l.b16 %v334
        %v697 = vunpack.c.l.b16 %v335
        %v698 = vunpack.c.l.b16 %v336
        %v699 = vunpack.c.l.b16 %v337
        %v700 = vunpack.c.l.b16 %v338
        %v701 = vunpack.c.l.b16 %v339
        %v702 = vunpack.c.l.b16 %v340
        %v703 = vunpack.c.l.b16 %v341
        %v704 = vunpack.c.l.b16 %v342
        %v705 = vunpack.c.l.b16 %v343
        %v706 = vunpack.c.l.b16 %v344
        %v707 = vunpack.c.l.b16 %v345
        %v708 = vunpack.c.l.b16 %v346
        %v709 = vunpack.c.l.b16 %v347
        %v710 = vunpack.c.l.b16 %v348
        %v711 = vunpack.c.l.b16 %v349
        %v712 = vunpack.c.l.b16 %v350
        %v713 = vunpack.c.l.b16 %v351
        %v714 = vunpack.c.l.b16 %v352
        %v715 = vunpack.c.l.b16 %v353
        %v716 = vunpack.c.l.b16 %v354
        %v717 = vunpack.c.l.b16 %v355
        %v718 = vunpack.c.l.b16 %v356
        %v719 = vunpack.c.l.b16 %v357
        %v720 = vunpack.c.l.b16 %v358
        %v721 = vunpack.c.l.b16 %v359
        %v722 = vunpack.c.l.b16 %v360
        %v723 = vunpack.c.l.b16 %v361
        %v724 = vunpack.c.l.b16 %v362
        %v725 = vunpack.c.l.b16 %v363
        %v726 = vunpack.c.l.b16 %v364
        %v727 = vunpack.c.l.b16 %v365
        %v728 = vunpack.c.l.b16 %v366
        %v729 = vunpack.c.l.b16 %v367
        %v730 = vunpack.c.l.b16 %v368
        %v731 = vunpack.c.l.b16 %v369
        %v732 = vunpack.c.l.b16 %v370
        %v733 = vunpack.c.l.b16 %v371
        %v734 = vunpack.c.l.b16 %v372
        %v735 = vunpack.c.l.b16 %v373
        %v736 = vunpack.c.l.b16 %v374
        %v737 = vunpack.c.l.b16 %v375
        %v738 = vunpack.c.l.b16 %v376
        %v739 = vunpack.c.l.b16 %v377
        %v740 = vunpack.c.l.b16 %v378
        %v741 = vunpack.c.l.b16 %v379
        %v742 = vunpack.c.l.b16 %v380
        %v743 = vunpack.c.l.b16 %v381
        %v744 = vunpack.c.l.b16 %v382
        %v745 = vunpack.c.l.b16 %v383
        %v746 = vunpack.c.l.b16 %v384
        %v747 = vunpack.c.l.b16 %v385
        %v748 = vunpack.c.l.b16 %v386
        %v749 = vunpack.c.l.b16 %v387
        %v750 = vunpack.c.l.b16 %v388
        %v751 = vunpack.c.l.b16 %v389
        %v752 = vunpack.c.l.b16 %v390
        %v753 = vunpack.c.l.b16 %v391
        %v754 = vunpack.c.l.b16 %v392
        %v755 = vunpack.c.l.b16 %v393
        %v756 = vunpack.c.l.b16 %v394
        %v757 = vunpack.c.l.b16 %v395
        %v758 = vunpack.c.l.b16 %v396
        %v759 = vunpack.c.l.b16 %v397
        %v760 = vunpack.c.l.b16 %v398
        %v761 = vunpack.c.l.b16 %v399
        %v762 = vunpack.c.l.b16 %v400
        %v763 = vunpack.c.l.b16 %v401
        %v764 = vunpack.c.l.b16 %v402
        %v765 = vunpack.c.l.b16 %v403
        %v766 = vunpack.c.l.b16 %v404
        %v767 = vunpack.c.l.b16 %v405
        %v768 = vunpack.c.l.b16 %v406
        %v769 = vunpack.c.l.b16 %v407
        %v770 = vunpack.c.l.b16 %v408
        %v771 = vunpack.c.l.b16 %v409
        %v772 = vunpack.c.l.b16 %v410
        %v773 = vunpack.c.l.b16 %v411
        %v774 = vunpack.c.l.b16 %v412
        %v775 = vunpack.c.l.b16 %v413
        %v776 = vunpack.c.l.b16 %v414
        %v777 = vunpack.c.l.b16 %v415
        %v778 = vunpack.c.l.b16 %v416
        %v779 = vunpack.c.l.b16 %v417
        %v780 = vunpack.c.l.b16 %v418
        %v781 = vunpack.c.l.b16 %v419
        %v782 = vunpack.c.l.b16 %v420
        %v783 = vunpack.c.l.b16 %v421
        %v784 = vunpack.c.l.b16 %v422
        %v785 = vunpack.c.l.b16 %v423
        %v786 = vunpack.c.l.b16 %v424
        %v787 = vunpack.c.l.b16 %v425
        %v788 = vunpack.c.l.b16 %v426
        %v789 = vunpack.c.l.b16 %v427
        %v790 = vunpack.c.l.b16 %v428
        %v791 = vunpack.c.l.b16 %v429
        %v792 = vunpack.c.l.b16 %v430
        %v793 = vunpack.c.l.b16 %v431
        %v794 = vunpack.c.l.b16 %v432
        %v795 = vunpack.c.l.b16 %v433
        %v796 = vunpack.c.l.b16 %v434
        %v797 = vunpack.c.l.b16 %v435
        %v798 = vunpack.c.l.b16 %v436
        %v799 = vunpack.c.l.b16 %v437
        %v800 = vunpack.c.l.b16 %v438
        %v801 = vunpack.c.l.b16 %v439
        %v802 = vunpack.c.l.b16 %v440
        %v803 = vunpack.c.l.b16 %v441
        %v804 = vunpack.c.l.b16 %v442
        %v805 = vunpack.c.l.b16 %v443
        %v806 = vunpack.c.l.b16 %v444
        %v807 = vunpack.c.l.b16 %v445
        %v808 = vunpack.c.l.b16 %v446
        %v809 = vunpack.c.l.b16 %v447
        %v810 = vunpack.c.l.b16 %v448
        %v811 = vunpack.c.l.b16 %v449
        %v812 = vunpack.c.l.b16 %v450
        %v813 = vunpack.c.l.b16 %v451
        %v814 = vunpack.c.l.b16 %v452
        %v815 = vunpack.c.l.b16 %v453
        %v816 = vunpack.c.l.b16 %v454
        %v817 = vunpack.c.l.b16 %v455
        %v818 = vunpack.c.l.b16 %v456
        %v819 = vunpack.c.l.b16 %v457
        %v820 = vunpack.c.l.b16 %v458
        %v821 = vunpack.c.l.b16 %v459
        %v822 = vpack.c.b16 %v679, %v678
        %v823 = vpack.c.b16 %v681, %v680
        %v824 = vpack.c.b16 %v683, %v682
        %v825 = vpack.c.b16 %v685, %v684
        %v826 = vpack.c.b16 %v687, %v686
        %v827 = vpack.c.b16 %v689, %v688
        %v828 = vpack.c.b16 %v691, %v690
        %v829 = vpack.c.b16 %v693, %v692
        %v830 = vpack.c.b16 %v695, %v694
        %v831 = vpack.c.b16 %v697, %v696
        %v832 = vpack.c.b16 %v699, %v698
        %v833 = vpack.c.b16 %v701, %v700
        %v834 = vpack.c.b16 %v703, %v702
        %v835 = vpack.c.b16 %v705, %v704
        %v836 = vpack.c.b16 %v707, %v706
        %v837 = vpack.c.b16 %v709, %v708
        %v838 = vpack.c.b16 %v711, %v710
        %v839 = vpack.c.b16 %v713, %v712
        %v840 = vpack.c.b16 %v715, %v714
        %v841 = vpack.c.b16 %v717, %v716
        %v842 = vpack.c.b16 %v719, %v718
        %v843 = vpack.c.b16 %v721, %v720
        %v844 = vpack.c.b16 %v723, %v722
        %v845 = vpack.c.b16 %v725, %v724
        %v846 = vpack.c.b16 %v727, %v726
        %v847 = vpack.c.b16 %v729, %v728
        %v848 = vpack.c.b16 %v731, %v730
        %v849 = vpack.c.b16 %v733, %v732
        %v850 = vpack.c.b16 %v735, %v734
        %v851 = vpack.c.b16 %v737, %v736
        %v852 = vpack.c.b16 %v739, %v738
        %v853 = vpack.c.b16 %v741, %v740
        %v854 = vpack.c.b16 %v743, %v742
        %v855 = vpack.c.b16 %v745, %v744
        %v856 = vpack.c.b16 %v747, %v746
        %v857 = vpack.c.b16 %v749, %v748
        %v858 = vpack.c.b16 %v751, %v750
        %v859 = vpack.c.b16 %v753, %v752
        %v860 = vpack.c.b16 %v755, %v754
        %v861 = vpack.c.b16 %v757, %v756
        %v862 = vpack.c.b16 %v759, %v758
        %v863 = vpack.c.b16 %v761, %v760
        %v864 = vpack.c.b16 %v763, %v762
        %v865 = vpack.c.b16 %v765, %v764
        %v866 = vpack.c.b16 %v767, %v766
        %v867 = vpack.c.b16 %v769, %v768
        %v868 = vpack.c.b16 %v771, %v770
        %v869 = vpack.c.b16 %v773, %v772
        %v870 = vpack.c.b16 %v775, %v774
        %v871 = vpack.c.b16 %v777, %v776
        %v872 = vpack.c.b16 %v779, %v778
        %v873 = vpack.c.b16 %v781, %v780
        %v874 = vpack.c.b16 %v783, %v782
        %v875 = vpack.c.b16 %v785, %v784
        %v876 = vpack.c.b16 %v787, %v786
        %v877 = vpack.c.b16 %v789, %v788
        %v878 = vpack.c.b16 %v791, %v790
        %v879 = vpack.c.b16 %v793, %v792
        %v880 = vpack.c.b16 %v795, %v794
        %v881 = vpack.c.b16 %v797, %v796
        %v882 = vpack.c.b16 %v799, %v798
        %v883 = vpack.c.b16 %v801, %v800
        %v884 = vpack.c.b16 %v803, %v802
        %v885 = vpack.c.b16 %v805, %v804
        %v886 = vpack.c.b16 %v807, %v806
        %v887 = vpack.c.b16 %v809, %v808
        %v888 = vpack.c.b16 %v811, %v810
        %v889 = vpack.c.b16 %v813, %v812
        %v890 = vpack.c.b16 %v815, %v814
        %v891 = vpack.c.b16 %v817, %v816
        %v892 = vpack.c.b16 %v819, %v818
        %v893 = vpack.c.b16 %v821, %v820
        %966 = vmatprep.subr.bf16.mxu0 0
        %967 = vmatpush1.bf16.msra.mxu0 %v829
        %968 = vmatprep.subr.bf16.mxu0 0
        %969 = vmatpush1.bf16.msra.mxu0 %v828
        %970 = vmatprep.subr.bf16.mxu0 0
        %971 = vmatpush1.bf16.msra.mxu0 %v827
        %972 = vmatprep.subr.bf16.mxu0 0
        %973 = vmatpush1.bf16.msra.mxu0 %v826
        %974 = vmatprep.subr.bf16.mxu0 0
        %975 = vmatpush1.bf16.msra.mxu0 %v825
        %976 = vmatprep.subr.bf16.mxu0 0
        %977 = vmatpush1.bf16.msra.mxu0 %v824
        %978 = vmatprep.subr.bf16.mxu0 0
        %979 = vmatpush1.bf16.msra.mxu0 %v823
        %980 = vmatprep.subr.bf16.mxu0 0
        %981 = vmatpush1.bf16.msra.mxu0 %v822
        %982 = vmatprep.subr.bf16.mxu0 0
        %983 = vmatpush2.bf16.msra.mxu0 %v837
        %984 = vmatprep.subr.bf16.mxu0 0
        %985 = vmatpush2.bf16.msra.mxu0 %v836
        %986 = vmatprep.subr.bf16.mxu0 0
        %987 = vmatpush2.bf16.msra.mxu0 %v835
        %988 = vmatprep.subr.bf16.mxu0 0
        %989 = vmatpush2.bf16.msra.mxu0 %v834
        %990 = vmatprep.subr.bf16.mxu0 0
        %991 = vmatpush2.bf16.msra.mxu0 %v833
        %992 = vmatprep.subr.bf16.mxu0 0
        %993 = vmatpush2.bf16.msra.mxu0 %v832
        %994 = vmatprep.subr.bf16.mxu0 0
        %995 = vmatpush2.bf16.msra.mxu0 %v831
        %996 = vmatprep.subr.bf16.mxu0 0
        %997 = vmatpush2.bf16.msra.mxu0 %v830
        %998 = vmatprep.mubr.bf16.mxu0 %v499
        %999 = vmatmul.mubr.bf16.gmra.mxu0 %v485
        %v1000 = vpop.f32.mrf.mxu0
        %v1001 = vadd.f32 0.0, %v1000
        %v1002 = vpop.f32.mrf.mxu0
        %v1003 = vpop.f32.mrf.mxu0
        %v1004 = vpop.f32.mrf.mxu0
        %1005 = vdwg.mxu0
        %1006 = vmatprep.subr.bf16.mxu0 0
        %1007 = vmatpush1.bf16.msra.mxu0 %v845
        %1008 = vmatprep.subr.bf16.mxu0 0
        %1009 = vmatpush1.bf16.msra.mxu0 %v844
        %1010 = vmatprep.subr.bf16.mxu0 0
        %1011 = vmatpush1.bf16.msra.mxu0 %v843
        %1012 = vmatprep.subr.bf16.mxu0 0
        %1013 = vmatpush1.bf16.msra.mxu0 %v842
        %1014 = vmatprep.subr.bf16.mxu0 0
        %1015 = vmatpush1.bf16.msra.mxu0 %v841
        %1016 = vmatprep.subr.bf16.mxu0 0
        %1017 = vmatpush1.bf16.msra.mxu0 %v840
        %1018 = vmatprep.subr.bf16.mxu0 0
        %1019 = vmatpush1.bf16.msra.mxu0 %v839
        %1020 = vmatprep.subr.bf16.mxu0 0
        %1021 = vmatpush1.bf16.msra.mxu0 %v838
        %1022 = vmatprep.subr.bf16.mxu0 0
        %1023 = vmatpush2.bf16.msra.mxu0 %v853
        %1024 = vmatprep.subr.bf16.mxu0 0
        %1025 = vmatpush2.bf16.msra.mxu0 %v852
        %1026 = vmatprep.subr.bf16.mxu0 0
        %1027 = vmatpush2.bf16.msra.mxu0 %v851
        %1028 = vmatprep.subr.bf16.mxu0 0
        %1029 = vmatpush2.bf16.msra.mxu0 %v850
        %1030 = vmatprep.subr.bf16.mxu0 0
        %1031 = vmatpush2.bf16.msra.mxu0 %v849
        %1032 = vmatprep.subr.bf16.mxu0 0
        %1033 = vmatpush2.bf16.msra.mxu0 %v848
        %1034 = vmatprep.subr.bf16.mxu0 0
        %1035 = vmatpush2.bf16.msra.mxu0 %v847
        %1036 = vmatprep.subr.bf16.mxu0 0
        %1037 = vmatpush2.bf16.msra.mxu0 %v846
        %1038 = vmatprep.mubr.bf16.mxu0 %v509
        %1039 = vmatmul.mubr.bf16.gmra.mxu0 %v507
        %v1040 = vpop.f32.mrf.mxu0
        %v1041 = vadd.f32 %v1001, %v1040
        %v1042 = vpop.f32.mrf.mxu0
        %v1043 = vpop.f32.mrf.mxu0
        %v1044 = vpop.f32.mrf.mxu0
        %1045 = vdwg.mxu0
        %1046 = vmatprep.subr.bf16.mxu0 0
        %1047 = vmatpush1.bf16.msra.mxu0 %v861
        %1048 = vmatprep.subr.bf16.mxu0 0
        %1049 = vmatpush1.bf16.msra.mxu0 %v860
        %1050 = vmatprep.subr.bf16.mxu0 0
        %1051 = vmatpush1.bf16.msra.mxu0 %v859
        %1052 = vmatprep.subr.bf16.mxu0 0
        %1053 = vmatpush1.bf16.msra.mxu0 %v858
        %1054 = vmatprep.subr.bf16.mxu0 0
        %1055 = vmatpush1.bf16.msra.mxu0 %v857
        %1056 = vmatprep.subr.bf16.mxu0 0
        %1057 = vmatpush1.bf16.msra.mxu0 %v856
        %1058 = vmatprep.subr.bf16.mxu0 0
        %1059 = vmatpush1.bf16.msra.mxu0 %v855
        %1060 = vmatprep.subr.bf16.mxu0 0
        %1061 = vmatpush1.bf16.msra.mxu0 %v854
        %1062 = vmatprep.subr.bf16.mxu0 0
        %1063 = vmatpush2.bf16.msra.mxu0 %v869
        %1064 = vmatprep.subr.bf16.mxu0 0
        %1065 = vmatpush2.bf16.msra.mxu0 %v868
        %1066 = vmatprep.subr.bf16.mxu0 0
        %1067 = vmatpush2.bf16.msra.mxu0 %v867
        %1068 = vmatprep.subr.bf16.mxu0 0
        %1069 = vmatpush2.bf16.msra.mxu0 %v866
        %1070 = vmatprep.subr.bf16.mxu0 0
        %1071 = vmatpush2.bf16.msra.mxu0 %v865
        %1072 = vmatprep.subr.bf16.mxu0 0
        %1073 = vmatpush2.bf16.msra.mxu0 %v864
        %1074 = vmatprep.subr.bf16.mxu0 0
        %1075 = vmatpush2.bf16.msra.mxu0 %v863
        %1076 = vmatprep.subr.bf16.mxu0 0
        %1077 = vmatpush2.bf16.msra.mxu0 %v862
        %1078 = vmatprep.mubr.bf16.mxu0 %v506
        %1079 = vmatmul.mubr.bf16.gmra.mxu0 %v492
        %v1080 = vpop.f32.mrf.mxu0
        %v1081 = vadd.f32 %v1041, %v1080
        %v1082 = vpop.f32.mrf.mxu0
        %v1083 = vpop.f32.mrf.mxu0
        %v1084 = vpop.f32.mrf.mxu0
        %1085 = vdwg.mxu0
        %1086 = vmatprep.subr.bf16.mxu0 0
        %1087 = vmatpush1.bf16.msra.mxu0 %v877
        %1088 = vmatprep.subr.bf16.mxu0 0
        %1089 = vmatpush1.bf16.msra.mxu0 %v876
        %1090 = vmatprep.subr.bf16.mxu0 0
        %1091 = vmatpush1.bf16.msra.mxu0 %v875
        %1092 = vmatprep.subr.bf16.mxu0 0
        %1093 = vmatpush1.bf16.msra.mxu0 %v874
        %1094 = vmatprep.subr.bf16.mxu0 0
        %1095 = vmatpush1.bf16.msra.mxu0 %v873
        %1096 = vmatprep.subr.bf16.mxu0 0
        %1097 = vmatpush1.bf16.msra.mxu0 %v872
        %1098 = vmatprep.subr.bf16.mxu0 0
        %1099 = vmatpush1.bf16.msra.mxu0 %v871
        %1100 = vmatprep.subr.bf16.mxu0 0
        %1101 = vmatpush1.bf16.msra.mxu0 %v870
        %1102 = vmatprep.subr.bf16.mxu0 0
        %1103 = vmatpush2.bf16.msra.mxu0 %v885
        %1104 = vmatprep.subr.bf16.mxu0 0
        %1105 = vmatpush2.bf16.msra.mxu0 %v884
        %1106 = vmatprep.subr.bf16.mxu0 0
        %1107 = vmatpush2.bf16.msra.mxu0 %v883
        %1108 = vmatprep.subr.bf16.mxu0 0
        %1109 = vmatpush2.bf16.msra.mxu0 %v882
        %1110 = vmatprep.subr.bf16.mxu0 0
        %1111 = vmatpush2.bf16.msra.mxu0 %v881
        %1112 = vmatprep.subr.bf16.mxu0 0
        %1113 = vmatpush2.bf16.msra.mxu0 %v880
        %1114 = vmatprep.subr.bf16.mxu0 0
        %1115 = vmatpush2.bf16.msra.mxu0 %v879
        %1116 = vmatprep.subr.bf16.mxu0 0
        %1117 = vmatpush2.bf16.msra.mxu0 %v878
        %1118 = vmatprep.mubr.bf16.mxu0 %v510
        %1119 = vmatmul.mubr.bf16.gmra.mxu0 %v508
        %v1120 = vpop.f32.mrf.mxu0
        %v1121 = vadd.f32 %v1081, %v1120
        %v1122 = vpop.f32.mrf.mxu0
        %v1123 = vpop.f32.mrf.mxu0
        %v1124 = vpop.f32.mrf.mxu0
        %1125 = vdwg.mxu0
        %1126 = vmatprep.subr.bf16.mxu0 0
        %1127 = vmatpush1.bf16.msra.mxu0 %v893
        %1128 = vmatprep.subr.bf16.mxu0 0
        %1129 = vmatpush1.bf16.msra.mxu0 %v892
        %1130 = vmatprep.subr.bf16.mxu0 0
        %1131 = vmatpush1.bf16.msra.mxu0 %v891
        %1132 = vmatprep.subr.bf16.mxu0 0
        %1133 = vmatpush1.bf16.msra.mxu0 %v890
        %1134 = vmatprep.subr.bf16.mxu0 0
        %1135 = vmatpush1.bf16.msra.mxu0 %v889
        %1136 = vmatprep.subr.bf16.mxu0 0
        %1137 = vmatpush1.bf16.msra.mxu0 %v888
        %1138 = vmatprep.subr.bf16.mxu0 0
        %1139 = vmatpush1.bf16.msra.mxu0 %v887
        %1140 = vmatprep.subr.bf16.mxu0 0
        %1141 = vmatpush1.bf16.msra.mxu0 %v886
        %1142 = vmatprep.subr.bf16.mxu0 0
        %1143 = vmatpush2.bf16.msra.mxu0 0
        %1144 = vmatprep.subr.bf16.mxu0 0
        %1145 = vmatpush2.bf16.msra.mxu0 0
        %1146 = vmatprep.subr.bf16.mxu0 0
        %1147 = vmatpush2.bf16.msra.mxu0 0
        %1148 = vmatprep.subr.bf16.mxu0 0
        %1149 = vmatpush2.bf16.msra.mxu0 0
        %1150 = vmatprep.subr.bf16.mxu0 0
        %1151 = vmatpush2.bf16.msra.mxu0 0
        %1152 = vmatprep.subr.bf16.mxu0 0
        %1153 = vmatpush2.bf16.msra.mxu0 0
        %1154 = vmatprep.subr.bf16.mxu0 0
        %1155 = vmatpush2.bf16.msra.mxu0 0
        %1156 = vmatprep.subr.bf16.mxu0 0
        %1157 = vmatpush2.bf16.msra.mxu0 0
        %1158 = vmatprep.mubr.bf16.mxu0 0
        %1159 = vmatmul.mubr.bf16.gmra.mxu0 %v524
        %v1160 = vpop.f32.mrf.mxu0
        %v1161 = vadd.f32 %v1121, %v1160
        %v1162 = vpop.f32.mrf.mxu0
        %v1163 = vpop.f32.mrf.mxu0
        %v1164 = vpop.f32.mrf.mxu0
        %1165 = vdwg.mxu0
        %v1166 = vadd.f32 %v313, %v1161
        %1167 = vst [vmem:[#allocation2] sm:$0x3] %v1166
        %p1168 = scmp.eq.s32.totalorder %s26, 7
        // Predicated region
        $region57: #{zknn_conv_forward.3} parent=39 // pred_check
          %p1169 = pneg %p1168
        $region58: #{zknn_conv_forward.3} parent=39 // pred_check_branch
          %1171 = sbr.rel (%p1169) target = $region60
        $region59: #{zknn_conv_forward.3} parent=39 // pred_region
          %v1172 = vld [vmem:[#allocation2] sm:$0x3]
          %v1173 = vld [vmem:[#allocation6] sm:$0x1]
          %v1175 = vlaneseq
          %v1176 = vshrl.u32 %v1175, 7
          %v1177 = vsub.s32 0, %v1176
          %v1178 = vrot.slane %v1173, %v1177
          %v1180 = vadd.f32 %v1172, %v1178
          %v1181 = vmax.f32 %v1180, 0.0
          %v1182 = vpack.c.bf16 %v1181, %v1181
          %v1183 = vld [vmem:[%s3] sm:$0xf]
          %v1184 = vld [vmem:[%s3 + $0x4] sm:$0xf]
          %v1185 = vld [vmem:[%s3 + $0x8] sm:$0xf]
          %v1186 = vld [vmem:[%s3 + $0xc] sm:$0xf]
          %v1187 = vld [vmem:[%s3 + $0x10] sm:$0xf]
          %v1188 = vld [vmem:[%s3 + $0x14] sm:$0xf]
          %v1189 = vld [vmem:[%s3 + $0x18] sm:$0xf]
          %v1190 = vld [vmem:[%s3 + $0x1c] sm:$0xf]
          %v1191 = vld [vmem:[%s3 + $0x20] sm:$0xf]
          %v1192 = vld [vmem:[%s3 + $0x24] sm:$0xf]
          %v1193 = vld [vmem:[%s3 + $0x28] sm:$0xf]
          %v1194 = vld [vmem:[%s3 + $0x2c] sm:$0xf]
          %v1195 = vld [vmem:[%s3 + $0x30] sm:$0xf]
          %v1196 = vld [vmem:[%s3 + $0x34] sm:$0xf]
          %v1197 = vld [vmem:[%s3 + $0x38] sm:$0xf]
          %v1198 = vld [vmem:[%s3 + $0x3c] sm:$0xf]
          %v1199 = vld [vmem:[#allocation8] sm:$0x1]
          %v1201 = vlaneseq
          %v1202 = vshrl.u32 %v1201, 7
          %v1203 = vsub.s32 0, %v1202
          %v1204 = vrot.slane %v1199, %v1203
          %v1222 = vunpack.c.l.b16 %v1183
          %v1223 = vunpack.c.l.b16 %v1184
          %v1224 = vunpack.c.l.b16 %v1185
          %v1225 = vunpack.c.l.b16 %v1186
          %v1226 = vunpack.c.l.b16 %v1187
          %v1227 = vunpack.c.l.b16 %v1188
          %v1228 = vunpack.c.l.b16 %v1189
          %v1229 = vunpack.c.l.b16 %v1190
          %v1230 = vunpack.c.l.b16 %v1191
          %v1231 = vunpack.c.l.b16 %v1192
          %v1232 = vunpack.c.l.b16 %v1193
          %v1233 = vunpack.c.l.b16 %v1194
          %v1234 = vunpack.c.l.b16 %v1195
          %v1235 = vunpack.c.l.b16 %v1196
          %v1236 = vunpack.c.l.b16 %v1197
          %v1237 = vunpack.c.l.b16 %v1198
          %v1238 = vpack.c.b16 %v1223, %v1222
          %v1239 = vpack.c.b16 %v1225, %v1224
          %v1240 = vpack.c.b16 %v1227, %v1226
          %v1241 = vpack.c.b16 %v1229, %v1228
          %v1242 = vpack.c.b16 %v1231, %v1230
          %v1243 = vpack.c.b16 %v1233, %v1232
          %v1244 = vpack.c.b16 %v1235, %v1234
          %v1245 = vpack.c.b16 %v1237, %v1236
          %1254 = vmatprep.subr.bf16.mxu0 0
          %1255 = vmatpush1.bf16.msra.mxu0 %v1245
          %1256 = vmatprep.subr.bf16.mxu0 0
          %1257 = vmatpush1.bf16.msra.mxu0 %v1244
          %1258 = vmatprep.subr.bf16.mxu0 0
          %1259 = vmatpush1.bf16.msra.mxu0 %v1243
          %1260 = vmatprep.subr.bf16.mxu0 0
          %1261 = vmatpush1.bf16.msra.mxu0 %v1242
          %1262 = vmatprep.subr.bf16.mxu0 0
          %1263 = vmatpush1.bf16.msra.mxu0 %v1241
          %1264 = vmatprep.subr.bf16.mxu0 0
          %1265 = vmatpush1.bf16.msra.mxu0 %v1240
          %1266 = vmatprep.subr.bf16.mxu0 0
          %1267 = vmatpush1.bf16.msra.mxu0 %v1239
          %1268 = vmatprep.subr.bf16.mxu0 0
          %1269 = vmatpush1.bf16.msra.mxu0 %v1238
          %1270 = vmatprep.subr.bf16.mxu0 0
          %1271 = vmatpush2.bf16.msra.mxu0 0
          %1272 = vmatprep.subr.bf16.mxu0 0
          %1273 = vmatpush2.bf16.msra.mxu0 0
          %1274 = vmatprep.subr.bf16.mxu0 0
          %1275 = vmatpush2.bf16.msra.mxu0 0
          %1276 = vmatprep.subr.bf16.mxu0 0
          %1277 = vmatpush2.bf16.msra.mxu0 0
          %1278 = vmatprep.subr.bf16.mxu0 0
          %1279 = vmatpush2.bf16.msra.mxu0 0
          %1280 = vmatprep.subr.bf16.mxu0 0
          %1281 = vmatpush2.bf16.msra.mxu0 0
          %1282 = vmatprep.subr.bf16.mxu0 0
          %1283 = vmatpush2.bf16.msra.mxu0 0
          %1284 = vmatprep.subr.bf16.mxu0 0
          %1285 = vmatpush2.bf16.msra.mxu0 0
          %1286 = vmatprep.mubr.bf16.mxu0 0
          %1287 = vmatmul.mubr.bf16.gmra.mxu0 %v1182
          %v1288 = vpop.f32.mrf.mxu0
          %v1289 = vadd.f32 %v1204, %v1288
          %v1290 = vpop.f32.mrf.mxu0
          %v1291 = vpop.f32.mrf.mxu0
          %v1292 = vpop.f32.mrf.mxu0
          %1293 = vdwg.mxu0
          %vm1294 = vcmask 74752
          %1295 = vst.msk [vmem:[#allocation9] sm:$0x3] %vm1294, %v1289
        $region60: #{zknn_conv_forward.3} parent=39 // pred_fallthru
          _
        // Predicated region
        $region61: #{zknn_conv_forward.3} parent=39 // pred_check
          %p1296 = pneg %p168
        $region62: #{zknn_conv_forward.3} parent=39 // pred_check_branch
          %1298 = sbr.rel (%p1296) target = $region64
        $region63: #{zknn_conv_forward.3} parent=39 // pred_region
          %s1300 = ssub.s32 32, 32
          %1301 = vsyncadd [#allocation5], %s1300
          %s1302 = smul.addr %s25, 32
          %s1303 = scalar_lea.hbm %s5, %s1302
          %s1305 = sshll.u32 [#allocation9], 4
          %s1306 = int_to_ptr.vmem [resolvable:$true] %s1305
          %1308 = dma.vmem_to_hbm [thread:$0]  %s1306, 32, %s1303, [#allocation5]
        $region64: #{zknn_conv_forward.3} parent=39 // pred_fallthru
          _
        // Predicated region
        $region65: #{zknn_conv_forward.3} parent=39 // pred_check
          %p1309 = pneg %p168
        $region66: #{zknn_conv_forward.3} parent=39 // pred_check_branch
          %1311 = sbr.rel (%p1309) target = $region68
        $region67: #{zknn_conv_forward.3} parent=39 // pred_region
          %1312 = dma.done [#allocation5], 32
        $region68: #{zknn_conv_forward.3} parent=39 // pred_fallthru
          _
      $region40: #{zknn_conv_forward.3} parent=5 // pred_fallthru
        _
      %p1313 = scmp.le.s32.totalorder 2, %s16
      // Predicated region
      $region69: #{zknn_conv_forward.3} parent=5 // pred_check
        %p1314 = pneg %p1313
      $region70: #{zknn_conv_forward.3} parent=5 // pred_check_branch
        %1316 = sbr.rel (%p1314) target = $region72
      $region71: #{zknn_conv_forward.3} parent=5 // pred_region
        %s1317 = ssub.s32 %s16, 2
      $region72: #{zknn_conv_forward.3} parent=5 // pred_fallthru
        _
    $region6: #{zknn_conv_forward.3} parent=1 // loop_footer
      %s20 = sadd.s32 1, %s16
    $region7: #{zknn_conv_forward.3} parent=1 // loop_footer_branch
      %15 = sbr.rel target = $region3
    $region8: #{zknn_conv_forward.3} parent=1 // loop_exit
      _
    %1318 = vsyncpa [#allocation4], 1
    %s1319 = scalar_lea.sflag [#allocation4], 1
    %1320 = vsyncpa %s1319, 1
    %1321 = vsyncpa [#allocation7], 1
    %1322 = vsyncpa [#allocation5], 1
    %s1323 = scalar_lea.sflag [#allocation5], 1
    %1324 = vsyncpa %s1323, 1

// kernel: zknn_conv_forward.2
$region0: #{zknn_conv_forward.2}
  #allocation0 [shape = 'u32[]', space=smem, size = 0x4, offset = 0x4, fixed_abs, tag = 'smem constant byte address 0x4 - core index']
  #allocation1 [shape = 'u32[144,128]{1,0:T(1,128)}', space=vmem, size = 0x12000, scoped, tag = 'internal scratch']
  %s0 = inlined_call_operand.vmem [shape: bf16[288,36], index: 0, kind: input, shape index: {}]
  %s1 = inlined_call_operand.hbm [shape: bf16[36,1536], index: 1, kind: input, shape index: {}]
  %s2 = inlined_call_operand.hbm [shape: f32[1,1536], index: 2, kind: input, shape index: {}]
  %s3 = inlined_call_operand.vmem [shape: bf16[384,64], index: 3, kind: input, shape index: {}]
  %s4 = inlined_call_operand.hbm [shape: f32[1,64], index: 4, kind: input, shape index: {}]
  %s5 = inlined_call_operand.vmem [shape: bf16[288,64], index: 5, kind: output, shape index: {}]
  %s6 = sld [smem:[#allocation0]]
  $region42: #{zknn_conv_forward.2} parent=0
    _
  %s8 = ssub.s32 1, %s6
  %s9 = scalar_select 0, %s8, %s6
  $region1: #{zknn_conv_forward.2} parent=0
    #allocation2 [shape = 'u8[122880]{0}', space=vmem, size = 0x1e000, scoped, tag = 'input window, operand 1, single buffered']
    #allocation3 [shape = 's32[1]{0}', space=sflag, size = 0x4, scoped, tag = 'scoped memory for zknn_conv_forward.2']
    #allocation4 [shape = 'u8[6144]{0}', space=vmem, size = 0x1800, scoped, tag = 'input window, operand 2, single buffered']
    #allocation5 [shape = 's32[1]{0}', space=sflag, size = 0x4, scoped, tag = 'scoped memory for zknn_conv_forward.2']
    #allocation6 [shape = 'u8[512]{0}', space=vmem, size = 0x400, scoped, tag = 'input window, operand 4, single buffered']
    %10 = vsyncpa [#allocation3], 0
    %11 = vsyncpa [#allocation5], 0
    // Predicated region
    $region2: #{zknn_conv_forward.2} parent=1 // pred_check
      _
    $region3: #{zknn_conv_forward.2} parent=1 // pred_check_branch
      %13 = sbr.rel (0) target = $region5
    $region4: #{zknn_conv_forward.2} parent=1 // pred_region
      _
    $region5: #{zknn_conv_forward.2} parent=1 // pred_fallthru
      _
    // Predicated region
    $region6: #{zknn_conv_forward.2} parent=1 // pred_check
      _
    $region7: #{zknn_conv_forward.2} parent=1 // pred_check_branch
      %15 = sbr.rel (0) target = $region9
    $region8: #{zknn_conv_forward.2} parent=1 // pred_region
      %s17 = ssub.s32 3840, 3840
      %18 = vsyncadd [#allocation3], %s17
      %s19 = sshll.u32 [#allocation2], 4
      %s20 = int_to_ptr.vmem [resolvable:$true] %s19
      %25 = dma.hbm_to_vmem [thread:$0]  %s1, 3840, %s20, [#allocation3], 768, 768, 48
    $region9: #{zknn_conv_forward.2} parent=1 // pred_fallthru
      _
    // Predicated region
    $region10: #{zknn_conv_forward.2} parent=1 // pred_check
      _
    $region11: #{zknn_conv_forward.2} parent=1 // pred_check_branch
      %27 = sbr.rel (0) target = $region13
    $region12: #{zknn_conv_forward.2} parent=1 // pred_region
      %s29 = ssub.s32 192, 192
      %30 = vsyncadd [#allocation5], %s29
      %s32 = sshll.u32 [#allocation4], 4
      %s33 = int_to_ptr.vmem [resolvable:$true] %s32
      %35 = dma.hbm_to_vmem [thread:$0]  %s2, 192, %s33, [#allocation5]
    $region13: #{zknn_conv_forward.2} parent=1 // pred_fallthru
      _
    // Predicated region
    $region14: #{zknn_conv_forward.2} parent=1 // pred_check
      _
    $region15: #{zknn_conv_forward.2} parent=1 // pred_check_branch
      %37 = sbr.rel (0) target = $region17
    $region16: #{zknn_conv_forward.2} parent=1 // pred_region
      _
    $region17: #{zknn_conv_forward.2} parent=1 // pred_fallthru
      _
    // Predicated region
    $region18: #{zknn_conv_forward.2} parent=1 // pred_check
      _
    $region19: #{zknn_conv_forward.2} parent=1 // pred_check_branch
      %39 = sbr.rel (0) target = $region21
    $region20: #{zknn_conv_forward.2} parent=1 // pred_region
      %s41 = ssub.s32 16, 16
      %42 = vsyncadd [#allocation5], %s41
      %s44 = sshll.u32 [#allocation6], 4
      %s45 = int_to_ptr.vmem [resolvable:$true] %s44
      %47 = dma.hbm_to_vmem [thread:$0]  %s4, 16, %s45, [#allocation5]
    $region21: #{zknn_conv_forward.2} parent=1 // pred_fallthru
      _
    // Predicated region
    $region22: #{zknn_conv_forward.2} parent=1 // pred_check
      _
    $region23: #{zknn_conv_forward.2} parent=1 // pred_check_branch
      %49 = sbr.rel (0) target = $region25
    $region24: #{zknn_conv_forward.2} parent=1 // pred_region
      %50 = dma.done [#allocation3], 3840
    $region25: #{zknn_conv_forward.2} parent=1 // pred_fallthru
      _
    // Predicated region
    $region26: #{zknn_conv_forward.2} parent=1 // pred_check
      _
    $region27: #{zknn_conv_forward.2} parent=1 // pred_check_branch
      %52 = sbr.rel (0) target = $region29
    $region28: #{zknn_conv_forward.2} parent=1 // pred_region
      %53 = dma.done [#allocation5], 192
    $region29: #{zknn_conv_forward.2} parent=1 // pred_fallthru
      _
    // Predicated region
    $region30: #{zknn_conv_forward.2} parent=1 // pred_check
      _
    $region31: #{zknn_conv_forward.2} parent=1 // pred_check_branch
      %55 = sbr.rel (0) target = $region33
    $region32: #{zknn_conv_forward.2} parent=1 // pred_region
      %56 = dma.done [#allocation5], 16
    $region33: #{zknn_conv_forward.2} parent=1 // pred_fallthru
      _
    %v58 = vld [vmem:[%s0] sm:$0xf]
    %v59 = vld [vmem:[%s0 + $0x4] sm:$0xf]
    %v60 = vld [vmem:[%s0 + $0x8] sm:$0xf]
    %v61 = vld [vmem:[%s0 + $0xc] sm:$0xf]
    %v62 = vld [vmem:[%s0 + $0x10] sm:$0xf]
    %v63 = vld [vmem:[%s0 + $0x14] sm:$0xf]
    %v64 = vld [vmem:[%s0 + $0x18] sm:$0xf]
    %v65 = vld [vmem:[%s0 + $0x1c] sm:$0xf]
    %v66 = vld [vmem:[%s0 + $0x20] sm:$0xf]
    %v67 = vld [vmem:[%s0 + $0x24] sm:$0xf]
    %v68 = vld [vmem:[%s0 + $0x28] sm:$0xf]
    %v69 = vld [vmem:[%s0 + $0x2c] sm:$0xf]
    %v70 = vld [vmem:[%s0 + $0x30] sm:$0xf]
    %v71 = vld [vmem:[%s0 + $0x34] sm:$0xf]
    %v72 = vld [vmem:[%s0 + $0x38] sm:$0xf]
    %v73 = vld [vmem:[%s0 + $0x3c] sm:$0xf]
    %v74 = vld [vmem:[%s0 + $0x40] sm:$0xf]
    %v75 = vld [vmem:[%s0 + $0x44] sm:$0xf]
    %v76 = vld [vmem:[%s0 + $0x48] sm:$0xf]
    %v77 = vld [vmem:[%s0 + $0x4c] sm:$0xf]
    %v78 = vld [vmem:[%s0 + $0x50] sm:$0xf]
    %v79 = vld [vmem:[%s0 + $0x54] sm:$0xf]
    %v80 = vld [vmem:[%s0 + $0x58] sm:$0xf]
    %v81 = vld [vmem:[%s0 + $0x5c] sm:$0xf]
    %v82 = vld [vmem:[%s0 + $0x60] sm:$0xf]
    %v83 = vld [vmem:[%s0 + $0x64] sm:$0xf]
    %v84 = vld [vmem:[%s0 + $0x68] sm:$0xf]
    %v85 = vld [vmem:[%s0 + $0x6c] sm:$0xf]
    %v86 = vld [vmem:[%s0 + $0x70] sm:$0xf]
    %v87 = vld [vmem:[%s0 + $0x74] sm:$0xf]
    %v88 = vld [vmem:[%s0 + $0x78] sm:$0xf]
    %v89 = vld [vmem:[%s0 + $0x7c] sm:$0xf]
    %v90 = vld [vmem:[%s0 + $0x80] sm:$0xf]
    %v91 = vld [vmem:[%s0 + $0x84] sm:$0xf]
    %v92 = vld [vmem:[%s0 + $0x88] sm:$0xf]
    %v93 = vld [vmem:[%s0 + $0x8c] sm:$0xf]
    %v94 = vld [vmem:[#allocation2] sm:$0xff]
    %v95 = vld [vmem:[#allocation2 + $0x8] sm:$0xff]
    %v96 = vld [vmem:[#allocation2 + $0x10] sm:$0xff]
    %v97 = vld [vmem:[#allocation2 + $0x18] sm:$0xff]
    %v98 = vld [vmem:[#allocation2 + $0x20] sm:$0xff]
    %v99 = vld [vmem:[#allocation2 + $0x28] sm:$0xff]
    %v100 = vld [vmem:[#allocation2 + $0x30] sm:$0xff]
    %v101 = vld [vmem:[#allocation2 + $0x38] sm:$0xff]
    %v102 = vld [vmem:[#allocation2 + $0x40] sm:$0xff]
    %v103 = vld [vmem:[#allocation2 + $0x48] sm:$0xff]
    %v104 = vld [vmem:[#allocation2 + $0x50] sm:$0xff]
    %v105 = vld [vmem:[#allocation2 + $0x58] sm:$0xff]
    %v106 = vld [vmem:[#allocation2 + $0x60] sm:$0xff]
    %v107 = vld [vmem:[#allocation2 + $0x68] sm:$0xff]
    %v108 = vld [vmem:[#allocation2 + $0x70] sm:$0xff]
    %v109 = vld [vmem:[#allocation2 + $0x78] sm:$0xff]
    %v110 = vld [vmem:[#allocation2 + $0x80] sm:$0xff]
    %v111 = vld [vmem:[#allocation2 + $0x88] sm:$0xff]
    %v112 = vld [vmem:[#allocation2 + $0x90] sm:$0xff]
    %v113 = vld [vmem:[#allocation2 + $0x98] sm:$0xff]
    %v114 = vld [vmem:[#allocation2 + $0xa0] sm:$0xff]
    %v115 = vld [vmem:[#allocation2 + $0xa8] sm:$0xff]
    %v116 = vld [vmem:[#allocation2 + $0xb0] sm:$0xff]
    %v117 = vld [vmem:[#allocation2 + $0xb8] sm:$0xff]
    %v118 = vld [vmem:[#allocation2 + $0xc0] sm:$0x33]
    %v119 = vld [vmem:[#allocation2 + $0xc8] sm:$0x33]
    %v120 = vld [vmem:[#allocation2 + $0xd0] sm:$0x33]
    %v121 = vld [vmem:[#allocation2 + $0xd8] sm:$0x33]
    %v122 = vld [vmem:[#allocation2 + $0xe0] sm:$0x33]
    %v123 = vld [vmem:[#allocation2 + $0xe8] sm:$0x33]
    %v124 = vld [vmem:[#allocation4] sm:$0xff]
    %v125 = vld [vmem:[#allocation4 + $0x8] sm:$0xf]
    %v128 = vlaneseq
    %v129 = vshrl.u32 %v128, 7
    %v130 = vsub.s32 0, %v129
    %v131 = vrot.slane %v124, %v130
    %v132 = vlaneseq
    %v133 = vshrl.u32 %v132, 7
    %v134 = vsub.s32 1, %v133
    %v135 = vrot.slane %v124, %v134
    %v136 = vlaneseq
    %v137 = vshrl.u32 %v136, 7
    %v138 = vsub.s32 2, %v137
    %v139 = vrot.slane %v124, %v138
    %v140 = vlaneseq
    %v141 = vshrl.u32 %v140, 7
    %v142 = vsub.s32 3, %v141
    %v143 = vrot.slane %v124, %v142
    %v144 = vlaneseq
    %v145 = vshrl.u32 %v144, 7
    %v146 = vsub.s32 4, %v145
    %v147 = vrot.slane %v124, %v146
    %v148 = vlaneseq
    %v149 = vshrl.u32 %v148, 7
    %v150 = vsub.s32 5, %v149
    %v151 = vrot.slane %v124, %v150
    %v152 = vlaneseq
    %v153 = vshrl.u32 %v152, 7
    %v154 = vsub.s32 6, %v153
    %v155 = vrot.slane %v124, %v154
    %v156 = vlaneseq
    %v157 = vshrl.u32 %v156, 7
    %v158 = vsub.s32 7, %v157
    %v159 = vrot.slane %v124, %v158
    %v160 = vlaneseq
    %v161 = vshrl.u32 %v160, 7
    %v162 = vsub.s32 0, %v161
    %v163 = vrot.slane %v125, %v162
    %v164 = vlaneseq
    %v165 = vshrl.u32 %v164, 7
    %v166 = vsub.s32 1, %v165
    %v167 = vrot.slane %v125, %v166
    %v168 = vlaneseq
    %v169 = vshrl.u32 %v168, 7
    %v170 = vsub.s32 2, %v169
    %v171 = vrot.slane %v125, %v170
    %v172 = vlaneseq
    %v173 = vshrl.u32 %v172, 7
    %v174 = vsub.s32 3, %v173
    %v175 = vrot.slane %v125, %v174
    %v224 = vunpack.c.l.b16 %v58
    %v225 = vunpack.c.l.b16 %v59
    %v226 = vunpack.c.l.b16 %v60
    %v227 = vunpack.c.l.b16 %v61
    %v228 = vunpack.c.l.b16 %v62
    %v229 = vunpack.c.l.b16 %v63
    %v230 = vunpack.c.l.b16 %v64
    %v231 = vunpack.c.l.b16 %v65
    %v232 = vunpack.c.l.b16 %v66
    %v233 = vunpack.c.l.b16 %v67
    %v234 = vunpack.c.l.b16 %v68
    %v235 = vunpack.c.l.b16 %v69
    %v236 = vunpack.c.l.b16 %v70
    %v237 = vunpack.c.l.b16 %v71
    %v238 = vunpack.c.l.b16 %v72
    %v239 = vunpack.c.l.b16 %v73
    %v240 = vunpack.c.l.b16 %v74
    %v241 = vunpack.c.l.b16 %v75
    %v242 = vunpack.c.l.b16 %v76
    %v243 = vunpack.c.l.b16 %v77
    %v244 = vunpack.c.l.b16 %v78
    %v245 = vunpack.c.l.b16 %v79
    %v246 = vunpack.c.l.b16 %v80
    %v247 = vunpack.c.l.b16 %v81
    %v248 = vunpack.c.l.b16 %v82
    %v249 = vunpack.c.l.b16 %v83
    %v250 = vunpack.c.l.b16 %v84
    %v251 = vunpack.c.l.b16 %v85
    %v252 = vunpack.c.l.b16 %v86
    %v253 = vunpack.c.l.b16 %v87
    %v254 = vunpack.c.l.b16 %v88
    %v255 = vunpack.c.l.b16 %v89
    %v256 = vunpack.c.l.b16 %v90
    %v257 = vunpack.c.l.b16 %v91
    %v258 = vunpack.c.l.b16 %v92
    %v259 = vunpack.c.l.b16 %v93
    %v260 = vpack.c.b16 %v225, %v224
    %v261 = vpack.c.b16 %v227, %v226
    %v262 = vpack.c.b16 %v229, %v228
    %v263 = vpack.c.b16 %v231, %v230
    %v264 = vpack.c.b16 %v233, %v232
    %v265 = vpack.c.b16 %v235, %v234
    %v266 = vpack.c.b16 %v237, %v236
    %v267 = vpack.c.b16 %v239, %v238
    %v268 = vpack.c.b16 %v241, %v240
    %v269 = vpack.c.b16 %v243, %v242
    %v270 = vpack.c.b16 %v245, %v244
    %v271 = vpack.c.b16 %v247, %v246
    %v272 = vpack.c.b16 %v249, %v248
    %v273 = vpack.c.b16 %v251, %v250
    %v274 = vpack.c.b16 %v253, %v252
    %v275 = vpack.c.b16 %v255, %v254
    %v276 = vpack.c.b16 %v257, %v256
    %v277 = vpack.c.b16 %v259, %v258
    %v308 = vunpack.c.l.b16 %v94
    %v309 = vunpack.c.h.b16 %v94
    %v310 = vunpack.c.l.b16 %v95
    %v311 = vunpack.c.h.b16 %v95
    %v312 = vunpack.c.l.b16 %v96
    %v313 = vunpack.c.h.b16 %v96
    %v314 = vunpack.c.l.b16 %v97
    %v315 = vunpack.c.h.b16 %v97
    %v316 = vunpack.c.l.b16 %v98
    %v317 = vunpack.c.h.b16 %v98
    %v318 = vunpack.c.l.b16 %v99
    %v319 = vunpack.c.h.b16 %v99
    %v320 = vunpack.c.l.b16 %v100
    %v321 = vunpack.c.h.b16 %v100
    %v322 = vunpack.c.l.b16 %v101
    %v323 = vunpack.c.h.b16 %v101
    %v324 = vunpack.c.l.b16 %v102
    %v325 = vunpack.c.h.b16 %v102
    %v326 = vunpack.c.l.b16 %v103
    %v327 = vunpack.c.h.b16 %v103
    %v328 = vunpack.c.l.b16 %v104
    %v329 = vunpack.c.h.b16 %v104
    %v330 = vunpack.c.l.b16 %v105
    %v331 = vunpack.c.h.b16 %v105
    %v332 = vunpack.c.l.b16 %v106
    %v333 = vunpack.c.h.b16 %v106
    %v334 = vunpack.c.l.b16 %v107
    %v335 = vunpack.c.h.b16 %v107
    %v336 = vunpack.c.l.b16 %v108
    %v337 = vunpack.c.h.b16 %v108
    %v338 = vunpack.c.l.b16 %v109
    %v339 = vunpack.c.h.b16 %v109
    %v340 = vunpack.c.l.b16 %v110
    %v341 = vunpack.c.h.b16 %v110
    %v342 = vunpack.c.l.b16 %v111
    %v343 = vunpack.c.h.b16 %v111
    %v344 = vunpack.c.l.b16 %v112
    %v345 = vunpack.c.h.b16 %v112
    %v346 = vunpack.c.l.b16 %v113
    %v347 = vunpack.c.h.b16 %v113
    %v348 = vunpack.c.l.b16 %v114
    %v349 = vunpack.c.h.b16 %v114
    %v350 = vunpack.c.l.b16 %v115
    %v351 = vunpack.c.h.b16 %v115
    %v352 = vunpack.c.l.b16 %v116
    %v353 = vunpack.c.h.b16 %v116
    %v354 = vunpack.c.l.b16 %v117
    %v355 = vunpack.c.h.b16 %v117
    %v356 = vunpack.c.l.b16 %v118
    %v357 = vunpack.c.h.b16 %v118
    %v358 = vunpack.c.l.b16 %v119
    %v359 = vunpack.c.h.b16 %v119
    %v360 = vunpack.c.l.b16 %v120
    %v361 = vunpack.c.h.b16 %v120
    %v362 = vunpack.c.l.b16 %v121
    %v363 = vunpack.c.h.b16 %v121
    %v364 = vunpack.c.l.b16 %v122
    %v365 = vunpack.c.h.b16 %v122
    %v366 = vunpack.c.l.b16 %v123
    %v367 = vunpack.c.h.b16 %v123
    %v368 = vpack.c.b16 %v320, %v308
    %v369 = vpack.c.b16 %v321, %v309
    %v370 = vpack.c.b16 %v322, %v310
    %v371 = vpack.c.b16 %v323, %v311
    %v372 = vpack.c.b16 %v324, %v312
    %v373 = vpack.c.b16 %v325, %v313
    %v374 = vpack.c.b16 %v326, %v314
    %v375 = vpack.c.b16 %v327, %v315
    %v376 = vpack.c.b16 %v328, %v316
    %v377 = vpack.c.b16 %v329, %v317
    %v378 = vpack.c.b16 %v330, %v318
    %v379 = vpack.c.b16 %v331, %v319
    %v380 = vpack.c.b16 %v344, %v332
    %v381 = vpack.c.b16 %v345, %v333
    %v382 = vpack.c.b16 %v346, %v334
    %v383 = vpack.c.b16 %v347, %v335
    %v384 = vpack.c.b16 %v348, %v336
    %v385 = vpack.c.b16 %v349, %v337
    %v386 = vpack.c.b16 %v350, %v338
    %v387 = vpack.c.b16 %v351, %v339
    %v388 = vpack.c.b16 %v352, %v340
    %v389 = vpack.c.b16 %v353, %v341
    %v390 = vpack.c.b16 %v354, %v342
    %v391 = vpack.c.b16 %v355, %v343
    %v392 = vpack.c.b16 %v356, %v356
    %v393 = vpack.c.b16 %v357, %v357
    %v394 = vpack.c.b16 %v358, %v358
    %v395 = vpack.c.b16 %v359, %v359
    %v396 = vpack.c.b16 %v360, %v360
    %v397 = vpack.c.b16 %v361, %v361
    %v398 = vpack.c.b16 %v362, %v362
    %v399 = vpack.c.b16 %v363, %v363
    %v400 = vpack.c.b16 %v364, %v364
    %v401 = vpack.c.b16 %v365, %v365
    %v402 = vpack.c.b16 %v366, %v366
    %v403 = vpack.c.b16 %v367, %v367
    %vm428 = vcmask 293888
    %v430 = vsel %vm428, %v260, 0
    %v433 = vsel %vm428, %v261, 0
    %v436 = vsel %vm428, %v262, 0
    %v439 = vsel %vm428, %v263, 0
    %v442 = vsel %vm428, %v264, 0
    %v445 = vsel %vm428, %v265, 0
    %v448 = vsel %vm428, %v266, 0
    %v451 = vsel %vm428, %v267, 0
    %v454 = vsel %vm428, %v268, 0
    %v457 = vsel %vm428, %v269, 0
    %v460 = vsel %vm428, %v270, 0
    %v463 = vsel %vm428, %v271, 0
    %v466 = vsel %vm428, %v272, 0
    %v469 = vsel %vm428, %v273, 0
    %v472 = vsel %vm428, %v274, 0
    %v475 = vsel %vm428, %v275, 0
    %v478 = vsel %vm428, %v276, 0
    %v481 = vsel %vm428, %v277, 0
    %vm483 = vcmask 1041408
    %v485 = vsel %vm483, %v392, 0
    %v488 = vsel %vm483, %v393, 0
    %v491 = vsel %vm483, %v394, 0
    %v494 = vsel %vm483, %v395, 0
    %v497 = vsel %vm483, %v396, 0
    %v500 = vsel %vm483, %v397, 0
    %v503 = vsel %vm483, %v398, 0
    %v506 = vsel %vm483, %v399, 0
    %v509 = vsel %vm483, %v400, 0
    %v512 = vsel %vm483, %v401, 0
    %v515 = vsel %vm483, %v402, 0
    %v518 = vsel %vm483, %v403, 0
    %520 = vmatprep.subr.bf16.mxu0 0
    %521 = vmatpush1.bf16.msra.mxu0 0
    %522 = vmatprep.subr.bf16.mxu0 0
    %523 = vmatpush1.bf16.msra.mxu0 0
    %524 = vmatprep.subr.bf16.mxu0 0
    %525 = vmatpush1.bf16.msra.mxu0 0
    %526 = vmatprep.subr.bf16.mxu0 0
    %527 = vmatpush1.bf16.msra.mxu0 0
    %528 = vmatprep.subr.bf16.mxu0 0
    %529 = vmatpush1.bf16.msra.mxu0 0
    %530 = vmatprep.subr.bf16.mxu0 %v488
    %531 = vmatpush1.bf16.msra.mxu0 %v485
    %532 = vmatprep.subr.bf16.mxu0 %v381
    %533 = vmatpush1.bf16.msra.mxu0 %v380
    %534 = vmatprep.subr.bf16.mxu0 %v369
    %535 = vmatpush1.bf16.msra.mxu0 %v368
    %536 = vmatprep.subr.bf16.mxu0 0
    %537 = vmatpush2.bf16.msra.mxu0 0
    %538 = vmatprep.subr.bf16.mxu0 0
    %539 = vmatpush2.bf16.msra.mxu0 0
    %540 = vmatprep.subr.bf16.mxu0 0
    %541 = vmatpush2.bf16.msra.mxu0 0
    %542 = vmatprep.subr.bf16.mxu0 0
    %543 = vmatpush2.bf16.msra.mxu0 0
    %544 = vmatprep.subr.bf16.mxu0 0
    %545 = vmatpush2.bf16.msra.mxu0 0
    %546 = vmatprep.subr.bf16.mxu0 0
    %547 = vmatpush2.bf16.msra.mxu0 0
    %548 = vmatprep.subr.bf16.mxu0 0
    %549 = vmatpush2.bf16.msra.mxu0 0
    %550 = vmatprep.subr.bf16.mxu0 0
    %551 = vmatpush2.bf16.msra.mxu0 0
    %552 = vmatprep.mubr.bf16.mxu0 0
    %553 = vmatmul.mubr.bf16.gmra.mxu0 %v430
    %v554 = vpop.f32.mrf.mxu0
    %v555 = vadd.f32 %v131, %v554
    %v556 = vpop.f32.mrf.mxu0
    %v557 = vadd.f32 %v135, %v556
    %v558 = vpop.f32.mrf.mxu0
    %v559 = vadd.f32 %v131, %v558
    %v560 = vpop.f32.mrf.mxu0
    %v561 = vadd.f32 %v135, %v560
    %562 = vmatprep.mubr.bf16.mxu0 0
    %563 = vmatmul.mubr.bf16.gmra.mxu0 %v433
    %v564 = vpop.f32.mrf.mxu0
    %v565 = vadd.f32 %v131, %v564
    %v566 = vpop.f32.mrf.mxu0
    %v567 = vadd.f32 %v135, %v566
    %v568 = vpop.f32.mrf.mxu0
    %v569 = vadd.f32 %v131, %v568
    %v570 = vpop.f32.mrf.mxu0
    %v571 = vadd.f32 %v135, %v570
    %572 = vmatprep.mubr.bf16.mxu0 0
    %573 = vmatmul.mubr.bf16.gmra.mxu0 %v436
    %v574 = vpop.f32.mrf.mxu0
    %v575 = vadd.f32 %v131, %v574
    %v576 = vpop.f32.mrf.mxu0
    %v577 = vadd.f32 %v135, %v576
    %v578 = vpop.f32.mrf.mxu0
    %v579 = vadd.f32 %v131, %v578
    %v580 = vpop.f32.mrf.mxu0
    %v581 = vadd.f32 %v135, %v580
    %582 = vmatprep.mubr.bf16.mxu0 0
    %583 = vmatmul.mubr.bf16.gmra.mxu0 %v439
    %v584 = vpop.f32.mrf.mxu0
    %v585 = vadd.f32 %v131, %v584
    %v586 = vpop.f32.mrf.mxu0
    %v587 = vadd.f32 %v135, %v586
    %v588 = vpop.f32.mrf.mxu0
    %v589 = vadd.f32 %v131, %v588
    %v590 = vpop.f32.mrf.mxu0
    %v591 = vadd.f32 %v135, %v590
    %592 = vmatprep.mubr.bf16.mxu0 0
    %593 = vmatmul.mubr.bf16.gmra.mxu0 %v442
    %v594 = vpop.f32.mrf.mxu0
    %v595 = vadd.f32 %v131, %v594
    %v596 = vpop.f32.mrf.mxu0
    %v597 = vadd.f32 %v135, %v596
    %v598 = vpop.f32.mrf.mxu0
    %v599 = vadd.f32 %v131, %v598
    %v600 = vpop.f32.mrf.mxu0
    %v601 = vadd.f32 %v135, %v600
    %602 = vmatprep.mubr.bf16.mxu0 0
    %603 = vmatmul.mubr.bf16.gmra.mxu0 %v445
    %v604 = vpop.f32.mrf.mxu0
    %v605 = vadd.f32 %v131, %v604
    %v606 = vpop.f32.mrf.mxu0
    %v607 = vadd.f32 %v135, %v606
    %v608 = vpop.f32.mrf.mxu0
    %v609 = vadd.f32 %v131, %v608
    %v610 = vpop.f32.mrf.mxu0
    %v611 = vadd.f32 %v135, %v610
    %612 = vmatprep.mubr.bf16.mxu0 0
    %613 = vmatmul.mubr.bf16.gmra.mxu0 %v448
    %v614 = vpop.f32.mrf.mxu0
    %v615 = vadd.f32 %v131, %v614
    %v616 = vpop.f32.mrf.mxu0
    %v617 = vadd.f32 %v135, %v616
    %v618 = vpop.f32.mrf.mxu0
    %v619 = vadd.f32 %v131, %v618
    %v620 = vpop.f32.mrf.mxu0
    %v621 = vadd.f32 %v135, %v620
    %622 = vmatprep.mubr.bf16.mxu0 0
    %623 = vmatmul.mubr.bf16.gmra.mxu0 %v451
    %v624 = vpop.f32.mrf.mxu0
    %v625 = vadd.f32 %v131, %v624
    %v626 = vpop.f32.mrf.mxu0
    %v627 = vadd.f32 %v135, %v626
    %v628 = vpop.f32.mrf.mxu0
    %v629 = vadd.f32 %v131, %v628
    %v630 = vpop.f32.mrf.mxu0
    %v631 = vadd.f32 %v135, %v630
    %632 = vmatprep.mubr.bf16.mxu0 0
    %633 = vmatmul.mubr.bf16.gmra.mxu0 %v454
    %v634 = vpop.f32.mrf.mxu0
    %v635 = vadd.f32 %v131, %v634
    %v636 = vpop.f32.mrf.mxu0
    %v637 = vadd.f32 %v135, %v636
    %v638 = vpop.f32.mrf.mxu0
    %v639 = vadd.f32 %v131, %v638
    %v640 = vpop.f32.mrf.mxu0
    %v641 = vadd.f32 %v135, %v640
    %642 = vmatprep.mubr.bf16.mxu0 0
    %643 = vmatmul.mubr.bf16.gmra.mxu0 %v457
    %v644 = vpop.f32.mrf.mxu0
    %v645 = vadd.f32 %v131, %v644
    %v646 = vpop.f32.mrf.mxu0
    %v647 = vadd.f32 %v135, %v646
    %v648 = vpop.f32.mrf.mxu0
    %v649 = vadd.f32 %v131, %v648
    %v650 = vpop.f32.mrf.mxu0
    %v651 = vadd.f32 %v135, %v650
    %652 = vmatprep.mubr.bf16.mxu0 0
    %653 = vmatmul.mubr.bf16.gmra.mxu0 %v460
    %v654 = vpop.f32.mrf.mxu0
    %v655 = vadd.f32 %v131, %v654
    %v656 = vpop.f32.mrf.mxu0
    %v657 = vadd.f32 %v135, %v656
    %v658 = vpop.f32.mrf.mxu0
    %v659 = vadd.f32 %v131, %v658
    %v660 = vpop.f32.mrf.mxu0
    %v661 = vadd.f32 %v135, %v660
    %662 = vmatprep.mubr.bf16.mxu0 0
    %663 = vmatmul.mubr.bf16.gmra.mxu0 %v463
    %v664 = vpop.f32.mrf.mxu0
    %v665 = vadd.f32 %v131, %v664
    %v666 = vpop.f32.mrf.mxu0
    %v667 = vadd.f32 %v135, %v666
    %v668 = vpop.f32.mrf.mxu0
    %v669 = vadd.f32 %v131, %v668
    %v670 = vpop.f32.mrf.mxu0
    %v671 = vadd.f32 %v135, %v670
    %672 = vmatprep.mubr.bf16.mxu0 0
    %673 = vmatmul.mubr.bf16.gmra.mxu0 %v466
    %v674 = vpop.f32.mrf.mxu0
    %v675 = vadd.f32 %v131, %v674
    %v676 = vpop.f32.mrf.mxu0
    %v677 = vadd.f32 %v135, %v676
    %v678 = vpop.f32.mrf.mxu0
    %v679 = vadd.f32 %v131, %v678
    %v680 = vpop.f32.mrf.mxu0
    %v681 = vadd.f32 %v135, %v680
    %682 = vmatprep.mubr.bf16.mxu0 0
    %683 = vmatmul.mubr.bf16.gmra.mxu0 %v469
    %v684 = vpop.f32.mrf.mxu0
    %v685 = vadd.f32 %v131, %v684
    %v686 = vpop.f32.mrf.mxu0
    %v687 = vadd.f32 %v135, %v686
    %v688 = vpop.f32.mrf.mxu0
    %v689 = vadd.f32 %v131, %v688
    %v690 = vpop.f32.mrf.mxu0
    %v691 = vadd.f32 %v135, %v690
    %692 = vmatprep.mubr.bf16.mxu0 0
    %693 = vmatmul.mubr.bf16.gmra.mxu0 %v472
    %v694 = vpop.f32.mrf.mxu0
    %v695 = vadd.f32 %v131, %v694
    %v696 = vpop.f32.mrf.mxu0
    %v697 = vadd.f32 %v135, %v696
    %v698 = vpop.f32.mrf.mxu0
    %v699 = vadd.f32 %v131, %v698
    %v700 = vpop.f32.mrf.mxu0
    %v701 = vadd.f32 %v135, %v700
    %702 = vmatprep.mubr.bf16.mxu0 0
    %703 = vmatmul.mubr.bf16.gmra.mxu0 %v475
    %v704 = vpop.f32.mrf.mxu0
    %v705 = vadd.f32 %v131, %v704
    %v706 = vpop.f32.mrf.mxu0
    %v707 = vadd.f32 %v135, %v706
    %v708 = vpop.f32.mrf.mxu0
    %v709 = vadd.f32 %v131, %v708
    %v710 = vpop.f32.mrf.mxu0
    %v711 = vadd.f32 %v135, %v710
    %712 = vmatprep.mubr.bf16.mxu0 0
    %713 = vmatmul.mubr.bf16.gmra.mxu0 %v478
    %v714 = vpop.f32.mrf.mxu0
    %v715 = vadd.f32 %v131, %v714
    %v716 = vpop.f32.mrf.mxu0
    %v717 = vadd.f32 %v135, %v716
    %v718 = vpop.f32.mrf.mxu0
    %v719 = vadd.f32 %v131, %v718
    %v720 = vpop.f32.mrf.mxu0
    %v721 = vadd.f32 %v135, %v720
    %722 = vmatprep.mubr.bf16.mxu0 0
    %723 = vmatmul.mubr.bf16.gmra.mxu0 %v481
    %v724 = vpop.f32.mrf.mxu0
    %v725 = vadd.f32 %v131, %v724
    %v726 = vpop.f32.mrf.mxu0
    %v727 = vadd.f32 %v135, %v726
    %v728 = vpop.f32.mrf.mxu0
    %v729 = vadd.f32 %v131, %v728
    %v730 = vpop.f32.mrf.mxu0
    %v731 = vadd.f32 %v135, %v730
    %732 = vdwg.mxu0
    %733 = vmatprep.subr.bf16.mxu0 0
    %734 = vmatpush1.bf16.msra.mxu0 0
    %735 = vmatprep.subr.bf16.mxu0 0
    %736 = vmatpush1.bf16.msra.mxu0 0
    %737 = vmatprep.subr.bf16.mxu0 0
    %738 = vmatpush1.bf16.msra.mxu0 0
    %739 = vmatprep.subr.bf16.mxu0 0
    %740 = vmatpush1.bf16.msra.mxu0 0
    %741 = vmatprep.subr.bf16.mxu0 0
    %742 = vmatpush1.bf16.msra.mxu0 0
    %743 = vmatprep.subr.bf16.mxu0 %v494
    %744 = vmatpush1.bf16.msra.mxu0 %v491
    %745 = vmatprep.subr.bf16.mxu0 %v383
    %746 = vmatpush1.bf16.msra.mxu0 %v382
    %747 = vmatprep.subr.bf16.mxu0 %v371
    %748 = vmatpush1.bf16.msra.mxu0 %v370
    %749 = vmatprep.subr.bf16.mxu0 0
    %750 = vmatpush2.bf16.msra.mxu0 0
    %751 = vmatprep.subr.bf16.mxu0 0
    %752 = vmatpush2.bf16.msra.mxu0 0
    %753 = vmatprep.subr.bf16.mxu0 0
    %754 = vmatpush2.bf16.msra.mxu0 0
    %755 = vmatprep.subr.bf16.mxu0 0
    %756 = vmatpush2.bf16.msra.mxu0 0
    %757 = vmatprep.subr.bf16.mxu0 0
    %758 = vmatpush2.bf16.msra.mxu0 0
    %759 = vmatprep.subr.bf16.mxu0 0
    %760 = vmatpush2.bf16.msra.mxu0 0
    %761 = vmatprep.subr.bf16.mxu0 0
    %762 = vmatpush2.bf16.msra.mxu0 0
    %763 = vmatprep.subr.bf16.mxu0 0
    %764 = vmatpush2.bf16.msra.mxu0 0
    %765 = vmatprep.mubr.bf16.mxu0 0
    %766 = vmatmul.mubr.bf16.gmra.mxu0 %v430
    %v767 = vpop.f32.mrf.mxu0
    %v768 = vadd.f32 %v139, %v767
    %v769 = vpop.f32.mrf.mxu0
    %v770 = vadd.f32 %v143, %v769
    %v771 = vpop.f32.mrf.mxu0
    %v772 = vadd.f32 %v139, %v771
    %v773 = vpop.f32.mrf.mxu0
    %v774 = vadd.f32 %v143, %v773
    %775 = vmatprep.mubr.bf16.mxu0 0
    %776 = vmatmul.mubr.bf16.gmra.mxu0 %v433
    %v777 = vpop.f32.mrf.mxu0
    %v778 = vadd.f32 %v139, %v777
    %v779 = vpop.f32.mrf.mxu0
    %v780 = vadd.f32 %v143, %v779
    %v781 = vpop.f32.mrf.mxu0
    %v782 = vadd.f32 %v139, %v781
    %v783 = vpop.f32.mrf.mxu0
    %v784 = vadd.f32 %v143, %v783
    %785 = vmatprep.mubr.bf16.mxu0 0
    %786 = vmatmul.mubr.bf16.gmra.mxu0 %v436
    %v787 = vpop.f32.mrf.mxu0
    %v788 = vadd.f32 %v139, %v787
    %v789 = vpop.f32.mrf.mxu0
    %v790 = vadd.f32 %v143, %v789
    %v791 = vpop.f32.mrf.mxu0
    %v792 = vadd.f32 %v139, %v791
    %v793 = vpop.f32.mrf.mxu0
    %v794 = vadd.f32 %v143, %v793
    %795 = vmatprep.mubr.bf16.mxu0 0
    %796 = vmatmul.mubr.bf16.gmra.mxu0 %v439
    %v797 = vpop.f32.mrf.mxu0
    %v798 = vadd.f32 %v139, %v797
    %v799 = vpop.f32.mrf.mxu0
    %v800 = vadd.f32 %v143, %v799
    %v801 = vpop.f32.mrf.mxu0
    %v802 = vadd.f32 %v139, %v801
    %v803 = vpop.f32.mrf.mxu0
    %v804 = vadd.f32 %v143, %v803
    %805 = vmatprep.mubr.bf16.mxu0 0
    %806 = vmatmul.mubr.bf16.gmra.mxu0 %v442
    %v807 = vpop.f32.mrf.mxu0
    %v808 = vadd.f32 %v139, %v807
    %v809 = vpop.f32.mrf.mxu0
    %v810 = vadd.f32 %v143, %v809
    %v811 = vpop.f32.mrf.mxu0
    %v812 = vadd.f32 %v139, %v811
    %v813 = vpop.f32.mrf.mxu0
    %v814 = vadd.f32 %v143, %v813
    %815 = vmatprep.mubr.bf16.mxu0 0
    %816 = vmatmul.mubr.bf16.gmra.mxu0 %v445
    %v817 = vpop.f32.mrf.mxu0
    %v818 = vadd.f32 %v139, %v817
    %v819 = vpop.f32.mrf.mxu0
    %v820 = vadd.f32 %v143, %v819
    %v821 = vpop.f32.mrf.mxu0
    %v822 = vadd.f32 %v139, %v821
    %v823 = vpop.f32.mrf.mxu0
    %v824 = vadd.f32 %v143, %v823
    %825 = vmatprep.mubr.bf16.mxu0 0
    %826 = vmatmul.mubr.bf16.gmra.mxu0 %v448
    %v827 = vpop.f32.mrf.mxu0
    %v828 = vadd.f32 %v139, %v827
    %v829 = vpop.f32.mrf.mxu0
    %v830 = vadd.f32 %v143, %v829
    %v831 = vpop.f32.mrf.mxu0
    %v832 = vadd.f32 %v139, %v831
    %v833 = vpop.f32.mrf.mxu0
    %v834 = vadd.f32 %v143, %v833
    %835 = vmatprep.mubr.bf16.mxu0 0
    %836 = vmatmul.mubr.bf16.gmra.mxu0 %v451
    %v837 = vpop.f32.mrf.mxu0
    %v838 = vadd.f32 %v139, %v837
    %v839 = vpop.f32.mrf.mxu0
    %v840 = vadd.f32 %v143, %v839
    %v841 = vpop.f32.mrf.mxu0
    %v842 = vadd.f32 %v139, %v841
    %v843 = vpop.f32.mrf.mxu0
    %v844 = vadd.f32 %v143, %v843
    %845 = vmatprep.mubr.bf16.mxu0 0
    %846 = vmatmul.mubr.bf16.gmra.mxu0 %v454
    %v847 = vpop.f32.mrf.mxu0
    %v848 = vadd.f32 %v139, %v847
    %v849 = vpop.f32.mrf.mxu0
    %v850 = vadd.f32 %v143, %v849
    %v851 = vpop.f32.mrf.mxu0
    %v852 = vadd.f32 %v139, %v851
    %v853 = vpop.f32.mrf.mxu0
    %v854 = vadd.f32 %v143, %v853
    %855 = vmatprep.mubr.bf16.mxu0 0
    %856 = vmatmul.mubr.bf16.gmra.mxu0 %v457
    %v857 = vpop.f32.mrf.mxu0
    %v858 = vadd.f32 %v139, %v857
    %v859 = vpop.f32.mrf.mxu0
    %v860 = vadd.f32 %v143, %v859
    %v861 = vpop.f32.mrf.mxu0
    %v862 = vadd.f32 %v139, %v861
    %v863 = vpop.f32.mrf.mxu0
    %v864 = vadd.f32 %v143, %v863
    %865 = vmatprep.mubr.bf16.mxu0 0
    %866 = vmatmul.mubr.bf16.gmra.mxu0 %v460
    %v867 = vpop.f32.mrf.mxu0
    %v868 = vadd.f32 %v139, %v867
    %v869 = vpop.f32.mrf.mxu0
    %v870 = vadd.f32 %v143, %v869
    %v871 = vpop.f32.mrf.mxu0
    %v872 = vadd.f32 %v139, %v871
    %v873 = vpop.f32.mrf.mxu0
    %v874 = vadd.f32 %v143, %v873
    %875 = vmatprep.mubr.bf16.mxu0 0
    %876 = vmatmul.mubr.bf16.gmra.mxu0 %v463
    %v877 = vpop.f32.mrf.mxu0
    %v878 = vadd.f32 %v139, %v877
    %v879 = vpop.f32.mrf.mxu0
    %v880 = vadd.f32 %v143, %v879
    %v881 = vpop.f32.mrf.mxu0
    %v882 = vadd.f32 %v139, %v881
    %v883 = vpop.f32.mrf.mxu0
    %v884 = vadd.f32 %v143, %v883
    %885 = vmatprep.mubr.bf16.mxu0 0
    %886 = vmatmul.mubr.bf16.gmra.mxu0 %v466
    %v887 = vpop.f32.mrf.mxu0
    %v888 = vadd.f32 %v139, %v887
    %v889 = vpop.f32.mrf.mxu0
    %v890 = vadd.f32 %v143, %v889
    %v891 = vpop.f32.mrf.mxu0
    %v892 = vadd.f32 %v139, %v891
    %v893 = vpop.f32.mrf.mxu0
    %v894 = vadd.f32 %v143, %v893
    %895 = vmatprep.mubr.bf16.mxu0 0
    %896 = vmatmul.mubr.bf16.gmra.mxu0 %v469
    %v897 = vpop.f32.mrf.mxu0
    %v898 = vadd.f32 %v139, %v897
    %v899 = vpop.f32.mrf.mxu0
    %v900 = vadd.f32 %v143, %v899
    %v901 = vpop.f32.mrf.mxu0
    %v902 = vadd.f32 %v139, %v901
    %v903 = vpop.f32.mrf.mxu0
    %v904 = vadd.f32 %v143, %v903
    %905 = vmatprep.mubr.bf16.mxu0 0
    %906 = vmatmul.mubr.bf16.gmra.mxu0 %v472
    %v907 = vpop.f32.mrf.mxu0
    %v908 = vadd.f32 %v139, %v907
    %v909 = vpop.f32.mrf.mxu0
    %v910 = vadd.f32 %v143, %v909
    %v911 = vpop.f32.mrf.mxu0
    %v912 = vadd.f32 %v139, %v911
    %v913 = vpop.f32.mrf.mxu0
    %v914 = vadd.f32 %v143, %v913
    %915 = vmatprep.mubr.bf16.mxu0 0
    %916 = vmatmul.mubr.bf16.gmra.mxu0 %v475
    %v917 = vpop.f32.mrf.mxu0
    %v918 = vadd.f32 %v139, %v917
    %v919 = vpop.f32.mrf.mxu0
    %v920 = vadd.f32 %v143, %v919
    %v921 = vpop.f32.mrf.mxu0
    %v922 = vadd.f32 %v139, %v921
    %v923 = vpop.f32.mrf.mxu0
    %v924 = vadd.f32 %v143, %v923
    %925 = vmatprep.mubr.bf16.mxu0 0
    %926 = vmatmul.mubr.bf16.gmra.mxu0 %v478
    %v927 = vpop.f32.mrf.mxu0
    %v928 = vadd.f32 %v139, %v927
    %v929 = vpop.f32.mrf.mxu0
    %v930 = vadd.f32 %v143, %v929
    %v931 = vpop.f32.mrf.mxu0
    %v932 = vadd.f32 %v139, %v931
    %v933 = vpop.f32.mrf.mxu0
    %v934 = vadd.f32 %v143, %v933
    %935 = vmatprep.mubr.bf16.mxu0 0
    %936 = vmatmul.mubr.bf16.gmra.mxu0 %v481
    %v937 = vpop.f32.mrf.mxu0
    %v938 = vadd.f32 %v139, %v937
    %v939 = vpop.f32.mrf.mxu0
    %v940 = vadd.f32 %v143, %v939
    %v941 = vpop.f32.mrf.mxu0
    %v942 = vadd.f32 %v139, %v941
    %v943 = vpop.f32.mrf.mxu0
    %v944 = vadd.f32 %v143, %v943
    %945 = vdwg.mxu0
    %946 = vmatprep.subr.bf16.mxu0 0
    %947 = vmatpush1.bf16.msra.mxu0 0
    %948 = vmatprep.subr.bf16.mxu0 0
    %949 = vmatpush1.bf16.msra.mxu0 0
    %950 = vmatprep.subr.bf16.mxu0 0
    %951 = vmatpush1.bf16.msra.mxu0 0
    %952 = vmatprep.subr.bf16.mxu0 0
    %953 = vmatpush1.bf16.msra.mxu0 0
    %954 = vmatprep.subr.bf16.mxu0 0
    %955 = vmatpush1.bf16.msra.mxu0 0
    %956 = vmatprep.subr.bf16.mxu0 %v500
    %957 = vmatpush1.bf16.msra.mxu0 %v497
    %958 = vmatprep.subr.bf16.mxu0 %v385
    %959 = vmatpush1.bf16.msra.mxu0 %v384
    %960 = vmatprep.subr.bf16.mxu0 %v373
    %961 = vmatpush1.bf16.msra.mxu0 %v372
    %962 = vmatprep.subr.bf16.mxu0 0
    %963 = vmatpush2.bf16.msra.mxu0 0
    %964 = vmatprep.subr.bf16.mxu0 0
    %965 = vmatpush2.bf16.msra.mxu0 0
    %966 = vmatprep.subr.bf16.mxu0 0
    %967 = vmatpush2.bf16.msra.mxu0 0
    %968 = vmatprep.subr.bf16.mxu0 0
    %969 = vmatpush2.bf16.msra.mxu0 0
    %970 = vmatprep.subr.bf16.mxu0 0
    %971 = vmatpush2.bf16.msra.mxu0 0
    %972 = vmatprep.subr.bf16.mxu0 0
    %973 = vmatpush2.bf16.msra.mxu0 0
    %974 = vmatprep.subr.bf16.mxu0 0
    %975 = vmatpush2.bf16.msra.mxu0 0
    %976 = vmatprep.subr.bf16.mxu0 0
    %977 = vmatpush2.bf16.msra.mxu0 0
    %978 = vmatprep.mubr.bf16.mxu0 0
    %979 = vmatmul.mubr.bf16.gmra.mxu0 %v430
    %v980 = vpop.f32.mrf.mxu0
    %v981 = vadd.f32 %v147, %v980
    %v982 = vpop.f32.mrf.mxu0
    %v983 = vadd.f32 %v151, %v982
    %v984 = vpop.f32.mrf.mxu0
    %v985 = vadd.f32 %v147, %v984
    %v986 = vpop.f32.mrf.mxu0
    %v987 = vadd.f32 %v151, %v986
    %988 = vmatprep.mubr.bf16.mxu0 0
    %989 = vmatmul.mubr.bf16.gmra.mxu0 %v433
    %v990 = vpop.f32.mrf.mxu0
    %v991 = vadd.f32 %v147, %v990
    %v992 = vpop.f32.mrf.mxu0
    %v993 = vadd.f32 %v151, %v992
    %v994 = vpop.f32.mrf.mxu0
    %v995 = vadd.f32 %v147, %v994
    %v996 = vpop.f32.mrf.mxu0
    %v997 = vadd.f32 %v151, %v996
    %998 = vmatprep.mubr.bf16.mxu0 0
    %999 = vmatmul.mubr.bf16.gmra.mxu0 %v436
    %v1000 = vpop.f32.mrf.mxu0
    %v1001 = vadd.f32 %v147, %v1000
    %v1002 = vpop.f32.mrf.mxu0
    %v1003 = vadd.f32 %v151, %v1002
    %v1004 = vpop.f32.mrf.mxu0
    %v1005 = vadd.f32 %v147, %v1004
    %v1006 = vpop.f32.mrf.mxu0
    %v1007 = vadd.f32 %v151, %v1006
    %1008 = vmatprep.mubr.bf16.mxu0 0
    %1009 = vmatmul.mubr.bf16.gmra.mxu0 %v439
    %v1010 = vpop.f32.mrf.mxu0
    %v1011 = vadd.f32 %v147, %v1010
    %v1012 = vpop.f32.mrf.mxu0
    %v1013 = vadd.f32 %v151, %v1012
    %v1014 = vpop.f32.mrf.mxu0
    %v1015 = vadd.f32 %v147, %v1014
    %v1016 = vpop.f32.mrf.mxu0
    %v1017 = vadd.f32 %v151, %v1016
    %1018 = vmatprep.mubr.bf16.mxu0 0
    %1019 = vmatmul.mubr.bf16.gmra.mxu0 %v442
    %v1020 = vpop.f32.mrf.mxu0
    %v1021 = vadd.f32 %v147, %v1020
    %v1022 = vpop.f32.mrf.mxu0
    %v1023 = vadd.f32 %v151, %v1022
    %v1024 = vpop.f32.mrf.mxu0
    %v1025 = vadd.f32 %v147, %v1024
    %v1026 = vpop.f32.mrf.mxu0
    %v1027 = vadd.f32 %v151, %v1026
    %1028 = vmatprep.mubr.bf16.mxu0 0
    %1029 = vmatmul.mubr.bf16.gmra.mxu0 %v445
    %v1030 = vpop.f32.mrf.mxu0
    %v1031 = vadd.f32 %v147, %v1030
    %v1032 = vpop.f32.mrf.mxu0
    %v1033 = vadd.f32 %v151, %v1032
    %v1034 = vpop.f32.mrf.mxu0
    %v1035 = vadd.f32 %v147, %v1034
    %v1036 = vpop.f32.mrf.mxu0
    %v1037 = vadd.f32 %v151, %v1036
    %1038 = vmatprep.mubr.bf16.mxu0 0
    %1039 = vmatmul.mubr.bf16.gmra.mxu0 %v448
    %v1040 = vpop.f32.mrf.mxu0
    %v1041 = vadd.f32 %v147, %v1040
    %v1042 = vpop.f32.mrf.mxu0
    %v1043 = vadd.f32 %v151, %v1042
    %v1044 = vpop.f32.mrf.mxu0
    %v1045 = vadd.f32 %v147, %v1044
    %v1046 = vpop.f32.mrf.mxu0
    %v1047 = vadd.f32 %v151, %v1046
    %1048 = vmatprep.mubr.bf16.mxu0 0
    %1049 = vmatmul.mubr.bf16.gmra.mxu0 %v451
    %v1050 = vpop.f32.mrf.mxu0
    %v1051 = vadd.f32 %v147, %v1050
    %v1052 = vpop.f32.mrf.mxu0
    %v1053 = vadd.f32 %v151, %v1052
    %v1054 = vpop.f32.mrf.mxu0
    %v1055 = vadd.f32 %v147, %v1054
    %v1056 = vpop.f32.mrf.mxu0
    %v1057 = vadd.f32 %v151, %v1056
    %1058 = vmatprep.mubr.bf16.mxu0 0
    %1059 = vmatmul.mubr.bf16.gmra.mxu0 %v454
    %v1060 = vpop.f32.mrf.mxu0
    %v1061 = vadd.f32 %v147, %v1060
    %v1062 = vpop.f32.mrf.mxu0
    %v1063 = vadd.f32 %v151, %v1062
    %v1064 = vpop.f32.mrf.mxu0
    %v1065 = vadd.f32 %v147, %v1064
    %v1066 = vpop.f32.mrf.mxu0
    %v1067 = vadd.f32 %v151, %v1066
    %1068 = vmatprep.mubr.bf16.mxu0 0
    %1069 = vmatmul.mubr.bf16.gmra.mxu0 %v457
    %v1070 = vpop.f32.mrf.mxu0
    %v1071 = vadd.f32 %v147, %v1070
    %v1072 = vpop.f32.mrf.mxu0
    %v1073 = vadd.f32 %v151, %v1072
    %v1074 = vpop.f32.mrf.mxu0
    %v1075 = vadd.f32 %v147, %v1074
    %v1076 = vpop.f32.mrf.mxu0
    %v1077 = vadd.f32 %v151, %v1076
    %1078 = vmatprep.mubr.bf16.mxu0 0
    %1079 = vmatmul.mubr.bf16.gmra.mxu0 %v460
    %v1080 = vpop.f32.mrf.mxu0
    %v1081 = vadd.f32 %v147, %v1080
    %v1082 = vpop.f32.mrf.mxu0
    %v1083 = vadd.f32 %v151, %v1082
    %v1084 = vpop.f32.mrf.mxu0
    %v1085 = vadd.f32 %v147, %v1084
    %v1086 = vpop.f32.mrf.mxu0
    %v1087 = vadd.f32 %v151, %v1086
    %1088 = vmatprep.mubr.bf16.mxu0 0
    %1089 = vmatmul.mubr.bf16.gmra.mxu0 %v463
    %v1090 = vpop.f32.mrf.mxu0
    %v1091 = vadd.f32 %v147, %v1090
    %v1092 = vpop.f32.mrf.mxu0
    %v1093 = vadd.f32 %v151, %v1092
    %v1094 = vpop.f32.mrf.mxu0
    %v1095 = vadd.f32 %v147, %v1094
    %v1096 = vpop.f32.mrf.mxu0
    %v1097 = vadd.f32 %v151, %v1096
    %1098 = vmatprep.mubr.bf16.mxu0 0
    %1099 = vmatmul.mubr.bf16.gmra.mxu0 %v466
    %v1100 = vpop.f32.mrf.mxu0
    %v1101 = vadd.f32 %v147, %v1100
    %v1102 = vpop.f32.mrf.mxu0
    %v1103 = vadd.f32 %v151, %v1102
    %v1104 = vpop.f32.mrf.mxu0
    %v1105 = vadd.f32 %v147, %v1104
    %v1106 = vpop.f32.mrf.mxu0
    %v1107 = vadd.f32 %v151, %v1106
    %1108 = vmatprep.mubr.bf16.mxu0 0
    %1109 = vmatmul.mubr.bf16.gmra.mxu0 %v469
    %v1110 = vpop.f32.mrf.mxu0
    %v1111 = vadd.f32 %v147, %v1110
    %v1112 = vpop.f32.mrf.mxu0
    %v1113 = vadd.f32 %v151, %v1112
    %v1114 = vpop.f32.mrf.mxu0
    %v1115 = vadd.f32 %v147, %v1114
    %v1116 = vpop.f32.mrf.mxu0
    %v1117 = vadd.f32 %v151, %v1116
    %1118 = vmatprep.mubr.bf16.mxu0 0
    %1119 = vmatmul.mubr.bf16.gmra.mxu0 %v472
    %v1120 = vpop.f32.mrf.mxu0
    %v1121 = vadd.f32 %v147, %v1120
    %v1122 = vpop.f32.mrf.mxu0
    %v1123 = vadd.f32 %v151, %v1122
    %v1124 = vpop.f32.mrf.mxu0
    %v1125 = vadd.f32 %v147, %v1124
    %v1126 = vpop.f32.mrf.mxu0
    %v1127 = vadd.f32 %v151, %v1126
    %1128 = vmatprep.mubr.bf16.mxu0 0
    %1129 = vmatmul.mubr.bf16.gmra.mxu0 %v475
    %v1130 = vpop.f32.mrf.mxu0
    %v1131 = vadd.f32 %v147, %v1130
    %v1132 = vpop.f32.mrf.mxu0
    %v1133 = vadd.f32 %v151, %v1132
    %v1134 = vpop.f32.mrf.mxu0
    %v1135 = vadd.f32 %v147, %v1134
    %v1136 = vpop.f32.mrf.mxu0
    %v1137 = vadd.f32 %v151, %v1136
    %1138 = vmatprep.mubr.bf16.mxu0 0
    %1139 = vmatmul.mubr.bf16.gmra.mxu0 %v478
    %v1140 = vpop.f32.mrf.mxu0
    %v1141 = vadd.f32 %v147, %v1140
    %v1142 = vpop.f32.mrf.mxu0
    %v1143 = vadd.f32 %v151, %v1142
    %v1144 = vpop.f32.mrf.mxu0
    %v1145 = vadd.f32 %v147, %v1144
    %v1146 = vpop.f32.mrf.mxu0
    %v1147 = vadd.f32 %v151, %v1146
    %1148 = vmatprep.mubr.bf16.mxu0 0
    %1149 = vmatmul.mubr.bf16.gmra.mxu0 %v481
    %v1150 = vpop.f32.mrf.mxu0
    %v1151 = vadd.f32 %v147, %v1150
    %v1152 = vpop.f32.mrf.mxu0
    %v1153 = vadd.f32 %v151, %v1152
    %v1154 = vpop.f32.mrf.mxu0
    %v1155 = vadd.f32 %v147, %v1154
    %v1156 = vpop.f32.mrf.mxu0
    %v1157 = vadd.f32 %v151, %v1156
    %1158 = vdwg.mxu0
    %1159 = vmatprep.subr.bf16.mxu0 0
    %1160 = vmatpush1.bf16.msra.mxu0 0
    %1161 = vmatprep.subr.bf16.mxu0 0
    %1162 = vmatpush1.bf16.msra.mxu0 0
    %1163 = vmatprep.subr.bf16.mxu0 0
    %1164 = vmatpush1.bf16.msra.mxu0 0
    %1165 = vmatprep.subr.bf16.mxu0 0
    %1166 = vmatpush1.bf16.msra.mxu0 0
    %1167 = vmatprep.subr.bf16.mxu0 0
    %1168 = vmatpush1.bf16.msra.mxu0 0
    %1169 = vmatprep.subr.bf16.mxu0 %v506
    %1170 = vmatpush1.bf16.msra.mxu0 %v503
    %1171 = vmatprep.subr.bf16.mxu0 %v387
    %1172 = vmatpush1.bf16.msra.mxu0 %v386
    %1173 = vmatprep.subr.bf16.mxu0 %v375
    %1174 = vmatpush1.bf16.msra.mxu0 %v374
    %1175 = vmatprep.subr.bf16.mxu0 0
    %1176 = vmatpush2.bf16.msra.mxu0 0
    %1177 = vmatprep.subr.bf16.mxu0 0
    %1178 = vmatpush2.bf16.msra.mxu0 0
    %1179 = vmatprep.subr.bf16.mxu0 0
    %1180 = vmatpush2.bf16.msra.mxu0 0
    %1181 = vmatprep.subr.bf16.mxu0 0
    %1182 = vmatpush2.bf16.msra.mxu0 0
    %1183 = vmatprep.subr.bf16.mxu0 0
    %1184 = vmatpush2.bf16.msra.mxu0 0
    %1185 = vmatprep.subr.bf16.mxu0 0
    %1186 = vmatpush2.bf16.msra.mxu0 0
    %1187 = vmatprep.subr.bf16.mxu0 0
    %1188 = vmatpush2.bf16.msra.mxu0 0
    %1189 = vmatprep.subr.bf16.mxu0 0
    %1190 = vmatpush2.bf16.msra.mxu0 0
    %1191 = vmatprep.mubr.bf16.mxu0 0
    %1192 = vmatmul.mubr.bf16.gmra.mxu0 %v430
    %v1193 = vpop.f32.mrf.mxu0
    %v1194 = vadd.f32 %v155, %v1193
    %v1195 = vpop.f32.mrf.mxu0
    %v1196 = vadd.f32 %v159, %v1195
    %v1197 = vpop.f32.mrf.mxu0
    %v1198 = vadd.f32 %v155, %v1197
    %v1199 = vpop.f32.mrf.mxu0
    %v1200 = vadd.f32 %v159, %v1199
    %1201 = vmatprep.mubr.bf16.mxu0 0
    %1202 = vmatmul.mubr.bf16.gmra.mxu0 %v433
    %v1203 = vpop.f32.mrf.mxu0
    %v1204 = vadd.f32 %v155, %v1203
    %v1205 = vpop.f32.mrf.mxu0
    %v1206 = vadd.f32 %v159, %v1205
    %v1207 = vpop.f32.mrf.mxu0
    %v1208 = vadd.f32 %v155, %v1207
    %v1209 = vpop.f32.mrf.mxu0
    %v1210 = vadd.f32 %v159, %v1209
    %1211 = vmatprep.mubr.bf16.mxu0 0
    %1212 = vmatmul.mubr.bf16.gmra.mxu0 %v436
    %v1213 = vpop.f32.mrf.mxu0
    %v1214 = vadd.f32 %v155, %v1213
    %v1215 = vpop.f32.mrf.mxu0
    %v1216 = vadd.f32 %v159, %v1215
    %v1217 = vpop.f32.mrf.mxu0
    %v1218 = vadd.f32 %v155, %v1217
    %v1219 = vpop.f32.mrf.mxu0
    %v1220 = vadd.f32 %v159, %v1219
    %1221 = vmatprep.mubr.bf16.mxu0 0
    %1222 = vmatmul.mubr.bf16.gmra.mxu0 %v439
    %v1223 = vpop.f32.mrf.mxu0
    %v1224 = vadd.f32 %v155, %v1223
    %v1225 = vpop.f32.mrf.mxu0
    %v1226 = vadd.f32 %v159, %v1225
    %v1227 = vpop.f32.mrf.mxu0
    %v1228 = vadd.f32 %v155, %v1227
    %v1229 = vpop.f32.mrf.mxu0
    %v1230 = vadd.f32 %v159, %v1229
    %1231 = vmatprep.mubr.bf16.mxu0 0
    %1232 = vmatmul.mubr.bf16.gmra.mxu0 %v442
    %v1233 = vpop.f32.mrf.mxu0
    %v1234 = vadd.f32 %v155, %v1233
    %v1235 = vpop.f32.mrf.mxu0
    %v1236 = vadd.f32 %v159, %v1235
    %v1237 = vpop.f32.mrf.mxu0
    %v1238 = vadd.f32 %v155, %v1237
    %v1239 = vpop.f32.mrf.mxu0
    %v1240 = vadd.f32 %v159, %v1239
    %1241 = vmatprep.mubr.bf16.mxu0 0
    %1242 = vmatmul.mubr.bf16.gmra.mxu0 %v445
    %v1243 = vpop.f32.mrf.mxu0
    %v1244 = vadd.f32 %v155, %v1243
    %v1245 = vpop.f32.mrf.mxu0
    %v1246 = vadd.f32 %v159, %v1245
    %v1247 = vpop.f32.mrf.mxu0
    %v1248 = vadd.f32 %v155, %v1247
    %v1249 = vpop.f32.mrf.mxu0
    %v1250 = vadd.f32 %v159, %v1249
    %1251 = vmatprep.mubr.bf16.mxu0 0
    %1252 = vmatmul.mubr.bf16.gmra.mxu0 %v448
    %v1253 = vpop.f32.mrf.mxu0
    %v1254 = vadd.f32 %v155, %v1253
    %v1255 = vpop.f32.mrf.mxu0
    %v1256 = vadd.f32 %v159, %v1255
    %v1257 = vpop.f32.mrf.mxu0
    %v1258 = vadd.f32 %v155, %v1257
    %v1259 = vpop.f32.mrf.mxu0
    %v1260 = vadd.f32 %v159, %v1259
    %1261 = vmatprep.mubr.bf16.mxu0 0
    %1262 = vmatmul.mubr.bf16.gmra.mxu0 %v451
    %v1263 = vpop.f32.mrf.mxu0
    %v1264 = vadd.f32 %v155, %v1263
    %v1265 = vpop.f32.mrf.mxu0
    %v1266 = vadd.f32 %v159, %v1265
    %v1267 = vpop.f32.mrf.mxu0
    %v1268 = vadd.f32 %v155, %v1267
    %v1269 = vpop.f32.mrf.mxu0
    %v1270 = vadd.f32 %v159, %v1269
    %1271 = vmatprep.mubr.bf16.mxu0 0
    %1272 = vmatmul.mubr.bf16.gmra.mxu0 %v454
    %v1273 = vpop.f32.mrf.mxu0
    %v1274 = vadd.f32 %v155, %v1273
    %v1275 = vpop.f32.mrf.mxu0
    %v1276 = vadd.f32 %v159, %v1275
    %v1277 = vpop.f32.mrf.mxu0
    %v1278 = vadd.f32 %v155, %v1277
    %v1279 = vpop.f32.mrf.mxu0
    %v1280 = vadd.f32 %v159, %v1279
    %1281 = vmatprep.mubr.bf16.mxu0 0
    %1282 = vmatmul.mubr.bf16.gmra.mxu0 %v457
    %v1283 = vpop.f32.mrf.mxu0
    %v1284 = vadd.f32 %v155, %v1283
    %v1285 = vpop.f32.mrf.mxu0
    %v1286 = vadd.f32 %v159, %v1285
    %v1287 = vpop.f32.mrf.mxu0
    %v1288 = vadd.f32 %v155, %v1287
    %v1289 = vpop.f32.mrf.mxu0
    %v1290 = vadd.f32 %v159, %v1289
    %1291 = vmatprep.mubr.bf16.mxu0 0
    %1292 = vmatmul.mubr.bf16.gmra.mxu0 %v460
    %v1293 = vpop.f32.mrf.mxu0
    %v1294 = vadd.f32 %v155, %v1293
    %v1295 = vpop.f32.mrf.mxu0
    %v1296 = vadd.f32 %v159, %v1295
    %v1297 = vpop.f32.mrf.mxu0
    %v1298 = vadd.f32 %v155, %v1297
    %v1299 = vpop.f32.mrf.mxu0
    %v1300 = vadd.f32 %v159, %v1299
    %1301 = vmatprep.mubr.bf16.mxu0 0
    %1302 = vmatmul.mubr.bf16.gmra.mxu0 %v463
    %v1303 = vpop.f32.mrf.mxu0
    %v1304 = vadd.f32 %v155, %v1303
    %v1305 = vpop.f32.mrf.mxu0
    %v1306 = vadd.f32 %v159, %v1305
    %v1307 = vpop.f32.mrf.mxu0
    %v1308 = vadd.f32 %v155, %v1307
    %v1309 = vpop.f32.mrf.mxu0
    %v1310 = vadd.f32 %v159, %v1309
    %1311 = vmatprep.mubr.bf16.mxu0 0
    %1312 = vmatmul.mubr.bf16.gmra.mxu0 %v466
    %v1313 = vpop.f32.mrf.mxu0
    %v1314 = vadd.f32 %v155, %v1313
    %v1315 = vpop.f32.mrf.mxu0
    %v1316 = vadd.f32 %v159, %v1315
    %v1317 = vpop.f32.mrf.mxu0
    %v1318 = vadd.f32 %v155, %v1317
    %v1319 = vpop.f32.mrf.mxu0
    %v1320 = vadd.f32 %v159, %v1319
    %1321 = vmatprep.mubr.bf16.mxu0 0
    %1322 = vmatmul.mubr.bf16.gmra.mxu0 %v469
    %v1323 = vpop.f32.mrf.mxu0
    %v1324 = vadd.f32 %v155, %v1323
    %v1325 = vpop.f32.mrf.mxu0
    %v1326 = vadd.f32 %v159, %v1325
    %v1327 = vpop.f32.mrf.mxu0
    %v1328 = vadd.f32 %v155, %v1327
    %v1329 = vpop.f32.mrf.mxu0
    %v1330 = vadd.f32 %v159, %v1329
    %1331 = vmatprep.mubr.bf16.mxu0 0
    %1332 = vmatmul.mubr.bf16.gmra.mxu0 %v472
    %v1333 = vpop.f32.mrf.mxu0
    %v1334 = vadd.f32 %v155, %v1333
    %v1335 = vpop.f32.mrf.mxu0
    %v1336 = vadd.f32 %v159, %v1335
    %v1337 = vpop.f32.mrf.mxu0
    %v1338 = vadd.f32 %v155, %v1337
    %v1339 = vpop.f32.mrf.mxu0
    %v1340 = vadd.f32 %v159, %v1339
    %1341 = vmatprep.mubr.bf16.mxu0 0
    %1342 = vmatmul.mubr.bf16.gmra.mxu0 %v475
    %v1343 = vpop.f32.mrf.mxu0
    %v1344 = vadd.f32 %v155, %v1343
    %v1345 = vpop.f32.mrf.mxu0
    %v1346 = vadd.f32 %v159, %v1345
    %v1347 = vpop.f32.mrf.mxu0
    %v1348 = vadd.f32 %v155, %v1347
    %v1349 = vpop.f32.mrf.mxu0
    %v1350 = vadd.f32 %v159, %v1349
    %1351 = vmatprep.mubr.bf16.mxu0 0
    %1352 = vmatmul.mubr.bf16.gmra.mxu0 %v478
    %v1353 = vpop.f32.mrf.mxu0
    %v1354 = vadd.f32 %v155, %v1353
    %v1355 = vpop.f32.mrf.mxu0
    %v1356 = vadd.f32 %v159, %v1355
    %v1357 = vpop.f32.mrf.mxu0
    %v1358 = vadd.f32 %v155, %v1357
    %v1359 = vpop.f32.mrf.mxu0
    %v1360 = vadd.f32 %v159, %v1359
    %1361 = vmatprep.mubr.bf16.mxu0 0
    %1362 = vmatmul.mubr.bf16.gmra.mxu0 %v481
    %v1363 = vpop.f32.mrf.mxu0
    %v1364 = vadd.f32 %v155, %v1363
    %v1365 = vpop.f32.mrf.mxu0
    %v1366 = vadd.f32 %v159, %v1365
    %v1367 = vpop.f32.mrf.mxu0
    %v1368 = vadd.f32 %v155, %v1367
    %v1369 = vpop.f32.mrf.mxu0
    %v1370 = vadd.f32 %v159, %v1369
    %1371 = vdwg.mxu0
    %1372 = vmatprep.subr.bf16.mxu0 0
    %1373 = vmatpush1.bf16.msra.mxu0 0
    %1374 = vmatprep.subr.bf16.mxu0 0
    %1375 = vmatpush1.bf16.msra.mxu0 0
    %1376 = vmatprep.subr.bf16.mxu0 0
    %1377 = vmatpush1.bf16.msra.mxu0 0
    %1378 = vmatprep.subr.bf16.mxu0 0
    %1379 = vmatpush1.bf16.msra.mxu0 0
    %1380 = vmatprep.subr.bf16.mxu0 0
    %1381 = vmatpush1.bf16.msra.mxu0 0
    %1382 = vmatprep.subr.bf16.mxu0 %v512
    %1383 = vmatpush1.bf16.msra.mxu0 %v509
    %1384 = vmatprep.subr.bf16.mxu0 %v389
    %1385 = vmatpush1.bf16.msra.mxu0 %v388
    %1386 = vmatprep.subr.bf16.mxu0 %v377
    %1387 = vmatpush1.bf16.msra.mxu0 %v376
    %1388 = vmatprep.subr.bf16.mxu0 0
    %1389 = vmatpush2.bf16.msra.mxu0 0
    %1390 = vmatprep.subr.bf16.mxu0 0
    %1391 = vmatpush2.bf16.msra.mxu0 0
    %1392 = vmatprep.subr.bf16.mxu0 0
    %1393 = vmatpush2.bf16.msra.mxu0 0
    %1394 = vmatprep.subr.bf16.mxu0 0
    %1395 = vmatpush2.bf16.msra.mxu0 0
    %1396 = vmatprep.subr.bf16.mxu0 0
    %1397 = vmatpush2.bf16.msra.mxu0 0
    %1398 = vmatprep.subr.bf16.mxu0 0
    %1399 = vmatpush2.bf16.msra.mxu0 0
    %1400 = vmatprep.subr.bf16.mxu0 0
    %1401 = vmatpush2.bf16.msra.mxu0 0
    %1402 = vmatprep.subr.bf16.mxu0 0
    %1403 = vmatpush2.bf16.msra.mxu0 0
    %1404 = vmatprep.mubr.bf16.mxu0 0
    %1405 = vmatmul.mubr.bf16.gmra.mxu0 %v430
    %v1406 = vpop.f32.mrf.mxu0
    %v1407 = vadd.f32 %v163, %v1406
    %v1408 = vpop.f32.mrf.mxu0
    %v1409 = vadd.f32 %v167, %v1408
    %v1410 = vpop.f32.mrf.mxu0
    %v1411 = vadd.f32 %v163, %v1410
    %v1412 = vpop.f32.mrf.mxu0
    %v1413 = vadd.f32 %v167, %v1412
    %1414 = vmatprep.mubr.bf16.mxu0 0
    %1415 = vmatmul.mubr.bf16.gmra.mxu0 %v433
    %v1416 = vpop.f32.mrf.mxu0
    %v1417 = vadd.f32 %v163, %v1416
    %v1418 = vpop.f32.mrf.mxu0
    %v1419 = vadd.f32 %v167, %v1418
    %v1420 = vpop.f32.mrf.mxu0
    %v1421 = vadd.f32 %v163, %v1420
    %v1422 = vpop.f32.mrf.mxu0
    %v1423 = vadd.f32 %v167, %v1422
    %1424 = vmatprep.mubr.bf16.mxu0 0
    %1425 = vmatmul.mubr.bf16.gmra.mxu0 %v436
    %v1426 = vpop.f32.mrf.mxu0
    %v1427 = vadd.f32 %v163, %v1426
    %v1428 = vpop.f32.mrf.mxu0
    %v1429 = vadd.f32 %v167, %v1428
    %v1430 = vpop.f32.mrf.mxu0
    %v1431 = vadd.f32 %v163, %v1430
    %v1432 = vpop.f32.mrf.mxu0
    %v1433 = vadd.f32 %v167, %v1432
    %1434 = vmatprep.mubr.bf16.mxu0 0
    %1435 = vmatmul.mubr.bf16.gmra.mxu0 %v439
    %v1436 = vpop.f32.mrf.mxu0
    %v1437 = vadd.f32 %v163, %v1436
    %v1438 = vpop.f32.mrf.mxu0
    %v1439 = vadd.f32 %v167, %v1438
    %v1440 = vpop.f32.mrf.mxu0
    %v1441 = vadd.f32 %v163, %v1440
    %v1442 = vpop.f32.mrf.mxu0
    %v1443 = vadd.f32 %v167, %v1442
    %1444 = vmatprep.mubr.bf16.mxu0 0
    %1445 = vmatmul.mubr.bf16.gmra.mxu0 %v442
    %v1446 = vpop.f32.mrf.mxu0
    %v1447 = vadd.f32 %v163, %v1446
    %v1448 = vpop.f32.mrf.mxu0
    %v1449 = vadd.f32 %v167, %v1448
    %v1450 = vpop.f32.mrf.mxu0
    %v1451 = vadd.f32 %v163, %v1450
    %v1452 = vpop.f32.mrf.mxu0
    %v1453 = vadd.f32 %v167, %v1452
    %1454 = vmatprep.mubr.bf16.mxu0 0
    %1455 = vmatmul.mubr.bf16.gmra.mxu0 %v445
    %v1456 = vpop.f32.mrf.mxu0
    %v1457 = vadd.f32 %v163, %v1456
    %v1458 = vpop.f32.mrf.mxu0
    %v1459 = vadd.f32 %v167, %v1458
    %v1460 = vpop.f32.mrf.mxu0
    %v1461 = vadd.f32 %v163, %v1460
    %v1462 = vpop.f32.mrf.mxu0
    %v1463 = vadd.f32 %v167, %v1462
    %1464 = vmatprep.mubr.bf16.mxu0 0
    %1465 = vmatmul.mubr.bf16.gmra.mxu0 %v448
    %v1466 = vpop.f32.mrf.mxu0
    %v1467 = vadd.f32 %v163, %v1466
    %v1468 = vpop.f32.mrf.mxu0
    %v1469 = vadd.f32 %v167, %v1468
    %v1470 = vpop.f32.mrf.mxu0
    %v1471 = vadd.f32 %v163, %v1470
    %v1472 = vpop.f32.mrf.mxu0
    %v1473 = vadd.f32 %v167, %v1472
    %1474 = vmatprep.mubr.bf16.mxu0 0
    %1475 = vmatmul.mubr.bf16.gmra.mxu0 %v451
    %v1476 = vpop.f32.mrf.mxu0
    %v1477 = vadd.f32 %v163, %v1476
    %v1478 = vpop.f32.mrf.mxu0
    %v1479 = vadd.f32 %v167, %v1478
    %v1480 = vpop.f32.mrf.mxu0
    %v1481 = vadd.f32 %v163, %v1480
    %v1482 = vpop.f32.mrf.mxu0
    %v1483 = vadd.f32 %v167, %v1482
    %1484 = vmatprep.mubr.bf16.mxu0 0
    %1485 = vmatmul.mubr.bf16.gmra.mxu0 %v454
    %v1486 = vpop.f32.mrf.mxu0
    %v1487 = vadd.f32 %v163, %v1486
    %v1488 = vpop.f32.mrf.mxu0
    %v1489 = vadd.f32 %v167, %v1488
    %v1490 = vpop.f32.mrf.mxu0
    %v1491 = vadd.f32 %v163, %v1490
    %v1492 = vpop.f32.mrf.mxu0
    %v1493 = vadd.f32 %v167, %v1492
    %1494 = vmatprep.mubr.bf16.mxu0 0
    %1495 = vmatmul.mubr.bf16.gmra.mxu0 %v457
    %v1496 = vpop.f32.mrf.mxu0
    %v1497 = vadd.f32 %v163, %v1496
    %v1498 = vpop.f32.mrf.mxu0
    %v1499 = vadd.f32 %v167, %v1498
    %v1500 = vpop.f32.mrf.mxu0
    %v1501 = vadd.f32 %v163, %v1500
    %v1502 = vpop.f32.mrf.mxu0
    %v1503 = vadd.f32 %v167, %v1502
    %1504 = vmatprep.mubr.bf16.mxu0 0
    %1505 = vmatmul.mubr.bf16.gmra.mxu0 %v460
    %v1506 = vpop.f32.mrf.mxu0
    %v1507 = vadd.f32 %v163, %v1506
    %v1508 = vpop.f32.mrf.mxu0
    %v1509 = vadd.f32 %v167, %v1508
    %v1510 = vpop.f32.mrf.mxu0
    %v1511 = vadd.f32 %v163, %v1510
    %v1512 = vpop.f32.mrf.mxu0
    %v1513 = vadd.f32 %v167, %v1512
    %1514 = vmatprep.mubr.bf16.mxu0 0
    %1515 = vmatmul.mubr.bf16.gmra.mxu0 %v463
    %v1516 = vpop.f32.mrf.mxu0
    %v1517 = vadd.f32 %v163, %v1516
    %v1518 = vpop.f32.mrf.mxu0
    %v1519 = vadd.f32 %v167, %v1518
    %v1520 = vpop.f32.mrf.mxu0
    %v1521 = vadd.f32 %v163, %v1520
    %v1522 = vpop.f32.mrf.mxu0
    %v1523 = vadd.f32 %v167, %v1522
    %1524 = vmatprep.mubr.bf16.mxu0 0
    %1525 = vmatmul.mubr.bf16.gmra.mxu0 %v466
    %v1526 = vpop.f32.mrf.mxu0
    %v1527 = vadd.f32 %v163, %v1526
    %v1528 = vpop.f32.mrf.mxu0
    %v1529 = vadd.f32 %v167, %v1528
    %v1530 = vpop.f32.mrf.mxu0
    %v1531 = vadd.f32 %v163, %v1530
    %v1532 = vpop.f32.mrf.mxu0
    %v1533 = vadd.f32 %v167, %v1532
    %1534 = vmatprep.mubr.bf16.mxu0 0
    %1535 = vmatmul.mubr.bf16.gmra.mxu0 %v469
    %v1536 = vpop.f32.mrf.mxu0
    %v1537 = vadd.f32 %v163, %v1536
    %v1538 = vpop.f32.mrf.mxu0
    %v1539 = vadd.f32 %v167, %v1538
    %v1540 = vpop.f32.mrf.mxu0
    %v1541 = vadd.f32 %v163, %v1540
    %v1542 = vpop.f32.mrf.mxu0
    %v1543 = vadd.f32 %v167, %v1542
    %1544 = vmatprep.mubr.bf16.mxu0 0
    %1545 = vmatmul.mubr.bf16.gmra.mxu0 %v472
    %v1546 = vpop.f32.mrf.mxu0
    %v1547 = vadd.f32 %v163, %v1546
    %v1548 = vpop.f32.mrf.mxu0
    %v1549 = vadd.f32 %v167, %v1548
    %v1550 = vpop.f32.mrf.mxu0
    %v1551 = vadd.f32 %v163, %v1550
    %v1552 = vpop.f32.mrf.mxu0
    %v1553 = vadd.f32 %v167, %v1552
    %1554 = vmatprep.mubr.bf16.mxu0 0
    %1555 = vmatmul.mubr.bf16.gmra.mxu0 %v475
    %v1556 = vpop.f32.mrf.mxu0
    %v1557 = vadd.f32 %v163, %v1556
    %v1558 = vpop.f32.mrf.mxu0
    %v1559 = vadd.f32 %v167, %v1558
    %v1560 = vpop.f32.mrf.mxu0
    %v1561 = vadd.f32 %v163, %v1560
    %v1562 = vpop.f32.mrf.mxu0
    %v1563 = vadd.f32 %v167, %v1562
    %1564 = vmatprep.mubr.bf16.mxu0 0
    %1565 = vmatmul.mubr.bf16.gmra.mxu0 %v478
    %v1566 = vpop.f32.mrf.mxu0
    %v1567 = vadd.f32 %v163, %v1566
    %v1568 = vpop.f32.mrf.mxu0
    %v1569 = vadd.f32 %v167, %v1568
    %v1570 = vpop.f32.mrf.mxu0
    %v1571 = vadd.f32 %v163, %v1570
    %v1572 = vpop.f32.mrf.mxu0
    %v1573 = vadd.f32 %v167, %v1572
    %1574 = vmatprep.mubr.bf16.mxu0 0
    %1575 = vmatmul.mubr.bf16.gmra.mxu0 %v481
    %v1576 = vpop.f32.mrf.mxu0
    %v1577 = vadd.f32 %v163, %v1576
    %v1578 = vpop.f32.mrf.mxu0
    %v1579 = vadd.f32 %v167, %v1578
    %v1580 = vpop.f32.mrf.mxu0
    %v1581 = vadd.f32 %v163, %v1580
    %v1582 = vpop.f32.mrf.mxu0
    %v1583 = vadd.f32 %v167, %v1582
    %1584 = vdwg.mxu0
    %1585 = vmatprep.subr.bf16.mxu0 0
    %1586 = vmatpush1.bf16.msra.mxu0 0
    %1587 = vmatprep.subr.bf16.mxu0 0
    %1588 = vmatpush1.bf16.msra.mxu0 0
    %1589 = vmatprep.subr.bf16.mxu0 0
    %1590 = vmatpush1.bf16.msra.mxu0 0
    %1591 = vmatprep.subr.bf16.mxu0 0
    %1592 = vmatpush1.bf16.msra.mxu0 0
    %1593 = vmatprep.subr.bf16.mxu0 0
    %1594 = vmatpush1.bf16.msra.mxu0 0
    %1595 = vmatprep.subr.bf16.mxu0 %v518
    %1596 = vmatpush1.bf16.msra.mxu0 %v515
    %1597 = vmatprep.subr.bf16.mxu0 %v391
    %1598 = vmatpush1.bf16.msra.mxu0 %v390
    %1599 = vmatprep.subr.bf16.mxu0 %v379
    %1600 = vmatpush1.bf16.msra.mxu0 %v378
    %1601 = vmatprep.subr.bf16.mxu0 0
    %1602 = vmatpush2.bf16.msra.mxu0 0
    %1603 = vmatprep.subr.bf16.mxu0 0
    %1604 = vmatpush2.bf16.msra.mxu0 0
    %1605 = vmatprep.subr.bf16.mxu0 0
    %1606 = vmatpush2.bf16.msra.mxu0 0
    %1607 = vmatprep.subr.bf16.mxu0 0
    %1608 = vmatpush2.bf16.msra.mxu0 0
    %1609 = vmatprep.subr.bf16.mxu0 0
    %1610 = vmatpush2.bf16.msra.mxu0 0
    %1611 = vmatprep.subr.bf16.mxu0 0
    %1612 = vmatpush2.bf16.msra.mxu0 0
    %1613 = vmatprep.subr.bf16.mxu0 0
    %1614 = vmatpush2.bf16.msra.mxu0 0
    %1615 = vmatprep.subr.bf16.mxu0 0
    %1616 = vmatpush2.bf16.msra.mxu0 0
    %1617 = vmatprep.mubr.bf16.mxu0 0
    %1618 = vmatmul.mubr.bf16.gmra.mxu0 %v430
    %v1619 = vpop.f32.mrf.mxu0
    %v1620 = vadd.f32 %v171, %v1619
    %v1621 = vpop.f32.mrf.mxu0
    %v1622 = vadd.f32 %v175, %v1621
    %v1623 = vpop.f32.mrf.mxu0
    %v1624 = vadd.f32 %v171, %v1623
    %v1625 = vpop.f32.mrf.mxu0
    %v1626 = vadd.f32 %v175, %v1625
    %1627 = vmatprep.mubr.bf16.mxu0 0
    %1628 = vmatmul.mubr.bf16.gmra.mxu0 %v433
    %v1629 = vpop.f32.mrf.mxu0
    %v1630 = vadd.f32 %v171, %v1629
    %v1631 = vpop.f32.mrf.mxu0
    %v1632 = vadd.f32 %v175, %v1631
    %v1633 = vpop.f32.mrf.mxu0
    %v1634 = vadd.f32 %v171, %v1633
    %v1635 = vpop.f32.mrf.mxu0
    %v1636 = vadd.f32 %v175, %v1635
    %1637 = vmatprep.mubr.bf16.mxu0 0
    %1638 = vmatmul.mubr.bf16.gmra.mxu0 %v436
    %v1639 = vpop.f32.mrf.mxu0
    %v1640 = vadd.f32 %v171, %v1639
    %v1641 = vpop.f32.mrf.mxu0
    %v1642 = vadd.f32 %v175, %v1641
    %v1643 = vpop.f32.mrf.mxu0
    %v1644 = vadd.f32 %v171, %v1643
    %v1645 = vpop.f32.mrf.mxu0
    %v1646 = vadd.f32 %v175, %v1645
    %1647 = vmatprep.mubr.bf16.mxu0 0
    %1648 = vmatmul.mubr.bf16.gmra.mxu0 %v439
    %v1649 = vpop.f32.mrf.mxu0
    %v1650 = vadd.f32 %v171, %v1649
    %v1651 = vpop.f32.mrf.mxu0
    %v1652 = vadd.f32 %v175, %v1651
    %v1653 = vpop.f32.mrf.mxu0
    %v1654 = vadd.f32 %v171, %v1653
    %v1655 = vpop.f32.mrf.mxu0
    %v1656 = vadd.f32 %v175, %v1655
    %1657 = vmatprep.mubr.bf16.mxu0 0
    %1658 = vmatmul.mubr.bf16.gmra.mxu0 %v442
    %v1659 = vpop.f32.mrf.mxu0
    %v1660 = vadd.f32 %v171, %v1659
    %v1661 = vpop.f32.mrf.mxu0
    %v1662 = vadd.f32 %v175, %v1661
    %v1663 = vpop.f32.mrf.mxu0
    %v1664 = vadd.f32 %v171, %v1663
    %v1665 = vpop.f32.mrf.mxu0
    %v1666 = vadd.f32 %v175, %v1665
    %1667 = vmatprep.mubr.bf16.mxu0 0
    %1668 = vmatmul.mubr.bf16.gmra.mxu0 %v445
    %v1669 = vpop.f32.mrf.mxu0
    %v1670 = vadd.f32 %v171, %v1669
    %v1671 = vpop.f32.mrf.mxu0
    %v1672 = vadd.f32 %v175, %v1671
    %v1673 = vpop.f32.mrf.mxu0
    %v1674 = vadd.f32 %v171, %v1673
    %v1675 = vpop.f32.mrf.mxu0
    %v1676 = vadd.f32 %v175, %v1675
    %1677 = vmatprep.mubr.bf16.mxu0 0
    %1678 = vmatmul.mubr.bf16.gmra.mxu0 %v448
    %v1679 = vpop.f32.mrf.mxu0
    %v1680 = vadd.f32 %v171, %v1679
    %v1681 = vpop.f32.mrf.mxu0
    %v1682 = vadd.f32 %v175, %v1681
    %v1683 = vpop.f32.mrf.mxu0
    %v1684 = vadd.f32 %v171, %v1683
    %v1685 = vpop.f32.mrf.mxu0
    %v1686 = vadd.f32 %v175, %v1685
    %1687 = vmatprep.mubr.bf16.mxu0 0
    %1688 = vmatmul.mubr.bf16.gmra.mxu0 %v451
    %v1689 = vpop.f32.mrf.mxu0
    %v1690 = vadd.f32 %v171, %v1689
    %v1691 = vpop.f32.mrf.mxu0
    %v1692 = vadd.f32 %v175, %v1691
    %v1693 = vpop.f32.mrf.mxu0
    %v1694 = vadd.f32 %v171, %v1693
    %v1695 = vpop.f32.mrf.mxu0
    %v1696 = vadd.f32 %v175, %v1695
    %1697 = vmatprep.mubr.bf16.mxu0 0
    %1698 = vmatmul.mubr.bf16.gmra.mxu0 %v454
    %v1699 = vpop.f32.mrf.mxu0
    %v1700 = vadd.f32 %v171, %v1699
    %v1701 = vpop.f32.mrf.mxu0
    %v1702 = vadd.f32 %v175, %v1701
    %v1703 = vpop.f32.mrf.mxu0
    %v1704 = vadd.f32 %v171, %v1703
    %v1705 = vpop.f32.mrf.mxu0
    %v1706 = vadd.f32 %v175, %v1705
    %1707 = vmatprep.mubr.bf16.mxu0 0
    %1708 = vmatmul.mubr.bf16.gmra.mxu0 %v457
    %v1709 = vpop.f32.mrf.mxu0
    %v1710 = vadd.f32 %v171, %v1709
    %v1711 = vpop.f32.mrf.mxu0
    %v1712 = vadd.f32 %v175, %v1711
    %v1713 = vpop.f32.mrf.mxu0
    %v1714 = vadd.f32 %v171, %v1713
    %v1715 = vpop.f32.mrf.mxu0
    %v1716 = vadd.f32 %v175, %v1715
    %1717 = vmatprep.mubr.bf16.mxu0 0
    %1718 = vmatmul.mubr.bf16.gmra.mxu0 %v460
    %v1719 = vpop.f32.mrf.mxu0
    %v1720 = vadd.f32 %v171, %v1719
    %v1721 = vpop.f32.mrf.mxu0
    %v1722 = vadd.f32 %v175, %v1721
    %v1723 = vpop.f32.mrf.mxu0
    %v1724 = vadd.f32 %v171, %v1723
    %v1725 = vpop.f32.mrf.mxu0
    %v1726 = vadd.f32 %v175, %v1725
    %1727 = vmatprep.mubr.bf16.mxu0 0
    %1728 = vmatmul.mubr.bf16.gmra.mxu0 %v463
    %v1729 = vpop.f32.mrf.mxu0
    %v1730 = vadd.f32 %v171, %v1729
    %v1731 = vpop.f32.mrf.mxu0
    %v1732 = vadd.f32 %v175, %v1731
    %v1733 = vpop.f32.mrf.mxu0
    %v1734 = vadd.f32 %v171, %v1733
    %v1735 = vpop.f32.mrf.mxu0
    %v1736 = vadd.f32 %v175, %v1735
    %1737 = vmatprep.mubr.bf16.mxu0 0
    %1738 = vmatmul.mubr.bf16.gmra.mxu0 %v466
    %v1739 = vpop.f32.mrf.mxu0
    %v1740 = vadd.f32 %v171, %v1739
    %v1741 = vpop.f32.mrf.mxu0
    %v1742 = vadd.f32 %v175, %v1741
    %v1743 = vpop.f32.mrf.mxu0
    %v1744 = vadd.f32 %v171, %v1743
    %v1745 = vpop.f32.mrf.mxu0
    %v1746 = vadd.f32 %v175, %v1745
    %1747 = vmatprep.mubr.bf16.mxu0 0
    %1748 = vmatmul.mubr.bf16.gmra.mxu0 %v469
    %v1749 = vpop.f32.mrf.mxu0
    %v1750 = vadd.f32 %v171, %v1749
    %v1751 = vpop.f32.mrf.mxu0
    %v1752 = vadd.f32 %v175, %v1751
    %v1753 = vpop.f32.mrf.mxu0
    %v1754 = vadd.f32 %v171, %v1753
    %v1755 = vpop.f32.mrf.mxu0
    %v1756 = vadd.f32 %v175, %v1755
    %1757 = vmatprep.mubr.bf16.mxu0 0
    %1758 = vmatmul.mubr.bf16.gmra.mxu0 %v472
    %v1759 = vpop.f32.mrf.mxu0
    %v1760 = vadd.f32 %v171, %v1759
    %v1761 = vpop.f32.mrf.mxu0
    %v1762 = vadd.f32 %v175, %v1761
    %v1763 = vpop.f32.mrf.mxu0
    %v1764 = vadd.f32 %v171, %v1763
    %v1765 = vpop.f32.mrf.mxu0
    %v1766 = vadd.f32 %v175, %v1765
    %1767 = vmatprep.mubr.bf16.mxu0 0
    %1768 = vmatmul.mubr.bf16.gmra.mxu0 %v475
    %v1769 = vpop.f32.mrf.mxu0
    %v1770 = vadd.f32 %v171, %v1769
    %v1771 = vpop.f32.mrf.mxu0
    %v1772 = vadd.f32 %v175, %v1771
    %v1773 = vpop.f32.mrf.mxu0
    %v1774 = vadd.f32 %v171, %v1773
    %v1775 = vpop.f32.mrf.mxu0
    %v1776 = vadd.f32 %v175, %v1775
    %1777 = vmatprep.mubr.bf16.mxu0 0
    %1778 = vmatmul.mubr.bf16.gmra.mxu0 %v478
    %v1779 = vpop.f32.mrf.mxu0
    %v1780 = vadd.f32 %v171, %v1779
    %v1781 = vpop.f32.mrf.mxu0
    %v1782 = vadd.f32 %v175, %v1781
    %v1783 = vpop.f32.mrf.mxu0
    %v1784 = vadd.f32 %v171, %v1783
    %v1785 = vpop.f32.mrf.mxu0
    %v1786 = vadd.f32 %v175, %v1785
    %1787 = vmatprep.mubr.bf16.mxu0 0
    %1788 = vmatmul.mubr.bf16.gmra.mxu0 %v481
    %v1789 = vpop.f32.mrf.mxu0
    %v1790 = vadd.f32 %v171, %v1789
    %v1791 = vpop.f32.mrf.mxu0
    %v1792 = vadd.f32 %v175, %v1791
    %v1793 = vpop.f32.mrf.mxu0
    %v1794 = vadd.f32 %v171, %v1793
    %v1795 = vpop.f32.mrf.mxu0
    %v1796 = vadd.f32 %v175, %v1795
    %1797 = vdwg.mxu0
    %v1798 = vmax.f32 %v555, 0.0
    %v1799 = vmax.f32 %v557, 0.0
    %v1800 = vmax.f32 %v768, 0.0
    %v1801 = vmax.f32 %v770, 0.0
    %v1802 = vmax.f32 %v981, 0.0
    %v1803 = vmax.f32 %v983, 0.0
    %v1804 = vmax.f32 %v1194, 0.0
    %v1805 = vmax.f32 %v1196, 0.0
    %v1806 = vmax.f32 %v1407, 0.0
    %v1807 = vmax.f32 %v1409, 0.0
    %v1808 = vmax.f32 %v1620, 0.0
    %v1809 = vmax.f32 %v1622, 0.0
    %v1810 = vmax.f32 %v559, 0.0
    %v1811 = vmax.f32 %v561, 0.0
    %v1812 = vmax.f32 %v772, 0.0
    %v1813 = vmax.f32 %v774, 0.0
    %v1814 = vmax.f32 %v985, 0.0
    %v1815 = vmax.f32 %v987, 0.0
    %v1816 = vmax.f32 %v1198, 0.0
    %v1817 = vmax.f32 %v1200, 0.0
    %v1818 = vmax.f32 %v1411, 0.0
    %v1819 = vmax.f32 %v1413, 0.0
    %v1820 = vmax.f32 %v1624, 0.0
    %v1821 = vmax.f32 %v1626, 0.0
    %v1822 = vmax.f32 %v565, 0.0
    %v1823 = vmax.f32 %v567, 0.0
    %v1824 = vmax.f32 %v778, 0.0
    %v1825 = vmax.f32 %v780, 0.0
    %v1826 = vmax.f32 %v991, 0.0
    %v1827 = vmax.f32 %v993, 0.0
    %v1828 = vmax.f32 %v1204, 0.0
    %v1829 = vmax.f32 %v1206, 0.0
    %v1830 = vmax.f32 %v1417, 0.0
    %v1831 = vmax.f32 %v1419, 0.0
    %v1832 = vmax.f32 %v1630, 0.0
    %v1833 = vmax.f32 %v1632, 0.0
    %v1834 = vmax.f32 %v569, 0.0
    %v1835 = vmax.f32 %v571, 0.0
    %v1836 = vmax.f32 %v782, 0.0
    %v1837 = vmax.f32 %v784, 0.0
    %v1838 = vmax.f32 %v995, 0.0
    %v1839 = vmax.f32 %v997, 0.0
    %v1840 = vmax.f32 %v1208, 0.0
    %v1841 = vmax.f32 %v1210, 0.0
    %v1842 = vmax.f32 %v1421, 0.0
    %v1843 = vmax.f32 %v1423, 0.0
    %v1844 = vmax.f32 %v1634, 0.0
    %v1845 = vmax.f32 %v1636, 0.0
    %v1846 = vmax.f32 %v575, 0.0
    %v1847 = vmax.f32 %v577, 0.0
    %v1848 = vmax.f32 %v788, 0.0
    %v1849 = vmax.f32 %v790, 0.0
    %v1850 = vmax.f32 %v1001, 0.0
    %v1851 = vmax.f32 %v1003, 0.0
    %v1852 = vmax.f32 %v1214, 0.0
    %v1853 = vmax.f32 %v1216, 0.0
    %v1854 = vmax.f32 %v1427, 0.0
    %v1855 = vmax.f32 %v1429, 0.0
    %v1856 = vmax.f32 %v1640, 0.0
    %v1857 = vmax.f32 %v1642, 0.0
    %v1858 = vmax.f32 %v579, 0.0
    %v1859 = vmax.f32 %v581, 0.0
    %v1860 = vmax.f32 %v792, 0.0
    %v1861 = vmax.f32 %v794, 0.0
    %v1862 = vmax.f32 %v1005, 0.0
    %v1863 = vmax.f32 %v1007, 0.0
    %v1864 = vmax.f32 %v1218, 0.0
    %v1865 = vmax.f32 %v1220, 0.0
    %v1866 = vmax.f32 %v1431, 0.0
    %v1867 = vmax.f32 %v1433, 0.0
    %v1868 = vmax.f32 %v1644, 0.0
    %v1869 = vmax.f32 %v1646, 0.0
    %v1870 = vmax.f32 %v585, 0.0
    %v1871 = vmax.f32 %v587, 0.0
    %v1872 = vmax.f32 %v798, 0.0
    %v1873 = vmax.f32 %v800, 0.0
    %v1874 = vmax.f32 %v1011, 0.0
    %v1875 = vmax.f32 %v1013, 0.0
    %v1876 = vmax.f32 %v1224, 0.0
    %v1877 = vmax.f32 %v1226, 0.0
    %v1878 = vmax.f32 %v1437, 0.0
    %v1879 = vmax.f32 %v1439, 0.0
    %v1880 = vmax.f32 %v1650, 0.0
    %v1881 = vmax.f32 %v1652, 0.0
    %v1882 = vmax.f32 %v589, 0.0
    %v1883 = vmax.f32 %v591, 0.0
    %v1884 = vmax.f32 %v802, 0.0
    %v1885 = vmax.f32 %v804, 0.0
    %v1886 = vmax.f32 %v1015, 0.0
    %v1887 = vmax.f32 %v1017, 0.0
    %v1888 = vmax.f32 %v1228, 0.0
    %v1889 = vmax.f32 %v1230, 0.0
    %v1890 = vmax.f32 %v1441, 0.0
    %v1891 = vmax.f32 %v1443, 0.0
    %v1892 = vmax.f32 %v1654, 0.0
    %v1893 = vmax.f32 %v1656, 0.0
    %v1894 = vmax.f32 %v595, 0.0
    %v1895 = vmax.f32 %v597, 0.0
    %v1896 = vmax.f32 %v808, 0.0
    %v1897 = vmax.f32 %v810, 0.0
    %v1898 = vmax.f32 %v1021, 0.0
    %v1899 = vmax.f32 %v1023, 0.0
    %v1900 = vmax.f32 %v1234, 0.0
    %v1901 = vmax.f32 %v1236, 0.0
    %v1902 = vmax.f32 %v1447, 0.0
    %v1903 = vmax.f32 %v1449, 0.0
    %v1904 = vmax.f32 %v1660, 0.0
    %v1905 = vmax.f32 %v1662, 0.0
    %v1906 = vmax.f32 %v599, 0.0
    %v1907 = vmax.f32 %v601, 0.0
    %v1908 = vmax.f32 %v812, 0.0
    %v1909 = vmax.f32 %v814, 0.0
    %v1910 = vmax.f32 %v1025, 0.0
    %v1911 = vmax.f32 %v1027, 0.0
    %v1912 = vmax.f32 %v1238, 0.0
    %v1913 = vmax.f32 %v1240, 0.0
    %v1914 = vmax.f32 %v1451, 0.0
    %v1915 = vmax.f32 %v1453, 0.0
    %v1916 = vmax.f32 %v1664, 0.0
    %v1917 = vmax.f32 %v1666, 0.0
    %v1918 = vmax.f32 %v605, 0.0
    %v1919 = vmax.f32 %v607, 0.0
    %v1920 = vmax.f32 %v818, 0.0
    %v1921 = vmax.f32 %v820, 0.0
    %v1922 = vmax.f32 %v1031, 0.0
    %v1923 = vmax.f32 %v1033, 0.0
    %v1924 = vmax.f32 %v1244, 0.0
    %v1925 = vmax.f32 %v1246, 0.0
    %v1926 = vmax.f32 %v1457, 0.0
    %v1927 = vmax.f32 %v1459, 0.0
    %v1928 = vmax.f32 %v1670, 0.0
    %v1929 = vmax.f32 %v1672, 0.0
    %v1930 = vmax.f32 %v609, 0.0
    %v1931 = vmax.f32 %v611, 0.0
    %v1932 = vmax.f32 %v822, 0.0
    %v1933 = vmax.f32 %v824, 0.0
    %v1934 = vmax.f32 %v1035, 0.0
    %v1935 = vmax.f32 %v1037, 0.0
    %v1936 = vmax.f32 %v1248, 0.0
    %v1937 = vmax.f32 %v1250, 0.0
    %v1938 = vmax.f32 %v1461, 0.0
    %v1939 = vmax.f32 %v1463, 0.0
    %v1940 = vmax.f32 %v1674, 0.0
    %v1941 = vmax.f32 %v1676, 0.0
    %v1942 = vmax.f32 %v615, 0.0
    %v1943 = vmax.f32 %v617, 0.0
    %v1944 = vmax.f32 %v828, 0.0
    %v1945 = vmax.f32 %v830, 0.0
    %v1946 = vmax.f32 %v1041, 0.0
    %v1947 = vmax.f32 %v1043, 0.0
    %v1948 = vmax.f32 %v1254, 0.0
    %v1949 = vmax.f32 %v1256, 0.0
    %v1950 = vmax.f32 %v1467, 0.0
    %v1951 = vmax.f32 %v1469, 0.0
    %v1952 = vmax.f32 %v1680, 0.0
    %v1953 = vmax.f32 %v1682, 0.0
    %v1954 = vmax.f32 %v619, 0.0
    %v1955 = vmax.f32 %v621, 0.0
    %v1956 = vmax.f32 %v832, 0.0
    %v1957 = vmax.f32 %v834, 0.0
    %v1958 = vmax.f32 %v1045, 0.0
    %v1959 = vmax.f32 %v1047, 0.0
    %v1960 = vmax.f32 %v1258, 0.0
    %v1961 = vmax.f32 %v1260, 0.0
    %v1962 = vmax.f32 %v1471, 0.0
    %v1963 = vmax.f32 %v1473, 0.0
    %v1964 = vmax.f32 %v1684, 0.0
    %v1965 = vmax.f32 %v1686, 0.0
    %v1966 = vmax.f32 %v625, 0.0
    %v1967 = vmax.f32 %v627, 0.0
    %v1968 = vmax.f32 %v838, 0.0
    %v1969 = vmax.f32 %v840, 0.0
    %v1970 = vmax.f32 %v1051, 0.0
    %v1971 = vmax.f32 %v1053, 0.0
    %v1972 = vmax.f32 %v1264, 0.0
    %v1973 = vmax.f32 %v1266, 0.0
    %v1974 = vmax.f32 %v1477, 0.0
    %v1975 = vmax.f32 %v1479, 0.0
    %v1976 = vmax.f32 %v1690, 0.0
    %v1977 = vmax.f32 %v1692, 0.0
    %v1978 = vmax.f32 %v629, 0.0
    %v1979 = vmax.f32 %v631, 0.0
    %v1980 = vmax.f32 %v842, 0.0
    %v1981 = vmax.f32 %v844, 0.0
    %v1982 = vmax.f32 %v1055, 0.0
    %v1983 = vmax.f32 %v1057, 0.0
    %v1984 = vmax.f32 %v1268, 0.0
    %v1985 = vmax.f32 %v1270, 0.0
    %v1986 = vmax.f32 %v1481, 0.0
    %v1987 = vmax.f32 %v1483, 0.0
    %v1988 = vmax.f32 %v1694, 0.0
    %v1989 = vmax.f32 %v1696, 0.0
    %v1990 = vmax.f32 %v635, 0.0
    %v1991 = vmax.f32 %v637, 0.0
    %v1992 = vmax.f32 %v848, 0.0
    %v1993 = vmax.f32 %v850, 0.0
    %v1994 = vmax.f32 %v1061, 0.0
    %v1995 = vmax.f32 %v1063, 0.0
    %v1996 = vmax.f32 %v1274, 0.0
    %v1997 = vmax.f32 %v1276, 0.0
    %v1998 = vmax.f32 %v1487, 0.0
    %v1999 = vmax.f32 %v1489, 0.0
    %v2000 = vmax.f32 %v1700, 0.0
    %v2001 = vmax.f32 %v1702, 0.0
    %v2002 = vmax.f32 %v639, 0.0
    %v2003 = vmax.f32 %v641, 0.0
    %v2004 = vmax.f32 %v852, 0.0
    %v2005 = vmax.f32 %v854, 0.0
    %v2006 = vmax.f32 %v1065, 0.0
    %v2007 = vmax.f32 %v1067, 0.0
    %v2008 = vmax.f32 %v1278, 0.0
    %v2009 = vmax.f32 %v1280, 0.0
    %v2010 = vmax.f32 %v1491, 0.0
    %v2011 = vmax.f32 %v1493, 0.0
    %v2012 = vmax.f32 %v1704, 0.0
    %v2013 = vmax.f32 %v1706, 0.0
    %v2014 = vmax.f32 %v645, 0.0
    %v2015 = vmax.f32 %v647, 0.0
    %v2016 = vmax.f32 %v858, 0.0
    %v2017 = vmax.f32 %v860, 0.0
    %v2018 = vmax.f32 %v1071, 0.0
    %v2019 = vmax.f32 %v1073, 0.0
    %v2020 = vmax.f32 %v1284, 0.0
    %v2021 = vmax.f32 %v1286, 0.0
    %v2022 = vmax.f32 %v1497, 0.0
    %v2023 = vmax.f32 %v1499, 0.0
    %v2024 = vmax.f32 %v1710, 0.0
    %v2025 = vmax.f32 %v1712, 0.0
    %v2026 = vmax.f32 %v649, 0.0
    %v2027 = vmax.f32 %v651, 0.0
    %v2028 = vmax.f32 %v862, 0.0
    %v2029 = vmax.f32 %v864, 0.0
    %v2030 = vmax.f32 %v1075, 0.0
    %v2031 = vmax.f32 %v1077, 0.0
    %v2032 = vmax.f32 %v1288, 0.0
    %v2033 = vmax.f32 %v1290, 0.0
    %v2034 = vmax.f32 %v1501, 0.0
    %v2035 = vmax.f32 %v1503, 0.0
    %v2036 = vmax.f32 %v1714, 0.0
    %v2037 = vmax.f32 %v1716, 0.0
    %v2038 = vmax.f32 %v655, 0.0
    %v2039 = vmax.f32 %v657, 0.0
    %v2040 = vmax.f32 %v868, 0.0
    %v2041 = vmax.f32 %v870, 0.0
    %v2042 = vmax.f32 %v1081, 0.0
    %v2043 = vmax.f32 %v1083, 0.0
    %v2044 = vmax.f32 %v1294, 0.0
    %v2045 = vmax.f32 %v1296, 0.0
    %v2046 = vmax.f32 %v1507, 0.0
    %v2047 = vmax.f32 %v1509, 0.0
    %v2048 = vmax.f32 %v1720, 0.0
    %v2049 = vmax.f32 %v1722, 0.0
    %v2050 = vmax.f32 %v659, 0.0
    %v2051 = vmax.f32 %v661, 0.0
    %v2052 = vmax.f32 %v872, 0.0
    %v2053 = vmax.f32 %v874, 0.0
    %v2054 = vmax.f32 %v1085, 0.0
    %v2055 = vmax.f32 %v1087, 0.0
    %v2056 = vmax.f32 %v1298, 0.0
    %v2057 = vmax.f32 %v1300, 0.0
    %v2058 = vmax.f32 %v1511, 0.0
    %v2059 = vmax.f32 %v1513, 0.0
    %v2060 = vmax.f32 %v1724, 0.0
    %v2061 = vmax.f32 %v1726, 0.0
    %v2062 = vmax.f32 %v665, 0.0
    %v2063 = vmax.f32 %v667, 0.0
    %v2064 = vmax.f32 %v878, 0.0
    %v2065 = vmax.f32 %v880, 0.0
    %v2066 = vmax.f32 %v1091, 0.0
    %v2067 = vmax.f32 %v1093, 0.0
    %v2068 = vmax.f32 %v1304, 0.0
    %v2069 = vmax.f32 %v1306, 0.0
    %v2070 = vmax.f32 %v1517, 0.0
    %v2071 = vmax.f32 %v1519, 0.0
    %v2072 = vmax.f32 %v1730, 0.0
    %v2073 = vmax.f32 %v1732, 0.0
    %v2074 = vmax.f32 %v669, 0.0
    %v2075 = vmax.f32 %v671, 0.0
    %v2076 = vmax.f32 %v882, 0.0
    %v2077 = vmax.f32 %v884, 0.0
    %v2078 = vmax.f32 %v1095, 0.0
    %v2079 = vmax.f32 %v1097, 0.0
    %v2080 = vmax.f32 %v1308, 0.0
    %v2081 = vmax.f32 %v1310, 0.0
    %v2082 = vmax.f32 %v1521, 0.0
    %v2083 = vmax.f32 %v1523, 0.0
    %v2084 = vmax.f32 %v1734, 0.0
    %v2085 = vmax.f32 %v1736, 0.0
    %v2086 = vmax.f32 %v675, 0.0
    %v2087 = vmax.f32 %v677, 0.0
    %v2088 = vmax.f32 %v888, 0.0
    %v2089 = vmax.f32 %v890, 0.0
    %v2090 = vmax.f32 %v1101, 0.0
    %v2091 = vmax.f32 %v1103, 0.0
    %v2092 = vmax.f32 %v1314, 0.0
    %v2093 = vmax.f32 %v1316, 0.0
    %v2094 = vmax.f32 %v1527, 0.0
    %v2095 = vmax.f32 %v1529, 0.0
    %v2096 = vmax.f32 %v1740, 0.0
    %v2097 = vmax.f32 %v1742, 0.0
    %v2098 = vmax.f32 %v679, 0.0
    %v2099 = vmax.f32 %v681, 0.0
    %v2100 = vmax.f32 %v892, 0.0
    %v2101 = vmax.f32 %v894, 0.0
    %v2102 = vmax.f32 %v1105, 0.0
    %v2103 = vmax.f32 %v1107, 0.0
    %v2104 = vmax.f32 %v1318, 0.0
    %v2105 = vmax.f32 %v1320, 0.0
    %v2106 = vmax.f32 %v1531, 0.0
    %v2107 = vmax.f32 %v1533, 0.0
    %v2108 = vmax.f32 %v1744, 0.0
    %v2109 = vmax.f32 %v1746, 0.0
    %v2110 = vmax.f32 %v685, 0.0
    %v2111 = vmax.f32 %v687, 0.0
    %v2112 = vmax.f32 %v898, 0.0
    %v2113 = vmax.f32 %v900, 0.0
    %v2114 = vmax.f32 %v1111, 0.0
    %v2115 = vmax.f32 %v1113, 0.0
    %v2116 = vmax.f32 %v1324, 0.0
    %v2117 = vmax.f32 %v1326, 0.0
    %v2118 = vmax.f32 %v1537, 0.0
    %v2119 = vmax.f32 %v1539, 0.0
    %v2120 = vmax.f32 %v1750, 0.0
    %v2121 = vmax.f32 %v1752, 0.0
    %v2122 = vmax.f32 %v689, 0.0
    %v2123 = vmax.f32 %v691, 0.0
    %v2124 = vmax.f32 %v902, 0.0
    %v2125 = vmax.f32 %v904, 0.0
    %v2126 = vmax.f32 %v1115, 0.0
    %v2127 = vmax.f32 %v1117, 0.0
    %v2128 = vmax.f32 %v1328, 0.0
    %v2129 = vmax.f32 %v1330, 0.0
    %v2130 = vmax.f32 %v1541, 0.0
    %v2131 = vmax.f32 %v1543, 0.0
    %v2132 = vmax.f32 %v1754, 0.0
    %v2133 = vmax.f32 %v1756, 0.0
    %v2134 = vmax.f32 %v695, 0.0
    %v2135 = vmax.f32 %v697, 0.0
    %v2136 = vmax.f32 %v908, 0.0
    %v2137 = vmax.f32 %v910, 0.0
    %v2138 = vmax.f32 %v1121, 0.0
    %v2139 = vmax.f32 %v1123, 0.0
    %v2140 = vmax.f32 %v1334, 0.0
    %v2141 = vmax.f32 %v1336, 0.0
    %v2142 = vmax.f32 %v1547, 0.0
    %v2143 = vmax.f32 %v1549, 0.0
    %v2144 = vmax.f32 %v1760, 0.0
    %v2145 = vmax.f32 %v1762, 0.0
    %v2146 = vmax.f32 %v699, 0.0
    %v2147 = vmax.f32 %v701, 0.0
    %v2148 = vmax.f32 %v912, 0.0
    %v2149 = vmax.f32 %v914, 0.0
    %v2150 = vmax.f32 %v1125, 0.0
    %v2151 = vmax.f32 %v1127, 0.0
    %v2152 = vmax.f32 %v1338, 0.0
    %v2153 = vmax.f32 %v1340, 0.0
    %v2154 = vmax.f32 %v1551, 0.0
    %v2155 = vmax.f32 %v1553, 0.0
    %v2156 = vmax.f32 %v1764, 0.0
    %v2157 = vmax.f32 %v1766, 0.0
    %v2158 = vmax.f32 %v705, 0.0
    %v2159 = vmax.f32 %v707, 0.0
    %v2160 = vmax.f32 %v918, 0.0
    %v2161 = vmax.f32 %v920, 0.0
    %v2162 = vmax.f32 %v1131, 0.0
    %v2163 = vmax.f32 %v1133, 0.0
    %v2164 = vmax.f32 %v1344, 0.0
    %v2165 = vmax.f32 %v1346, 0.0
    %v2166 = vmax.f32 %v1557, 0.0
    %v2167 = vmax.f32 %v1559, 0.0
    %v2168 = vmax.f32 %v1770, 0.0
    %v2169 = vmax.f32 %v1772, 0.0
    %v2170 = vmax.f32 %v709, 0.0
    %v2171 = vmax.f32 %v711, 0.0
    %v2172 = vmax.f32 %v922, 0.0
    %v2173 = vmax.f32 %v924, 0.0
    %v2174 = vmax.f32 %v1135, 0.0
    %v2175 = vmax.f32 %v1137, 0.0
    %v2176 = vmax.f32 %v1348, 0.0
    %v2177 = vmax.f32 %v1350, 0.0
    %v2178 = vmax.f32 %v1561, 0.0
    %v2179 = vmax.f32 %v1563, 0.0
    %v2180 = vmax.f32 %v1774, 0.0
    %v2181 = vmax.f32 %v1776, 0.0
    %v2182 = vmax.f32 %v715, 0.0
    %v2183 = vmax.f32 %v717, 0.0
    %v2184 = vmax.f32 %v928, 0.0
    %v2185 = vmax.f32 %v930, 0.0
    %v2186 = vmax.f32 %v1141, 0.0
    %v2187 = vmax.f32 %v1143, 0.0
    %v2188 = vmax.f32 %v1354, 0.0
    %v2189 = vmax.f32 %v1356, 0.0
    %v2190 = vmax.f32 %v1567, 0.0
    %v2191 = vmax.f32 %v1569, 0.0
    %v2192 = vmax.f32 %v1780, 0.0
    %v2193 = vmax.f32 %v1782, 0.0
    %v2194 = vmax.f32 %v719, 0.0
    %v2195 = vmax.f32 %v721, 0.0
    %v2196 = vmax.f32 %v932, 0.0
    %v2197 = vmax.f32 %v934, 0.0
    %v2198 = vmax.f32 %v1145, 0.0
    %v2199 = vmax.f32 %v1147, 0.0
    %v2200 = vmax.f32 %v1358, 0.0
    %v2201 = vmax.f32 %v1360, 0.0
    %v2202 = vmax.f32 %v1571, 0.0
    %v2203 = vmax.f32 %v1573, 0.0
    %v2204 = vmax.f32 %v1784, 0.0
    %v2205 = vmax.f32 %v1786, 0.0
    %v2206 = vmax.f32 %v725, 0.0
    %v2207 = vmax.f32 %v727, 0.0
    %v2208 = vmax.f32 %v938, 0.0
    %v2209 = vmax.f32 %v940, 0.0
    %v2210 = vmax.f32 %v1151, 0.0
    %v2211 = vmax.f32 %v1153, 0.0
    %v2212 = vmax.f32 %v1364, 0.0
    %v2213 = vmax.f32 %v1366, 0.0
    %v2214 = vmax.f32 %v1577, 0.0
    %v2215 = vmax.f32 %v1579, 0.0
    %v2216 = vmax.f32 %v1790, 0.0
    %v2217 = vmax.f32 %v1792, 0.0
    %v2218 = vmax.f32 %v729, 0.0
    %v2219 = vmax.f32 %v731, 0.0
    %v2220 = vmax.f32 %v942, 0.0
    %v2221 = vmax.f32 %v944, 0.0
    %v2222 = vmax.f32 %v1155, 0.0
    %v2223 = vmax.f32 %v1157, 0.0
    %v2224 = vmax.f32 %v1368, 0.0
    %v2225 = vmax.f32 %v1370, 0.0
    %v2226 = vmax.f32 %v1581, 0.0
    %v2227 = vmax.f32 %v1583, 0.0
    %v2228 = vmax.f32 %v1794, 0.0
    %v2229 = vmax.f32 %v1796, 0.0
    %v2230 = vpack.c.bf16 %v1810, %v1798
    %v2231 = vpack.c.bf16 %v1811, %v1799
    %v2232 = vpack.c.bf16 %v1812, %v1800
    %v2233 = vpack.c.bf16 %v1813, %v1801
    %v2234 = vpack.c.bf16 %v1814, %v1802
    %v2235 = vpack.c.bf16 %v1815, %v1803
    %v2236 = vpack.c.bf16 %v1816, %v1804
    %v2237 = vpack.c.bf16 %v1817, %v1805
    %v2238 = vpack.c.bf16 %v1818, %v1806
    %v2239 = vpack.c.bf16 %v1819, %v1807
    %v2240 = vpack.c.bf16 %v1820, %v1808
    %v2241 = vpack.c.bf16 %v1821, %v1809
    %v2242 = vpack.c.bf16 %v1834, %v1822
    %v2243 = vpack.c.bf16 %v1835, %v1823
    %v2244 = vpack.c.bf16 %v1836, %v1824
    %v2245 = vpack.c.bf16 %v1837, %v1825
    %v2246 = vpack.c.bf16 %v1838, %v1826
    %v2247 = vpack.c.bf16 %v1839, %v1827
    %v2248 = vpack.c.bf16 %v1840, %v1828
    %v2249 = vpack.c.bf16 %v1841, %v1829
    %v2250 = vpack.c.bf16 %v1842, %v1830
    %v2251 = vpack.c.bf16 %v1843, %v1831
    %v2252 = vpack.c.bf16 %v1844, %v1832
    %v2253 = vpack.c.bf16 %v1845, %v1833
    %v2254 = vpack.c.bf16 %v1858, %v1846
    %v2255 = vpack.c.bf16 %v1859, %v1847
    %v2256 = vpack.c.bf16 %v1860, %v1848
    %v2257 = vpack.c.bf16 %v1861, %v1849
    %v2258 = vpack.c.bf16 %v1862, %v1850
    %v2259 = vpack.c.bf16 %v1863, %v1851
    %v2260 = vpack.c.bf16 %v1864, %v1852
    %v2261 = vpack.c.bf16 %v1865, %v1853
    %v2262 = vpack.c.bf16 %v1866, %v1854
    %v2263 = vpack.c.bf16 %v1867, %v1855
    %v2264 = vpack.c.bf16 %v1868, %v1856
    %v2265 = vpack.c.bf16 %v1869, %v1857
    %v2266 = vpack.c.bf16 %v1882, %v1870
    %v2267 = vpack.c.bf16 %v1883, %v1871
    %v2268 = vpack.c.bf16 %v1884, %v1872
    %v2269 = vpack.c.bf16 %v1885, %v1873
    %v2270 = vpack.c.bf16 %v1886, %v1874
    %v2271 = vpack.c.bf16 %v1887, %v1875
    %v2272 = vpack.c.bf16 %v1888, %v1876
    %v2273 = vpack.c.bf16 %v1889, %v1877
    %v2274 = vpack.c.bf16 %v1890, %v1878
    %v2275 = vpack.c.bf16 %v1891, %v1879
    %v2276 = vpack.c.bf16 %v1892, %v1880
    %v2277 = vpack.c.bf16 %v1893, %v1881
    %v2278 = vpack.c.bf16 %v1906, %v1894
    %v2279 = vpack.c.bf16 %v1907, %v1895
    %v2280 = vpack.c.bf16 %v1908, %v1896
    %v2281 = vpack.c.bf16 %v1909, %v1897
    %v2282 = vpack.c.bf16 %v1910, %v1898
    %v2283 = vpack.c.bf16 %v1911, %v1899
    %v2284 = vpack.c.bf16 %v1912, %v1900
    %v2285 = vpack.c.bf16 %v1913, %v1901
    %v2286 = vpack.c.bf16 %v1914, %v1902
    %v2287 = vpack.c.bf16 %v1915, %v1903
    %v2288 = vpack.c.bf16 %v1916, %v1904
    %v2289 = vpack.c.bf16 %v1917, %v1905
    %v2290 = vpack.c.bf16 %v1930, %v1918
    %v2291 = vpack.c.bf16 %v1931, %v1919
    %v2292 = vpack.c.bf16 %v1932, %v1920
    %v2293 = vpack.c.bf16 %v1933, %v1921
    %v2294 = vpack.c.bf16 %v1934, %v1922
    %v2295 = vpack.c.bf16 %v1935, %v1923
    %v2296 = vpack.c.bf16 %v1936, %v1924
    %v2297 = vpack.c.bf16 %v1937, %v1925
    %v2298 = vpack.c.bf16 %v1938, %v1926
    %v2299 = vpack.c.bf16 %v1939, %v1927
    %v2300 = vpack.c.bf16 %v1940, %v1928
    %v2301 = vpack.c.bf16 %v1941, %v1929
    %v2302 = vpack.c.bf16 %v1954, %v1942
    %v2303 = vpack.c.bf16 %v1955, %v1943
    %v2304 = vpack.c.bf16 %v1956, %v1944
    %v2305 = vpack.c.bf16 %v1957, %v1945
    %v2306 = vpack.c.bf16 %v1958, %v1946
    %v2307 = vpack.c.bf16 %v1959, %v1947
    %v2308 = vpack.c.bf16 %v1960, %v1948
    %v2309 = vpack.c.bf16 %v1961, %v1949
    %v2310 = vpack.c.bf16 %v1962, %v1950
    %v2311 = vpack.c.bf16 %v1963, %v1951
    %v2312 = vpack.c.bf16 %v1964, %v1952
    %v2313 = vpack.c.bf16 %v1965, %v1953
    %v2314 = vpack.c.bf16 %v1978, %v1966
    %v2315 = vpack.c.bf16 %v1979, %v1967
    %v2316 = vpack.c.bf16 %v1980, %v1968
    %v2317 = vpack.c.bf16 %v1981, %v1969
    %v2318 = vpack.c.bf16 %v1982, %v1970
    %v2319 = vpack.c.bf16 %v1983, %v1971
    %v2320 = vpack.c.bf16 %v1984, %v1972
    %v2321 = vpack.c.bf16 %v1985, %v1973
    %v2322 = vpack.c.bf16 %v1986, %v1974
    %v2323 = vpack.c.bf16 %v1987, %v1975
    %v2324 = vpack.c.bf16 %v1988, %v1976
    %v2325 = vpack.c.bf16 %v1989, %v1977
    %v2326 = vpack.c.bf16 %v2002, %v1990
    %v2327 = vpack.c.bf16 %v2003, %v1991
    %v2328 = vpack.c.bf16 %v2004, %v1992
    %v2329 = vpack.c.bf16 %v2005, %v1993
    %v2330 = vpack.c.bf16 %v2006, %v1994
    %v2331 = vpack.c.bf16 %v2007, %v1995
    %v2332 = vpack.c.bf16 %v2008, %v1996
    %v2333 = vpack.c.bf16 %v2009, %v1997
    %v2334 = vpack.c.bf16 %v2010, %v1998
    %v2335 = vpack.c.bf16 %v2011, %v1999
    %v2336 = vpack.c.bf16 %v2012, %v2000
    %v2337 = vpack.c.bf16 %v2013, %v2001
    %v2338 = vpack.c.bf16 %v2026, %v2014
    %v2339 = vpack.c.bf16 %v2027, %v2015
    %v2340 = vpack.c.bf16 %v2028, %v2016
    %v2341 = vpack.c.bf16 %v2029, %v2017
    %v2342 = vpack.c.bf16 %v2030, %v2018
    %v2343 = vpack.c.bf16 %v2031, %v2019
    %v2344 = vpack.c.bf16 %v2032, %v2020
    %v2345 = vpack.c.bf16 %v2033, %v2021
    %v2346 = vpack.c.bf16 %v2034, %v2022
    %v2347 = vpack.c.bf16 %v2035, %v2023
    %v2348 = vpack.c.bf16 %v2036, %v2024
    %v2349 = vpack.c.bf16 %v2037, %v2025
    %v2350 = vpack.c.bf16 %v2050, %v2038
    %v2351 = vpack.c.bf16 %v2051, %v2039
    %v2352 = vpack.c.bf16 %v2052, %v2040
    %v2353 = vpack.c.bf16 %v2053, %v2041
    %v2354 = vpack.c.bf16 %v2054, %v2042
    %v2355 = vpack.c.bf16 %v2055, %v2043
    %v2356 = vpack.c.bf16 %v2056, %v2044
    %v2357 = vpack.c.bf16 %v2057, %v2045
    %v2358 = vpack.c.bf16 %v2058, %v2046
    %v2359 = vpack.c.bf16 %v2059, %v2047
    %v2360 = vpack.c.bf16 %v2060, %v2048
    %v2361 = vpack.c.bf16 %v2061, %v2049
    %v2362 = vpack.c.bf16 %v2074, %v2062
    %v2363 = vpack.c.bf16 %v2075, %v2063
    %v2364 = vpack.c.bf16 %v2076, %v2064
    %v2365 = vpack.c.bf16 %v2077, %v2065
    %v2366 = vpack.c.bf16 %v2078, %v2066
    %v2367 = vpack.c.bf16 %v2079, %v2067
    %v2368 = vpack.c.bf16 %v2080, %v2068
    %v2369 = vpack.c.bf16 %v2081, %v2069
    %v2370 = vpack.c.bf16 %v2082, %v2070
    %v2371 = vpack.c.bf16 %v2083, %v2071
    %v2372 = vpack.c.bf16 %v2084, %v2072
    %v2373 = vpack.c.bf16 %v2085, %v2073
    %v2374 = vpack.c.bf16 %v2098, %v2086
    %v2375 = vpack.c.bf16 %v2099, %v2087
    %v2376 = vpack.c.bf16 %v2100, %v2088
    %v2377 = vpack.c.bf16 %v2101, %v2089
    %v2378 = vpack.c.bf16 %v2102, %v2090
    %v2379 = vpack.c.bf16 %v2103, %v2091
    %v2380 = vpack.c.bf16 %v2104, %v2092
    %v2381 = vpack.c.bf16 %v2105, %v2093
    %v2382 = vpack.c.bf16 %v2106, %v2094
    %v2383 = vpack.c.bf16 %v2107, %v2095
    %v2384 = vpack.c.bf16 %v2108, %v2096
    %v2385 = vpack.c.bf16 %v2109, %v2097
    %v2386 = vpack.c.bf16 %v2122, %v2110
    %v2387 = vpack.c.bf16 %v2123, %v2111
    %v2388 = vpack.c.bf16 %v2124, %v2112
    %v2389 = vpack.c.bf16 %v2125, %v2113
    %v2390 = vpack.c.bf16 %v2126, %v2114
    %v2391 = vpack.c.bf16 %v2127, %v2115
    %v2392 = vpack.c.bf16 %v2128, %v2116
    %v2393 = vpack.c.bf16 %v2129, %v2117
    %v2394 = vpack.c.bf16 %v2130, %v2118
    %v2395 = vpack.c.bf16 %v2131, %v2119
    %v2396 = vpack.c.bf16 %v2132, %v2120
    %v2397 = vpack.c.bf16 %v2133, %v2121
    %v2398 = vpack.c.bf16 %v2146, %v2134
    %v2399 = vpack.c.bf16 %v2147, %v2135
    %v2400 = vpack.c.bf16 %v2148, %v2136
    %v2401 = vpack.c.bf16 %v2149, %v2137
    %v2402 = vpack.c.bf16 %v2150, %v2138
    %v2403 = vpack.c.bf16 %v2151, %v2139
    %v2404 = vpack.c.bf16 %v2152, %v2140
    %v2405 = vpack.c.bf16 %v2153, %v2141
    %v2406 = vpack.c.bf16 %v2154, %v2142
    %v2407 = vpack.c.bf16 %v2155, %v2143
    %v2408 = vpack.c.bf16 %v2156, %v2144
    %v2409 = vpack.c.bf16 %v2157, %v2145
    %v2410 = vpack.c.bf16 %v2170, %v2158
    %v2411 = vpack.c.bf16 %v2171, %v2159
    %v2412 = vpack.c.bf16 %v2172, %v2160
    %v2413 = vpack.c.bf16 %v2173, %v2161
    %v2414 = vpack.c.bf16 %v2174, %v2162
    %v2415 = vpack.c.bf16 %v2175, %v2163
    %v2416 = vpack.c.bf16 %v2176, %v2164
    %v2417 = vpack.c.bf16 %v2177, %v2165
    %v2418 = vpack.c.bf16 %v2178, %v2166
    %v2419 = vpack.c.bf16 %v2179, %v2167
    %v2420 = vpack.c.bf16 %v2180, %v2168
    %v2421 = vpack.c.bf16 %v2181, %v2169
    %v2422 = vpack.c.bf16 %v2194, %v2182
    %v2423 = vpack.c.bf16 %v2195, %v2183
    %v2424 = vpack.c.bf16 %v2196, %v2184
    %v2425 = vpack.c.bf16 %v2197, %v2185
    %v2426 = vpack.c.bf16 %v2198, %v2186
    %v2427 = vpack.c.bf16 %v2199, %v2187
    %v2428 = vpack.c.bf16 %v2200, %v2188
    %v2429 = vpack.c.bf16 %v2201, %v2189
    %v2430 = vpack.c.bf16 %v2202, %v2190
    %v2431 = vpack.c.bf16 %v2203, %v2191
    %v2432 = vpack.c.bf16 %v2204, %v2192
    %v2433 = vpack.c.bf16 %v2205, %v2193
    %v2434 = vpack.c.bf16 %v2218, %v2206
    %v2435 = vpack.c.bf16 %v2219, %v2207
    %v2436 = vpack.c.bf16 %v2220, %v2208
    %v2437 = vpack.c.bf16 %v2221, %v2209
    %v2438 = vpack.c.bf16 %v2222, %v2210
    %v2439 = vpack.c.bf16 %v2223, %v2211
    %v2440 = vpack.c.bf16 %v2224, %v2212
    %v2441 = vpack.c.bf16 %v2225, %v2213
    %v2442 = vpack.c.bf16 %v2226, %v2214
    %v2443 = vpack.c.bf16 %v2227, %v2215
    %v2444 = vpack.c.bf16 %v2228, %v2216
    %v2445 = vpack.c.bf16 %v2229, %v2217
    %v2446 = vld [vmem:[%s3] sm:$0xf]
    %v2447 = vld [vmem:[%s3 + $0x4] sm:$0xf]
    %v2448 = vld [vmem:[%s3 + $0x8] sm:$0xf]
    %v2449 = vld [vmem:[%s3 + $0xc] sm:$0xf]
    %v2450 = vld [vmem:[%s3 + $0x10] sm:$0xf]
    %v2451 = vld [vmem:[%s3 + $0x14] sm:$0xf]
    %v2452 = vld [vmem:[%s3 + $0x18] sm:$0xf]
    %v2453 = vld [vmem:[%s3 + $0x1c] sm:$0xf]
    %v2454 = vld [vmem:[%s3 + $0x20] sm:$0xf]
    %v2455 = vld [vmem:[%s3 + $0x24] sm:$0xf]
    %v2456 = vld [vmem:[%s3 + $0x28] sm:$0xf]
    %v2457 = vld [vmem:[%s3 + $0x2c] sm:$0xf]
    %v2458 = vld [vmem:[%s3 + $0x30] sm:$0xf]
    %v2459 = vld [vmem:[%s3 + $0x34] sm:$0xf]
    %v2460 = vld [vmem:[%s3 + $0x38] sm:$0xf]
    %v2461 = vld [vmem:[%s3 + $0x3c] sm:$0xf]
    %v2462 = vld [vmem:[%s3 + $0x40] sm:$0xf]
    %v2463 = vld [vmem:[%s3 + $0x44] sm:$0xf]
    %v2464 = vld [vmem:[%s3 + $0x48] sm:$0xf]
    %v2465 = vld [vmem:[%s3 + $0x4c] sm:$0xf]
    %v2466 = vld [vmem:[%s3 + $0x50] sm:$0xf]
    %v2467 = vld [vmem:[%s3 + $0x54] sm:$0xf]
    %v2468 = vld [vmem:[%s3 + $0x58] sm:$0xf]
    %v2469 = vld [vmem:[%s3 + $0x5c] sm:$0xf]
    %v2470 = vld [vmem:[%s3 + $0x60] sm:$0xf]
    %v2471 = vld [vmem:[%s3 + $0x64] sm:$0xf]
    %v2472 = vld [vmem:[%s3 + $0x68] sm:$0xf]
    %v2473 = vld [vmem:[%s3 + $0x6c] sm:$0xf]
    %v2474 = vld [vmem:[%s3 + $0x70] sm:$0xf]
    %v2475 = vld [vmem:[%s3 + $0x74] sm:$0xf]
    %v2476 = vld [vmem:[%s3 + $0x78] sm:$0xf]
    %v2477 = vld [vmem:[%s3 + $0x7c] sm:$0xf]
    %v2478 = vld [vmem:[%s3 + $0x80] sm:$0xf]
    %v2479 = vld [vmem:[%s3 + $0x84] sm:$0xf]
    %v2480 = vld [vmem:[%s3 + $0x88] sm:$0xf]
    %v2481 = vld [vmem:[%s3 + $0x8c] sm:$0xf]
    %v2482 = vld [vmem:[%s3 + $0x90] sm:$0xf]
    %v2483 = vld [vmem:[%s3 + $0x94] sm:$0xf]
    %v2484 = vld [vmem:[%s3 + $0x98] sm:$0xf]
    %v2485 = vld [vmem:[%s3 + $0x9c] sm:$0xf]
    %v2486 = vld [vmem:[%s3 + $0xa0] sm:$0xf]
    %v2487 = vld [vmem:[%s3 + $0xa4] sm:$0xf]
    %v2488 = vld [vmem:[%s3 + $0xa8] sm:$0xf]
    %v2489 = vld [vmem:[%s3 + $0xac] sm:$0xf]
    %v2490 = vld [vmem:[%s3 + $0xb0] sm:$0xf]
    %v2491 = vld [vmem:[%s3 + $0xb4] sm:$0xf]
    %v2492 = vld [vmem:[%s3 + $0xb8] sm:$0xf]
    %v2493 = vld [vmem:[%s3 + $0xbc] sm:$0xf]
    %v2542 = vunpack.c.l.b16 %v2446
    %v2543 = vunpack.c.l.b16 %v2447
    %v2544 = vunpack.c.l.b16 %v2448
    %v2545 = vunpack.c.l.b16 %v2449
    %v2546 = vunpack.c.l.b16 %v2450
    %v2547 = vunpack.c.l.b16 %v2451
    %v2548 = vunpack.c.l.b16 %v2452
    %v2549 = vunpack.c.l.b16 %v2453
    %v2550 = vunpack.c.l.b16 %v2454
    %v2551 = vunpack.c.l.b16 %v2455
    %v2552 = vunpack.c.l.b16 %v2456
    %v2553 = vunpack.c.l.b16 %v2457
    %v2554 = vunpack.c.l.b16 %v2458
    %v2555 = vunpack.c.l.b16 %v2459
    %v2556 = vunpack.c.l.b16 %v2460
    %v2557 = vunpack.c.l.b16 %v2461
    %v2558 = vunpack.c.l.b16 %v2462
    %v2559 = vunpack.c.l.b16 %v2463
    %v2560 = vunpack.c.l.b16 %v2464
    %v2561 = vunpack.c.l.b16 %v2465
    %v2562 = vunpack.c.l.b16 %v2466
    %v2563 = vunpack.c.l.b16 %v2467
    %v2564 = vunpack.c.l.b16 %v2468
    %v2565 = vunpack.c.l.b16 %v2469
    %v2566 = vunpack.c.l.b16 %v2470
    %v2567 = vunpack.c.l.b16 %v2471
    %v2568 = vunpack.c.l.b16 %v2472
    %v2569 = vunpack.c.l.b16 %v2473
    %v2570 = vunpack.c.l.b16 %v2474
    %v2571 = vunpack.c.l.b16 %v2475
    %v2572 = vunpack.c.l.b16 %v2476
    %v2573 = vunpack.c.l.b16 %v2477
    %v2574 = vunpack.c.l.b16 %v2478
    %v2575 = vunpack.c.l.b16 %v2479
    %v2576 = vunpack.c.l.b16 %v2480
    %v2577 = vunpack.c.l.b16 %v2481
    %v2578 = vunpack.c.l.b16 %v2482
    %v2579 = vunpack.c.l.b16 %v2483
    %v2580 = vunpack.c.l.b16 %v2484
    %v2581 = vunpack.c.l.b16 %v2485
    %v2582 = vunpack.c.l.b16 %v2486
    %v2583 = vunpack.c.l.b16 %v2487
    %v2584 = vunpack.c.l.b16 %v2488
    %v2585 = vunpack.c.l.b16 %v2489
    %v2586 = vunpack.c.l.b16 %v2490
    %v2587 = vunpack.c.l.b16 %v2491
    %v2588 = vunpack.c.l.b16 %v2492
    %v2589 = vunpack.c.l.b16 %v2493
    %v2590 = vpack.c.b16 %v2543, %v2542
    %v2591 = vpack.c.b16 %v2545, %v2544
    %v2592 = vpack.c.b16 %v2547, %v2546
    %v2593 = vpack.c.b16 %v2549, %v2548
    %v2594 = vpack.c.b16 %v2551, %v2550
    %v2595 = vpack.c.b16 %v2553, %v2552
    %v2596 = vpack.c.b16 %v2555, %v2554
    %v2597 = vpack.c.b16 %v2557, %v2556
    %v2598 = vpack.c.b16 %v2559, %v2558
    %v2599 = vpack.c.b16 %v2561, %v2560
    %v2600 = vpack.c.b16 %v2563, %v2562
    %v2601 = vpack.c.b16 %v2565, %v2564
    %v2602 = vpack.c.b16 %v2567, %v2566
    %v2603 = vpack.c.b16 %v2569, %v2568
    %v2604 = vpack.c.b16 %v2571, %v2570
    %v2605 = vpack.c.b16 %v2573, %v2572
    %v2606 = vpack.c.b16 %v2575, %v2574
    %v2607 = vpack.c.b16 %v2577, %v2576
    %v2608 = vpack.c.b16 %v2579, %v2578
    %v2609 = vpack.c.b16 %v2581, %v2580
    %v2610 = vpack.c.b16 %v2583, %v2582
    %v2611 = vpack.c.b16 %v2585, %v2584
    %v2612 = vpack.c.b16 %v2587, %v2586
    %v2613 = vpack.c.b16 %v2589, %v2588
    %2638 = vmatprep.subr.bf16.mxu0 0
    %2639 = vmatpush1.bf16.msra.mxu0 %v2597
    %2640 = vmatprep.subr.bf16.mxu0 0
    %2641 = vmatpush1.bf16.msra.mxu0 %v2596
    %2642 = vmatprep.subr.bf16.mxu0 0
    %2643 = vmatpush1.bf16.msra.mxu0 %v2595
    %2644 = vmatprep.subr.bf16.mxu0 0
    %2645 = vmatpush1.bf16.msra.mxu0 %v2594
    %2646 = vmatprep.subr.bf16.mxu0 0
    %2647 = vmatpush1.bf16.msra.mxu0 %v2593
    %2648 = vmatprep.subr.bf16.mxu0 0
    %2649 = vmatpush1.bf16.msra.mxu0 %v2592
    %2650 = vmatprep.subr.bf16.mxu0 0
    %2651 = vmatpush1.bf16.msra.mxu0 %v2591
    %2652 = vmatprep.subr.bf16.mxu0 0
    %2653 = vmatpush1.bf16.msra.mxu0 %v2590
    %2654 = vmatprep.subr.bf16.mxu0 0
    %2655 = vmatpush2.bf16.msra.mxu0 %v2605
    %2656 = vmatprep.subr.bf16.mxu0 0
    %2657 = vmatpush2.bf16.msra.mxu0 %v2604
    %2658 = vmatprep.subr.bf16.mxu0 0
    %2659 = vmatpush2.bf16.msra.mxu0 %v2603
    %2660 = vmatprep.subr.bf16.mxu0 0
    %2661 = vmatpush2.bf16.msra.mxu0 %v2602
    %2662 = vmatprep.subr.bf16.mxu0 0
    %2663 = vmatpush2.bf16.msra.mxu0 %v2601
    %2664 = vmatprep.subr.bf16.mxu0 0
    %2665 = vmatpush2.bf16.msra.mxu0 %v2600
    %2666 = vmatprep.subr.bf16.mxu0 0
    %2667 = vmatpush2.bf16.msra.mxu0 %v2599
    %2668 = vmatprep.subr.bf16.mxu0 0
    %2669 = vmatpush2.bf16.msra.mxu0 %v2598
    %2670 = vmatprep.mubr.bf16.mxu0 %v2231
    %2671 = vmatmul.mubr.bf16.gmra.mxu0 %v2230
    %v2672 = vpop.f32.mrf.mxu0
    %v2673 = vadd.f32 0.0, %v2672
    %v2674 = vpop.f32.mrf.mxu0
    %v2675 = vpop.f32.mrf.mxu0
    %v2676 = vadd.f32 0.0, %v2675
    %v2677 = vpop.f32.mrf.mxu0
    %2678 = vmatprep.mubr.bf16.mxu0 %v2243
    %2679 = vmatmul.mubr.bf16.gmra.mxu0 %v2242
    %v2680 = vpop.f32.mrf.mxu0
    %v2681 = vadd.f32 0.0, %v2680
    %v2682 = vpop.f32.mrf.mxu0
    %v2683 = vpop.f32.mrf.mxu0
    %v2684 = vadd.f32 0.0, %v2683
    %v2685 = vpop.f32.mrf.mxu0
    %2686 = vmatprep.mubr.bf16.mxu0 %v2255
    %2687 = vmatmul.mubr.bf16.gmra.mxu0 %v2254
    %v2688 = vpop.f32.mrf.mxu0
    %v2689 = vadd.f32 0.0, %v2688
    %v2690 = vpop.f32.mrf.mxu0
    %v2691 = vpop.f32.mrf.mxu0
    %v2692 = vadd.f32 0.0, %v2691
    %v2693 = vpop.f32.mrf.mxu0
    %2694 = vmatprep.mubr.bf16.mxu0 %v2267
    %2695 = vmatmul.mubr.bf16.gmra.mxu0 %v2266
    %v2696 = vpop.f32.mrf.mxu0
    %v2697 = vadd.f32 0.0, %v2696
    %v2698 = vpop.f32.mrf.mxu0
    %v2699 = vpop.f32.mrf.mxu0
    %v2700 = vadd.f32 0.0, %v2699
    %v2701 = vpop.f32.mrf.mxu0
    %2702 = vmatprep.mubr.bf16.mxu0 %v2279
    %2703 = vmatmul.mubr.bf16.gmra.mxu0 %v2278
    %v2704 = vpop.f32.mrf.mxu0
    %v2705 = vadd.f32 0.0, %v2704
    %v2706 = vpop.f32.mrf.mxu0
    %v2707 = vpop.f32.mrf.mxu0
    %v2708 = vadd.f32 0.0, %v2707
    %v2709 = vpop.f32.mrf.mxu0
    %2710 = vmatprep.mubr.bf16.mxu0 %v2291
    %2711 = vmatmul.mubr.bf16.gmra.mxu0 %v2290
    %v2712 = vpop.f32.mrf.mxu0
    %v2713 = vadd.f32 0.0, %v2712
    %v2714 = vpop.f32.mrf.mxu0
    %v2715 = vpop.f32.mrf.mxu0
    %v2716 = vadd.f32 0.0, %v2715
    %v2717 = vpop.f32.mrf.mxu0
    %2718 = vmatprep.mubr.bf16.mxu0 %v2303
    %2719 = vmatmul.mubr.bf16.gmra.mxu0 %v2302
    %v2720 = vpop.f32.mrf.mxu0
    %v2721 = vadd.f32 0.0, %v2720
    %v2722 = vpop.f32.mrf.mxu0
    %v2723 = vpop.f32.mrf.mxu0
    %v2724 = vadd.f32 0.0, %v2723
    %v2725 = vpop.f32.mrf.mxu0
    %2726 = vmatprep.mubr.bf16.mxu0 %v2315
    %2727 = vmatmul.mubr.bf16.gmra.mxu0 %v2314
    %v2728 = vpop.f32.mrf.mxu0
    %v2729 = vadd.f32 0.0, %v2728
    %v2730 = vpop.f32.mrf.mxu0
    %v2731 = vpop.f32.mrf.mxu0
    %v2732 = vadd.f32 0.0, %v2731
    %v2733 = vpop.f32.mrf.mxu0
    %2734 = vmatprep.mubr.bf16.mxu0 %v2327
    %2735 = vmatmul.mubr.bf16.gmra.mxu0 %v2326
    %v2736 = vpop.f32.mrf.mxu0
    %v2737 = vadd.f32 0.0, %v2736
    %v2738 = vpop.f32.mrf.mxu0
    %v2739 = vpop.f32.mrf.mxu0
    %v2740 = vadd.f32 0.0, %v2739
    %v2741 = vpop.f32.mrf.mxu0
    %2742 = vmatprep.mubr.bf16.mxu0 %v2339
    %2743 = vmatmul.mubr.bf16.gmra.mxu0 %v2338
    %v2744 = vpop.f32.mrf.mxu0
    %v2745 = vadd.f32 0.0, %v2744
    %v2746 = vpop.f32.mrf.mxu0
    %v2747 = vpop.f32.mrf.mxu0
    %v2748 = vadd.f32 0.0, %v2747
    %v2749 = vpop.f32.mrf.mxu0
    %2750 = vmatprep.mubr.bf16.mxu0 %v2351
    %2751 = vmatmul.mubr.bf16.gmra.mxu0 %v2350
    %v2752 = vpop.f32.mrf.mxu0
    %v2753 = vadd.f32 0.0, %v2752
    %v2754 = vpop.f32.mrf.mxu0
    %v2755 = vpop.f32.mrf.mxu0
    %v2756 = vadd.f32 0.0, %v2755
    %v2757 = vpop.f32.mrf.mxu0
    %2758 = vmatprep.mubr.bf16.mxu0 %v2363
    %2759 = vmatmul.mubr.bf16.gmra.mxu0 %v2362
    %v2760 = vpop.f32.mrf.mxu0
    %v2761 = vadd.f32 0.0, %v2760
    %v2762 = vpop.f32.mrf.mxu0
    %v2763 = vpop.f32.mrf.mxu0
    %v2764 = vadd.f32 0.0, %v2763
    %v2765 = vpop.f32.mrf.mxu0
    %2766 = vmatprep.mubr.bf16.mxu0 %v2375
    %2767 = vmatmul.mubr.bf16.gmra.mxu0 %v2374
    %v2768 = vpop.f32.mrf.mxu0
    %v2769 = vadd.f32 0.0, %v2768
    %v2770 = vpop.f32.mrf.mxu0
    %v2771 = vpop.f32.mrf.mxu0
    %v2772 = vadd.f32 0.0, %v2771
    %v2773 = vpop.f32.mrf.mxu0
    %2774 = vmatprep.mubr.bf16.mxu0 %v2387
    %2775 = vmatmul.mubr.bf16.gmra.mxu0 %v2386
    %v2776 = vpop.f32.mrf.mxu0
    %v2777 = vadd.f32 0.0, %v2776
    %v2778 = vpop.f32.mrf.mxu0
    %v2779 = vpop.f32.mrf.mxu0
    %v2780 = vadd.f32 0.0, %v2779
    %v2781 = vpop.f32.mrf.mxu0
    %2782 = vmatprep.mubr.bf16.mxu0 %v2399
    %2783 = vmatmul.mubr.bf16.gmra.mxu0 %v2398
    %v2784 = vpop.f32.mrf.mxu0
    %v2785 = vadd.f32 0.0, %v2784
    %v2786 = vpop.f32.mrf.mxu0
    %v2787 = vpop.f32.mrf.mxu0
    %v2788 = vadd.f32 0.0, %v2787
    %v2789 = vpop.f32.mrf.mxu0
    %2790 = vmatprep.mubr.bf16.mxu0 %v2411
    %2791 = vmatmul.mubr.bf16.gmra.mxu0 %v2410
    %v2792 = vpop.f32.mrf.mxu0
    %v2793 = vadd.f32 0.0, %v2792
    %v2794 = vpop.f32.mrf.mxu0
    %v2795 = vpop.f32.mrf.mxu0
    %v2796 = vadd.f32 0.0, %v2795
    %v2797 = vpop.f32.mrf.mxu0
    %2798 = vmatprep.mubr.bf16.mxu0 %v2423
    %2799 = vmatmul.mubr.bf16.gmra.mxu0 %v2422
    %v2800 = vpop.f32.mrf.mxu0
    %v2801 = vadd.f32 0.0, %v2800
    %v2802 = vpop.f32.mrf.mxu0
    %v2803 = vpop.f32.mrf.mxu0
    %v2804 = vadd.f32 0.0, %v2803
    %v2805 = vpop.f32.mrf.mxu0
    %2806 = vmatprep.mubr.bf16.mxu0 %v2435
    %2807 = vmatmul.mubr.bf16.gmra.mxu0 %v2434
    %v2808 = vpop.f32.mrf.mxu0
    %v2809 = vadd.f32 0.0, %v2808
    %v2810 = vpop.f32.mrf.mxu0
    %v2811 = vpop.f32.mrf.mxu0
    %v2812 = vadd.f32 0.0, %v2811
    %v2813 = vpop.f32.mrf.mxu0
    %2814 = vdwg.mxu0
    %2815 = vmatprep.subr.bf16.mxu0 0
    %2816 = vmatpush1.bf16.msra.mxu0 %v2613
    %2817 = vmatprep.subr.bf16.mxu0 0
    %2818 = vmatpush1.bf16.msra.mxu0 %v2612
    %2819 = vmatprep.subr.bf16.mxu0 0
    %2820 = vmatpush1.bf16.msra.mxu0 %v2611
    %2821 = vmatprep.subr.bf16.mxu0 0
    %2822 = vmatpush1.bf16.msra.mxu0 %v2610
    %2823 = vmatprep.subr.bf16.mxu0 0
    %2824 = vmatpush1.bf16.msra.mxu0 %v2609
    %2825 = vmatprep.subr.bf16.mxu0 0
    %2826 = vmatpush1.bf16.msra.mxu0 %v2608
    %2827 = vmatprep.subr.bf16.mxu0 0
    %2828 = vmatpush1.bf16.msra.mxu0 %v2607
    %2829 = vmatprep.subr.bf16.mxu0 0
    %2830 = vmatpush1.bf16.msra.mxu0 %v2606
    %2831 = vmatprep.subr.bf16.mxu0 0
    %2832 = vmatpush2.bf16.msra.mxu0 0
    %2833 = vmatprep.subr.bf16.mxu0 0
    %2834 = vmatpush2.bf16.msra.mxu0 0
    %2835 = vmatprep.subr.bf16.mxu0 0
    %2836 = vmatpush2.bf16.msra.mxu0 0
    %2837 = vmatprep.subr.bf16.mxu0 0
    %2838 = vmatpush2.bf16.msra.mxu0 0
    %2839 = vmatprep.subr.bf16.mxu0 0
    %2840 = vmatpush2.bf16.msra.mxu0 0
    %2841 = vmatprep.subr.bf16.mxu0 0
    %2842 = vmatpush2.bf16.msra.mxu0 0
    %2843 = vmatprep.subr.bf16.mxu0 0
    %2844 = vmatpush2.bf16.msra.mxu0 0
    %2845 = vmatprep.subr.bf16.mxu0 0
    %2846 = vmatpush2.bf16.msra.mxu0 0
    %2847 = vmatprep.mubr.bf16.mxu0 0
    %2848 = vmatmul.mubr.bf16.gmra.mxu0 %v2232
    %v2849 = vpop.f32.mrf.mxu0
    %v2850 = vadd.f32 %v2673, %v2849
    %v2851 = vpop.f32.mrf.mxu0
    %v2852 = vpop.f32.mrf.mxu0
    %v2853 = vadd.f32 %v2676, %v2852
    %v2854 = vpop.f32.mrf.mxu0
    %2855 = vmatprep.mubr.bf16.mxu0 0
    %2856 = vmatmul.mubr.bf16.gmra.mxu0 %v2244
    %v2857 = vpop.f32.mrf.mxu0
    %v2858 = vadd.f32 %v2681, %v2857
    %v2859 = vpop.f32.mrf.mxu0
    %v2860 = vpop.f32.mrf.mxu0
    %v2861 = vadd.f32 %v2684, %v2860
    %v2862 = vpop.f32.mrf.mxu0
    %2863 = vmatprep.mubr.bf16.mxu0 0
    %2864 = vmatmul.mubr.bf16.gmra.mxu0 %v2256
    %v2865 = vpop.f32.mrf.mxu0
    %v2866 = vadd.f32 %v2689, %v2865
    %v2867 = vpop.f32.mrf.mxu0
    %v2868 = vpop.f32.mrf.mxu0
    %v2869 = vadd.f32 %v2692, %v2868
    %v2870 = vpop.f32.mrf.mxu0
    %2871 = vmatprep.mubr.bf16.mxu0 0
    %2872 = vmatmul.mubr.bf16.gmra.mxu0 %v2268
    %v2873 = vpop.f32.mrf.mxu0
    %v2874 = vadd.f32 %v2697, %v2873
    %v2875 = vpop.f32.mrf.mxu0
    %v2876 = vpop.f32.mrf.mxu0
    %v2877 = vadd.f32 %v2700, %v2876
    %v2878 = vpop.f32.mrf.mxu0
    %2879 = vmatprep.mubr.bf16.mxu0 0
    %2880 = vmatmul.mubr.bf16.gmra.mxu0 %v2280
    %v2881 = vpop.f32.mrf.mxu0
    %v2882 = vadd.f32 %v2705, %v2881
    %v2883 = vpop.f32.mrf.mxu0
    %v2884 = vpop.f32.mrf.mxu0
    %v2885 = vadd.f32 %v2708, %v2884
    %v2886 = vpop.f32.mrf.mxu0
    %2887 = vmatprep.mubr.bf16.mxu0 0
    %2888 = vmatmul.mubr.bf16.gmra.mxu0 %v2292
    %v2889 = vpop.f32.mrf.mxu0
    %v2890 = vadd.f32 %v2713, %v2889
    %v2891 = vpop.f32.mrf.mxu0
    %v2892 = vpop.f32.mrf.mxu0
    %v2893 = vadd.f32 %v2716, %v2892
    %v2894 = vpop.f32.mrf.mxu0
    %2895 = vmatprep.mubr.bf16.mxu0 0
    %2896 = vmatmul.mubr.bf16.gmra.mxu0 %v2304
    %v2897 = vpop.f32.mrf.mxu0
    %v2898 = vadd.f32 %v2721, %v2897
    %v2899 = vpop.f32.mrf.mxu0
    %v2900 = vpop.f32.mrf.mxu0
    %v2901 = vadd.f32 %v2724, %v2900
    %v2902 = vpop.f32.mrf.mxu0
    %2903 = vmatprep.mubr.bf16.mxu0 0
    %2904 = vmatmul.mubr.bf16.gmra.mxu0 %v2316
    %v2905 = vpop.f32.mrf.mxu0
    %v2906 = vadd.f32 %v2729, %v2905
    %v2907 = vpop.f32.mrf.mxu0
    %v2908 = vpop.f32.mrf.mxu0
    %v2909 = vadd.f32 %v2732, %v2908
    %v2910 = vpop.f32.mrf.mxu0
    %2911 = vmatprep.mubr.bf16.mxu0 0
    %2912 = vmatmul.mubr.bf16.gmra.mxu0 %v2328
    %v2913 = vpop.f32.mrf.mxu0
    %v2914 = vadd.f32 %v2737, %v2913
    %v2915 = vpop.f32.mrf.mxu0
    %v2916 = vpop.f32.mrf.mxu0
    %v2917 = vadd.f32 %v2740, %v2916
    %v2918 = vpop.f32.mrf.mxu0
    %2919 = vmatprep.mubr.bf16.mxu0 0
    %2920 = vmatmul.mubr.bf16.gmra.mxu0 %v2340
    %v2921 = vpop.f32.mrf.mxu0
    %v2922 = vadd.f32 %v2745, %v2921
    %v2923 = vpop.f32.mrf.mxu0
    %v2924 = vpop.f32.mrf.mxu0
    %v2925 = vadd.f32 %v2748, %v2924
    %v2926 = vpop.f32.mrf.mxu0
    %2927 = vmatprep.mubr.bf16.mxu0 0
    %2928 = vmatmul.mubr.bf16.gmra.mxu0 %v2352
    %v2929 = vpop.f32.mrf.mxu0
    %v2930 = vadd.f32 %v2753, %v2929
    %v2931 = vpop.f32.mrf.mxu0
    %v2932 = vpop.f32.mrf.mxu0
    %v2933 = vadd.f32 %v2756, %v2932
    %v2934 = vpop.f32.mrf.mxu0
    %2935 = vmatprep.mubr.bf16.mxu0 0
    %2936 = vmatmul.mubr.bf16.gmra.mxu0 %v2364
    %v2937 = vpop.f32.mrf.mxu0
    %v2938 = vadd.f32 %v2761, %v2937
    %v2939 = vpop.f32.mrf.mxu0
    %v2940 = vpop.f32.mrf.mxu0
    %v2941 = vadd.f32 %v2764, %v2940
    %v2942 = vpop.f32.mrf.mxu0
    %2943 = vmatprep.mubr.bf16.mxu0 0
    %2944 = vmatmul.mubr.bf16.gmra.mxu0 %v2376
    %v2945 = vpop.f32.mrf.mxu0
    %v2946 = vadd.f32 %v2769, %v2945
    %v2947 = vpop.f32.mrf.mxu0
    %v2948 = vpop.f32.mrf.mxu0
    %v2949 = vadd.f32 %v2772, %v2948
    %v2950 = vpop.f32.mrf.mxu0
    %2951 = vmatprep.mubr.bf16.mxu0 0
    %2952 = vmatmul.mubr.bf16.gmra.mxu0 %v2388
    %v2953 = vpop.f32.mrf.mxu0
    %v2954 = vadd.f32 %v2777, %v2953
    %v2955 = vpop.f32.mrf.mxu0
    %v2956 = vpop.f32.mrf.mxu0
    %v2957 = vadd.f32 %v2780, %v2956
    %v2958 = vpop.f32.mrf.mxu0
    %2959 = vmatprep.mubr.bf16.mxu0 0
    %2960 = vmatmul.mubr.bf16.gmra.mxu0 %v2400
    %v2961 = vpop.f32.mrf.mxu0
    %v2962 = vadd.f32 %v2785, %v2961
    %v2963 = vpop.f32.mrf.mxu0
    %v2964 = vpop.f32.mrf.mxu0
    %v2965 = vadd.f32 %v2788, %v2964
    %v2966 = vpop.f32.mrf.mxu0
    %2967 = vmatprep.mubr.bf16.mxu0 0
    %2968 = vmatmul.mubr.bf16.gmra.mxu0 %v2412
    %v2969 = vpop.f32.mrf.mxu0
    %v2970 = vadd.f32 %v2793, %v2969
    %v2971 = vpop.f32.mrf.mxu0
    %v2972 = vpop.f32.mrf.mxu0
    %v2973 = vadd.f32 %v2796, %v2972
    %v2974 = vpop.f32.mrf.mxu0
    %2975 = vmatprep.mubr.bf16.mxu0 0
    %2976 = vmatmul.mubr.bf16.gmra.mxu0 %v2424
    %v2977 = vpop.f32.mrf.mxu0
    %v2978 = vadd.f32 %v2801, %v2977
    %v2979 = vpop.f32.mrf.mxu0
    %v2980 = vpop.f32.mrf.mxu0
    %v2981 = vadd.f32 %v2804, %v2980
    %v2982 = vpop.f32.mrf.mxu0
    %2983 = vmatprep.mubr.bf16.mxu0 0
    %2984 = vmatmul.mubr.bf16.gmra.mxu0 %v2436
    %v2985 = vpop.f32.mrf.mxu0
    %v2986 = vadd.f32 %v2809, %v2985
    %v2987 = vpop.f32.mrf.mxu0
    %v2988 = vpop.f32.mrf.mxu0
    %v2989 = vadd.f32 %v2812, %v2988
    %v2990 = vpop.f32.mrf.mxu0
    %2991 = vdwg.mxu0
    %2992 = vmatprep.subr.bf16.mxu0 0
    %2993 = vmatpush1.bf16.msra.mxu0 %v2597
    %2994 = vmatprep.subr.bf16.mxu0 0
    %2995 = vmatpush1.bf16.msra.mxu0 %v2596
    %2996 = vmatprep.subr.bf16.mxu0 0
    %2997 = vmatpush1.bf16.msra.mxu0 %v2595
    %2998 = vmatprep.subr.bf16.mxu0 0
    %2999 = vmatpush1.bf16.msra.mxu0 %v2594
    %3000 = vmatprep.subr.bf16.mxu0 0
    %3001 = vmatpush1.bf16.msra.mxu0 %v2593
    %3002 = vmatprep.subr.bf16.mxu0 0
    %3003 = vmatpush1.bf16.msra.mxu0 %v2592
    %3004 = vmatprep.subr.bf16.mxu0 0
    %3005 = vmatpush1.bf16.msra.mxu0 %v2591
    %3006 = vmatprep.subr.bf16.mxu0 0
    %3007 = vmatpush1.bf16.msra.mxu0 %v2590
    %3008 = vmatprep.subr.bf16.mxu0 0
    %3009 = vmatpush2.bf16.msra.mxu0 %v2605
    %3010 = vmatprep.subr.bf16.mxu0 0
    %3011 = vmatpush2.bf16.msra.mxu0 %v2604
    %3012 = vmatprep.subr.bf16.mxu0 0
    %3013 = vmatpush2.bf16.msra.mxu0 %v2603
    %3014 = vmatprep.subr.bf16.mxu0 0
    %3015 = vmatpush2.bf16.msra.mxu0 %v2602
    %3016 = vmatprep.subr.bf16.mxu0 0
    %3017 = vmatpush2.bf16.msra.mxu0 %v2601
    %3018 = vmatprep.subr.bf16.mxu0 0
    %3019 = vmatpush2.bf16.msra.mxu0 %v2600
    %3020 = vmatprep.subr.bf16.mxu0 0
    %3021 = vmatpush2.bf16.msra.mxu0 %v2599
    %3022 = vmatprep.subr.bf16.mxu0 0
    %3023 = vmatpush2.bf16.msra.mxu0 %v2598
    %3024 = vmatprep.mubr.bf16.mxu0 %v2234
    %3025 = vmatmul.mubr.bf16.gmra.mxu0 %v2233
    %v3026 = vpop.f32.mrf.mxu0
    %v3027 = vadd.f32 0.0, %v3026
    %v3028 = vpop.f32.mrf.mxu0
    %v3029 = vpop.f32.mrf.mxu0
    %v3030 = vadd.f32 0.0, %v3029
    %v3031 = vpop.f32.mrf.mxu0
    %3032 = vmatprep.mubr.bf16.mxu0 %v2246
    %3033 = vmatmul.mubr.bf16.gmra.mxu0 %v2245
    %v3034 = vpop.f32.mrf.mxu0
    %v3035 = vadd.f32 0.0, %v3034
    %v3036 = vpop.f32.mrf.mxu0
    %v3037 = vpop.f32.mrf.mxu0
    %v3038 = vadd.f32 0.0, %v3037
    %v3039 = vpop.f32.mrf.mxu0
    %3040 = vmatprep.mubr.bf16.mxu0 %v2258
    %3041 = vmatmul.mubr.bf16.gmra.mxu0 %v2257
    %v3042 = vpop.f32.mrf.mxu0
    %v3043 = vadd.f32 0.0, %v3042
    %v3044 = vpop.f32.mrf.mxu0
    %v3045 = vpop.f32.mrf.mxu0
    %v3046 = vadd.f32 0.0, %v3045
    %v3047 = vpop.f32.mrf.mxu0
    %3048 = vmatprep.mubr.bf16.mxu0 %v2270
    %3049 = vmatmul.mubr.bf16.gmra.mxu0 %v2269
    %v3050 = vpop.f32.mrf.mxu0
    %v3051 = vadd.f32 0.0, %v3050
    %v3052 = vpop.f32.mrf.mxu0
    %v3053 = vpop.f32.mrf.mxu0
    %v3054 = vadd.f32 0.0, %v3053
    %v3055 = vpop.f32.mrf.mxu0
    %3056 = vmatprep.mubr.bf16.mxu0 %v2282
    %3057 = vmatmul.mubr.bf16.gmra.mxu0 %v2281
    %v3058 = vpop.f32.mrf.mxu0
    %v3059 = vadd.f32 0.0, %v3058
    %v3060 = vpop.f32.mrf.mxu0
    %v3061 = vpop.f32.mrf.mxu0
    %v3062 = vadd.f32 0.0, %v3061
    %v3063 = vpop.f32.mrf.mxu0
    %3064 = vmatprep.mubr.bf16.mxu0 %v2294
    %3065 = vmatmul.mubr.bf16.gmra.mxu0 %v2293
    %v3066 = vpop.f32.mrf.mxu0
    %v3067 = vadd.f32 0.0, %v3066
    %v3068 = vpop.f32.mrf.mxu0
    %v3069 = vpop.f32.mrf.mxu0
    %v3070 = vadd.f32 0.0, %v3069
    %v3071 = vpop.f32.mrf.mxu0
    %3072 = vmatprep.mubr.bf16.mxu0 %v2306
    %3073 = vmatmul.mubr.bf16.gmra.mxu0 %v2305
    %v3074 = vpop.f32.mrf.mxu0
    %v3075 = vadd.f32 0.0, %v3074
    %v3076 = vpop.f32.mrf.mxu0
    %v3077 = vpop.f32.mrf.mxu0
    %v3078 = vadd.f32 0.0, %v3077
    %v3079 = vpop.f32.mrf.mxu0
    %3080 = vmatprep.mubr.bf16.mxu0 %v2318
    %3081 = vmatmul.mubr.bf16.gmra.mxu0 %v2317
    %v3082 = vpop.f32.mrf.mxu0
    %v3083 = vadd.f32 0.0, %v3082
    %v3084 = vpop.f32.mrf.mxu0
    %v3085 = vpop.f32.mrf.mxu0
    %v3086 = vadd.f32 0.0, %v3085
    %v3087 = vpop.f32.mrf.mxu0
    %3088 = vmatprep.mubr.bf16.mxu0 %v2330
    %3089 = vmatmul.mubr.bf16.gmra.mxu0 %v2329
    %v3090 = vpop.f32.mrf.mxu0
    %v3091 = vadd.f32 0.0, %v3090
    %v3092 = vpop.f32.mrf.mxu0
    %v3093 = vpop.f32.mrf.mxu0
    %v3094 = vadd.f32 0.0, %v3093
    %v3095 = vpop.f32.mrf.mxu0
    %3096 = vmatprep.mubr.bf16.mxu0 %v2342
    %3097 = vmatmul.mubr.bf16.gmra.mxu0 %v2341
    %v3098 = vpop.f32.mrf.mxu0
    %v3099 = vadd.f32 0.0, %v3098
    %v3100 = vpop.f32.mrf.mxu0
    %v3101 = vpop.f32.mrf.mxu0
    %v3102 = vadd.f32 0.0, %v3101
    %v3103 = vpop.f32.mrf.mxu0
    %3104 = vmatprep.mubr.bf16.mxu0 %v2354
    %3105 = vmatmul.mubr.bf16.gmra.mxu0 %v2353
    %v3106 = vpop.f32.mrf.mxu0
    %v3107 = vadd.f32 0.0, %v3106
    %v3108 = vpop.f32.mrf.mxu0
    %v3109 = vpop.f32.mrf.mxu0
    %v3110 = vadd.f32 0.0, %v3109
    %v3111 = vpop.f32.mrf.mxu0
    %3112 = vmatprep.mubr.bf16.mxu0 %v2366
    %3113 = vmatmul.mubr.bf16.gmra.mxu0 %v2365
    %v3114 = vpop.f32.mrf.mxu0
    %v3115 = vadd.f32 0.0, %v3114
    %v3116 = vpop.f32.mrf.mxu0
    %v3117 = vpop.f32.mrf.mxu0
    %v3118 = vadd.f32 0.0, %v3117
    %v3119 = vpop.f32.mrf.mxu0
    %3120 = vmatprep.mubr.bf16.mxu0 %v2378
    %3121 = vmatmul.mubr.bf16.gmra.mxu0 %v2377
    %v3122 = vpop.f32.mrf.mxu0
    %v3123 = vadd.f32 0.0, %v3122
    %v3124 = vpop.f32.mrf.mxu0
    %v3125 = vpop.f32.mrf.mxu0
    %v3126 = vadd.f32 0.0, %v3125
    %v3127 = vpop.f32.mrf.mxu0
    %3128 = vmatprep.mubr.bf16.mxu0 %v2390
    %3129 = vmatmul.mubr.bf16.gmra.mxu0 %v2389
    %v3130 = vpop.f32.mrf.mxu0
    %v3131 = vadd.f32 0.0, %v3130
    %v3132 = vpop.f32.mrf.mxu0
    %v3133 = vpop.f32.mrf.mxu0
    %v3134 = vadd.f32 0.0, %v3133
    %v3135 = vpop.f32.mrf.mxu0
    %3136 = vmatprep.mubr.bf16.mxu0 %v2402
    %3137 = vmatmul.mubr.bf16.gmra.mxu0 %v2401
    %v3138 = vpop.f32.mrf.mxu0
    %v3139 = vadd.f32 0.0, %v3138
    %v3140 = vpop.f32.mrf.mxu0
    %v3141 = vpop.f32.mrf.mxu0
    %v3142 = vadd.f32 0.0, %v3141
    %v3143 = vpop.f32.mrf.mxu0
    %3144 = vmatprep.mubr.bf16.mxu0 %v2414
    %3145 = vmatmul.mubr.bf16.gmra.mxu0 %v2413
    %v3146 = vpop.f32.mrf.mxu0
    %v3147 = vadd.f32 0.0, %v3146
    %v3148 = vpop.f32.mrf.mxu0
    %v3149 = vpop.f32.mrf.mxu0
    %v3150 = vadd.f32 0.0, %v3149
    %v3151 = vpop.f32.mrf.mxu0
    %3152 = vmatprep.mubr.bf16.mxu0 %v2426
    %3153 = vmatmul.mubr.bf16.gmra.mxu0 %v2425
    %v3154 = vpop.f32.mrf.mxu0
    %v3155 = vadd.f32 0.0, %v3154
    %v3156 = vpop.f32.mrf.mxu0
    %v3157 = vpop.f32.mrf.mxu0
    %v3158 = vadd.f32 0.0, %v3157
    %v3159 = vpop.f32.mrf.mxu0
    %3160 = vmatprep.mubr.bf16.mxu0 %v2438
    %3161 = vmatmul.mubr.bf16.gmra.mxu0 %v2437
    %v3162 = vpop.f32.mrf.mxu0
    %v3163 = vadd.f32 0.0, %v3162
    %v3164 = vpop.f32.mrf.mxu0
    %v3165 = vpop.f32.mrf.mxu0
    %v3166 = vadd.f32 0.0, %v3165
    %v3167 = vpop.f32.mrf.mxu0
    %3168 = vdwg.mxu0
    %3169 = vmatprep.subr.bf16.mxu0 0
    %3170 = vmatpush1.bf16.msra.mxu0 %v2613
    %3171 = vmatprep.subr.bf16.mxu0 0
    %3172 = vmatpush1.bf16.msra.mxu0 %v2612
    %3173 = vmatprep.subr.bf16.mxu0 0
    %3174 = vmatpush1.bf16.msra.mxu0 %v2611
    %3175 = vmatprep.subr.bf16.mxu0 0
    %3176 = vmatpush1.bf16.msra.mxu0 %v2610
    %3177 = vmatprep.subr.bf16.mxu0 0
    %3178 = vmatpush1.bf16.msra.mxu0 %v2609
    %3179 = vmatprep.subr.bf16.mxu0 0
    %3180 = vmatpush1.bf16.msra.mxu0 %v2608
    %3181 = vmatprep.subr.bf16.mxu0 0
    %3182 = vmatpush1.bf16.msra.mxu0 %v2607
    %3183 = vmatprep.subr.bf16.mxu0 0
    %3184 = vmatpush1.bf16.msra.mxu0 %v2606
    %3185 = vmatprep.subr.bf16.mxu0 0
    %3186 = vmatpush2.bf16.msra.mxu0 0
    %3187 = vmatprep.subr.bf16.mxu0 0
    %3188 = vmatpush2.bf16.msra.mxu0 0
    %3189 = vmatprep.subr.bf16.mxu0 0
    %3190 = vmatpush2.bf16.msra.mxu0 0
    %3191 = vmatprep.subr.bf16.mxu0 0
    %3192 = vmatpush2.bf16.msra.mxu0 0
    %3193 = vmatprep.subr.bf16.mxu0 0
    %3194 = vmatpush2.bf16.msra.mxu0 0
    %3195 = vmatprep.subr.bf16.mxu0 0
    %3196 = vmatpush2.bf16.msra.mxu0 0
    %3197 = vmatprep.subr.bf16.mxu0 0
    %3198 = vmatpush2.bf16.msra.mxu0 0
    %3199 = vmatprep.subr.bf16.mxu0 0
    %3200 = vmatpush2.bf16.msra.mxu0 0
    %3201 = vmatprep.mubr.bf16.mxu0 0
    %3202 = vmatmul.mubr.bf16.gmra.mxu0 %v2235
    %v3203 = vpop.f32.mrf.mxu0
    %v3204 = vadd.f32 %v3027, %v3203
    %v3205 = vpop.f32.mrf.mxu0
    %v3206 = vpop.f32.mrf.mxu0
    %v3207 = vadd.f32 %v3030, %v3206
    %v3208 = vpop.f32.mrf.mxu0
    %3209 = vmatprep.mubr.bf16.mxu0 0
    %3210 = vmatmul.mubr.bf16.gmra.mxu0 %v2247
    %v3211 = vpop.f32.mrf.mxu0
    %v3212 = vadd.f32 %v3035, %v3211
    %v3213 = vpop.f32.mrf.mxu0
    %v3214 = vpop.f32.mrf.mxu0
    %v3215 = vadd.f32 %v3038, %v3214
    %v3216 = vpop.f32.mrf.mxu0
    %3217 = vmatprep.mubr.bf16.mxu0 0
    %3218 = vmatmul.mubr.bf16.gmra.mxu0 %v2259
    %v3219 = vpop.f32.mrf.mxu0
    %v3220 = vadd.f32 %v3043, %v3219
    %v3221 = vpop.f32.mrf.mxu0
    %v3222 = vpop.f32.mrf.mxu0
    %v3223 = vadd.f32 %v3046, %v3222
    %v3224 = vpop.f32.mrf.mxu0
    %3225 = vmatprep.mubr.bf16.mxu0 0
    %3226 = vmatmul.mubr.bf16.gmra.mxu0 %v2271
    %v3227 = vpop.f32.mrf.mxu0
    %v3228 = vadd.f32 %v3051, %v3227
    %v3229 = vpop.f32.mrf.mxu0
    %v3230 = vpop.f32.mrf.mxu0
    %v3231 = vadd.f32 %v3054, %v3230
    %v3232 = vpop.f32.mrf.mxu0
    %3233 = vmatprep.mubr.bf16.mxu0 0
    %3234 = vmatmul.mubr.bf16.gmra.mxu0 %v2283
    %v3235 = vpop.f32.mrf.mxu0
    %v3236 = vadd.f32 %v3059, %v3235
    %v3237 = vpop.f32.mrf.mxu0
    %v3238 = vpop.f32.mrf.mxu0
    %v3239 = vadd.f32 %v3062, %v3238
    %v3240 = vpop.f32.mrf.mxu0
    %3241 = vmatprep.mubr.bf16.mxu0 0
    %3242 = vmatmul.mubr.bf16.gmra.mxu0 %v2295
    %v3243 = vpop.f32.mrf.mxu0
    %v3244 = vadd.f32 %v3067, %v3243
    %v3245 = vpop.f32.mrf.mxu0
    %v3246 = vpop.f32.mrf.mxu0
    %v3247 = vadd.f32 %v3070, %v3246
    %v3248 = vpop.f32.mrf.mxu0
    %3249 = vmatprep.mubr.bf16.mxu0 0
    %3250 = vmatmul.mubr.bf16.gmra.mxu0 %v2307
    %v3251 = vpop.f32.mrf.mxu0
    %v3252 = vadd.f32 %v3075, %v3251
    %v3253 = vpop.f32.mrf.mxu0
    %v3254 = vpop.f32.mrf.mxu0
    %v3255 = vadd.f32 %v3078, %v3254
    %v3256 = vpop.f32.mrf.mxu0
    %3257 = vmatprep.mubr.bf16.mxu0 0
    %3258 = vmatmul.mubr.bf16.gmra.mxu0 %v2319
    %v3259 = vpop.f32.mrf.mxu0
    %v3260 = vadd.f32 %v3083, %v3259
    %v3261 = vpop.f32.mrf.mxu0
    %v3262 = vpop.f32.mrf.mxu0
    %v3263 = vadd.f32 %v3086, %v3262
    %v3264 = vpop.f32.mrf.mxu0
    %3265 = vmatprep.mubr.bf16.mxu0 0
    %3266 = vmatmul.mubr.bf16.gmra.mxu0 %v2331
    %v3267 = vpop.f32.mrf.mxu0
    %v3268 = vadd.f32 %v3091, %v3267
    %v3269 = vpop.f32.mrf.mxu0
    %v3270 = vpop.f32.mrf.mxu0
    %v3271 = vadd.f32 %v3094, %v3270
    %v3272 = vpop.f32.mrf.mxu0
    %3273 = vmatprep.mubr.bf16.mxu0 0
    %3274 = vmatmul.mubr.bf16.gmra.mxu0 %v2343
    %v3275 = vpop.f32.mrf.mxu0
    %v3276 = vadd.f32 %v3099, %v3275
    %v3277 = vpop.f32.mrf.mxu0
    %v3278 = vpop.f32.mrf.mxu0
    %v3279 = vadd.f32 %v3102, %v3278
    %v3280 = vpop.f32.mrf.mxu0
    %3281 = vmatprep.mubr.bf16.mxu0 0
    %3282 = vmatmul.mubr.bf16.gmra.mxu0 %v2355
    %v3283 = vpop.f32.mrf.mxu0
    %v3284 = vadd.f32 %v3107, %v3283
    %v3285 = vpop.f32.mrf.mxu0
    %v3286 = vpop.f32.mrf.mxu0
    %v3287 = vadd.f32 %v3110, %v3286
    %v3288 = vpop.f32.mrf.mxu0
    %3289 = vmatprep.mubr.bf16.mxu0 0
    %3290 = vmatmul.mubr.bf16.gmra.mxu0 %v2367
    %v3291 = vpop.f32.mrf.mxu0
    %v3292 = vadd.f32 %v3115, %v3291
    %v3293 = vpop.f32.mrf.mxu0
    %v3294 = vpop.f32.mrf.mxu0
    %v3295 = vadd.f32 %v3118, %v3294
    %v3296 = vpop.f32.mrf.mxu0
    %3297 = vmatprep.mubr.bf16.mxu0 0
    %3298 = vmatmul.mubr.bf16.gmra.mxu0 %v2379
    %v3299 = vpop.f32.mrf.mxu0
    %v3300 = vadd.f32 %v3123, %v3299
    %v3301 = vpop.f32.mrf.mxu0
    %v3302 = vpop.f32.mrf.mxu0
    %v3303 = vadd.f32 %v3126, %v3302
    %v3304 = vpop.f32.mrf.mxu0
    %3305 = vmatprep.mubr.bf16.mxu0 0
    %3306 = vmatmul.mubr.bf16.gmra.mxu0 %v2391
    %v3307 = vpop.f32.mrf.mxu0
    %v3308 = vadd.f32 %v3131, %v3307
    %v3309 = vpop.f32.mrf.mxu0
    %v3310 = vpop.f32.mrf.mxu0
    %v3311 = vadd.f32 %v3134, %v3310
    %v3312 = vpop.f32.mrf.mxu0
    %3313 = vmatprep.mubr.bf16.mxu0 0
    %3314 = vmatmul.mubr.bf16.gmra.mxu0 %v2403
    %v3315 = vpop.f32.mrf.mxu0
    %v3316 = vadd.f32 %v3139, %v3315
    %v3317 = vpop.f32.mrf.mxu0
    %v3318 = vpop.f32.mrf.mxu0
    %v3319 = vadd.f32 %v3142, %v3318
    %v3320 = vpop.f32.mrf.mxu0
    %3321 = vmatprep.mubr.bf16.mxu0 0
    %3322 = vmatmul.mubr.bf16.gmra.mxu0 %v2415
    %v3323 = vpop.f32.mrf.mxu0
    %v3324 = vadd.f32 %v3147, %v3323
    %v3325 = vpop.f32.mrf.mxu0
    %v3326 = vpop.f32.mrf.mxu0
    %v3327 = vadd.f32 %v3150, %v3326
    %v3328 = vpop.f32.mrf.mxu0
    %3329 = vmatprep.mubr.bf16.mxu0 0
    %3330 = vmatmul.mubr.bf16.gmra.mxu0 %v2427
    %v3331 = vpop.f32.mrf.mxu0
    %v3332 = vadd.f32 %v3155, %v3331
    %v3333 = vpop.f32.mrf.mxu0
    %v3334 = vpop.f32.mrf.mxu0
    %v3335 = vadd.f32 %v3158, %v3334
    %v3336 = vpop.f32.mrf.mxu0
    %3337 = vmatprep.mubr.bf16.mxu0 0
    %3338 = vmatmul.mubr.bf16.gmra.mxu0 %v2439
    %v3339 = vpop.f32.mrf.mxu0
    %v3340 = vadd.f32 %v3163, %v3339
    %v3341 = vpop.f32.mrf.mxu0
    %v3342 = vpop.f32.mrf.mxu0
    %v3343 = vadd.f32 %v3166, %v3342
    %v3344 = vpop.f32.mrf.mxu0
    %3345 = vdwg.mxu0
    %v3346 = vmax.f32 %v2850, %v3204
    %v3347 = vmax.f32 %v2853, %v3207
    %v3348 = vmax.f32 %v2858, %v3212
    %v3349 = vmax.f32 %v2861, %v3215
    %v3350 = vmax.f32 %v2866, %v3220
    %v3351 = vmax.f32 %v2869, %v3223
    %v3352 = vmax.f32 %v2874, %v3228
    %v3353 = vmax.f32 %v2877, %v3231
    %v3354 = vmax.f32 %v2882, %v3236
    %v3355 = vmax.f32 %v2885, %v3239
    %v3356 = vmax.f32 %v2890, %v3244
    %v3357 = vmax.f32 %v2893, %v3247
    %v3358 = vmax.f32 %v2898, %v3252
    %v3359 = vmax.f32 %v2901, %v3255
    %v3360 = vmax.f32 %v2906, %v3260
    %v3361 = vmax.f32 %v2909, %v3263
    %v3362 = vmax.f32 %v2914, %v3268
    %v3363 = vmax.f32 %v2917, %v3271
    %v3364 = vmax.f32 %v2922, %v3276
    %v3365 = vmax.f32 %v2925, %v3279
    %v3366 = vmax.f32 %v2930, %v3284
    %v3367 = vmax.f32 %v2933, %v3287
    %v3368 = vmax.f32 %v2938, %v3292
    %v3369 = vmax.f32 %v2941, %v3295
    %v3370 = vmax.f32 %v2946, %v3300
    %v3371 = vmax.f32 %v2949, %v3303
    %v3372 = vmax.f32 %v2954, %v3308
    %v3373 = vmax.f32 %v2957, %v3311
    %v3374 = vmax.f32 %v2962, %v3316
    %v3375 = vmax.f32 %v2965, %v3319
    %v3376 = vmax.f32 %v2970, %v3324
    %v3377 = vmax.f32 %v2973, %v3327
    %v3378 = vmax.f32 %v2978, %v3332
    %v3379 = vmax.f32 %v2981, %v3335
    %v3380 = vmax.f32 %v2986, %v3340
    %v3381 = vmax.f32 %v2989, %v3343
    %3382 = vmatprep.subr.bf16.mxu0 0
    %3383 = vmatpush1.bf16.msra.mxu0 %v2597
    %3384 = vmatprep.subr.bf16.mxu0 0
    %3385 = vmatpush1.bf16.msra.mxu0 %v2596
    %3386 = vmatprep.subr.bf16.mxu0 0
    %3387 = vmatpush1.bf16.msra.mxu0 %v2595
    %3388 = vmatprep.subr.bf16.mxu0 0
    %3389 = vmatpush1.bf16.msra.mxu0 %v2594
    %3390 = vmatprep.subr.bf16.mxu0 0
    %3391 = vmatpush1.bf16.msra.mxu0 %v2593
    %3392 = vmatprep.subr.bf16.mxu0 0
    %3393 = vmatpush1.bf16.msra.mxu0 %v2592
    %3394 = vmatprep.subr.bf16.mxu0 0
    %3395 = vmatpush1.bf16.msra.mxu0 %v2591
    %3396 = vmatprep.subr.bf16.mxu0 0
    %3397 = vmatpush1.bf16.msra.mxu0 %v2590
    %3398 = vmatprep.subr.bf16.mxu0 0
    %3399 = vmatpush2.bf16.msra.mxu0 %v2605
    %3400 = vmatprep.subr.bf16.mxu0 0
    %3401 = vmatpush2.bf16.msra.mxu0 %v2604
    %3402 = vmatprep.subr.bf16.mxu0 0
    %3403 = vmatpush2.bf16.msra.mxu0 %v2603
    %3404 = vmatprep.subr.bf16.mxu0 0
    %3405 = vmatpush2.bf16.msra.mxu0 %v2602
    %3406 = vmatprep.subr.bf16.mxu0 0
    %3407 = vmatpush2.bf16.msra.mxu0 %v2601
    %3408 = vmatprep.subr.bf16.mxu0 0
    %3409 = vmatpush2.bf16.msra.mxu0 %v2600
    %3410 = vmatprep.subr.bf16.mxu0 0
    %3411 = vmatpush2.bf16.msra.mxu0 %v2599
    %3412 = vmatprep.subr.bf16.mxu0 0
    %3413 = vmatpush2.bf16.msra.mxu0 %v2598
    %3414 = vmatprep.mubr.bf16.mxu0 %v2237
    %3415 = vmatmul.mubr.bf16.gmra.mxu0 %v2236
    %v3416 = vpop.f32.mrf.mxu0
    %v3417 = vadd.f32 0.0, %v3416
    %v3418 = vpop.f32.mrf.mxu0
    %v3419 = vpop.f32.mrf.mxu0
    %v3420 = vadd.f32 0.0, %v3419
    %v3421 = vpop.f32.mrf.mxu0
    %3422 = vmatprep.mubr.bf16.mxu0 %v2249
    %3423 = vmatmul.mubr.bf16.gmra.mxu0 %v2248
    %v3424 = vpop.f32.mrf.mxu0
    %v3425 = vadd.f32 0.0, %v3424
    %v3426 = vpop.f32.mrf.mxu0
    %v3427 = vpop.f32.mrf.mxu0
    %v3428 = vadd.f32 0.0, %v3427
    %v3429 = vpop.f32.mrf.mxu0
    %3430 = vmatprep.mubr.bf16.mxu0 %v2261
    %3431 = vmatmul.mubr.bf16.gmra.mxu0 %v2260
    %v3432 = vpop.f32.mrf.mxu0
    %v3433 = vadd.f32 0.0, %v3432
    %v3434 = vpop.f32.mrf.mxu0
    %v3435 = vpop.f32.mrf.mxu0
    %v3436 = vadd.f32 0.0, %v3435
    %v3437 = vpop.f32.mrf.mxu0
    %3438 = vmatprep.mubr.bf16.mxu0 %v2273
    %3439 = vmatmul.mubr.bf16.gmra.mxu0 %v2272
    %v3440 = vpop.f32.mrf.mxu0
    %v3441 = vadd.f32 0.0, %v3440
    %v3442 = vpop.f32.mrf.mxu0
    %v3443 = vpop.f32.mrf.mxu0
    %v3444 = vadd.f32 0.0, %v3443
    %v3445 = vpop.f32.mrf.mxu0
    %3446 = vmatprep.mubr.bf16.mxu0 %v2285
    %3447 = vmatmul.mubr.bf16.gmra.mxu0 %v2284
    %v3448 = vpop.f32.mrf.mxu0
    %v3449 = vadd.f32 0.0, %v3448
    %v3450 = vpop.f32.mrf.mxu0
    %v3451 = vpop.f32.mrf.mxu0
    %v3452 = vadd.f32 0.0, %v3451
    %v3453 = vpop.f32.mrf.mxu0
    %3454 = vmatprep.mubr.bf16.mxu0 %v2297
    %3455 = vmatmul.mubr.bf16.gmra.mxu0 %v2296
    %v3456 = vpop.f32.mrf.mxu0
    %v3457 = vadd.f32 0.0, %v3456
    %v3458 = vpop.f32.mrf.mxu0
    %v3459 = vpop.f32.mrf.mxu0
    %v3460 = vadd.f32 0.0, %v3459
    %v3461 = vpop.f32.mrf.mxu0
    %3462 = vmatprep.mubr.bf16.mxu0 %v2309
    %3463 = vmatmul.mubr.bf16.gmra.mxu0 %v2308
    %v3464 = vpop.f32.mrf.mxu0
    %v3465 = vadd.f32 0.0, %v3464
    %v3466 = vpop.f32.mrf.mxu0
    %v3467 = vpop.f32.mrf.mxu0
    %v3468 = vadd.f32 0.0, %v3467
    %v3469 = vpop.f32.mrf.mxu0
    %3470 = vmatprep.mubr.bf16.mxu0 %v2321
    %3471 = vmatmul.mubr.bf16.gmra.mxu0 %v2320
    %v3472 = vpop.f32.mrf.mxu0
    %v3473 = vadd.f32 0.0, %v3472
    %v3474 = vpop.f32.mrf.mxu0
    %v3475 = vpop.f32.mrf.mxu0
    %v3476 = vadd.f32 0.0, %v3475
    %v3477 = vpop.f32.mrf.mxu0
    %3478 = vmatprep.mubr.bf16.mxu0 %v2333
    %3479 = vmatmul.mubr.bf16.gmra.mxu0 %v2332
    %v3480 = vpop.f32.mrf.mxu0
    %v3481 = vadd.f32 0.0, %v3480
    %v3482 = vpop.f32.mrf.mxu0
    %v3483 = vpop.f32.mrf.mxu0
    %v3484 = vadd.f32 0.0, %v3483
    %v3485 = vpop.f32.mrf.mxu0
    %3486 = vmatprep.mubr.bf16.mxu0 %v2345
    %3487 = vmatmul.mubr.bf16.gmra.mxu0 %v2344
    %v3488 = vpop.f32.mrf.mxu0
    %v3489 = vadd.f32 0.0, %v3488
    %v3490 = vpop.f32.mrf.mxu0
    %v3491 = vpop.f32.mrf.mxu0
    %v3492 = vadd.f32 0.0, %v3491
    %v3493 = vpop.f32.mrf.mxu0
    %3494 = vmatprep.mubr.bf16.mxu0 %v2357
    %3495 = vmatmul.mubr.bf16.gmra.mxu0 %v2356
    %v3496 = vpop.f32.mrf.mxu0
    %v3497 = vadd.f32 0.0, %v3496
    %v3498 = vpop.f32.mrf.mxu0
    %v3499 = vpop.f32.mrf.mxu0
    %v3500 = vadd.f32 0.0, %v3499
    %v3501 = vpop.f32.mrf.mxu0
    %3502 = vmatprep.mubr.bf16.mxu0 %v2369
    %3503 = vmatmul.mubr.bf16.gmra.mxu0 %v2368
    %v3504 = vpop.f32.mrf.mxu0
    %v3505 = vadd.f32 0.0, %v3504
    %v3506 = vpop.f32.mrf.mxu0
    %v3507 = vpop.f32.mrf.mxu0
    %v3508 = vadd.f32 0.0, %v3507
    %v3509 = vpop.f32.mrf.mxu0
    %3510 = vmatprep.mubr.bf16.mxu0 %v2381
    %3511 = vmatmul.mubr.bf16.gmra.mxu0 %v2380
    %v3512 = vpop.f32.mrf.mxu0
    %v3513 = vadd.f32 0.0, %v3512
    %v3514 = vpop.f32.mrf.mxu0
    %v3515 = vpop.f32.mrf.mxu0
    %v3516 = vadd.f32 0.0, %v3515
    %v3517 = vpop.f32.mrf.mxu0
    %3518 = vmatprep.mubr.bf16.mxu0 %v2393
    %3519 = vmatmul.mubr.bf16.gmra.mxu0 %v2392
    %v3520 = vpop.f32.mrf.mxu0
    %v3521 = vadd.f32 0.0, %v3520
    %v3522 = vpop.f32.mrf.mxu0
    %v3523 = vpop.f32.mrf.mxu0
    %v3524 = vadd.f32 0.0, %v3523
    %v3525 = vpop.f32.mrf.mxu0
    %3526 = vmatprep.mubr.bf16.mxu0 %v2405
    %3527 = vmatmul.mubr.bf16.gmra.mxu0 %v2404
    %v3528 = vpop.f32.mrf.mxu0
    %v3529 = vadd.f32 0.0, %v3528
    %v3530 = vpop.f32.mrf.mxu0
    %v3531 = vpop.f32.mrf.mxu0
    %v3532 = vadd.f32 0.0, %v3531
    %v3533 = vpop.f32.mrf.mxu0
    %3534 = vmatprep.mubr.bf16.mxu0 %v2417
    %3535 = vmatmul.mubr.bf16.gmra.mxu0 %v2416
    %v3536 = vpop.f32.mrf.mxu0
    %v3537 = vadd.f32 0.0, %v3536
    %v3538 = vpop.f32.mrf.mxu0
    %v3539 = vpop.f32.mrf.mxu0
    %v3540 = vadd.f32 0.0, %v3539
    %v3541 = vpop.f32.mrf.mxu0
    %3542 = vmatprep.mubr.bf16.mxu0 %v2429
    %3543 = vmatmul.mubr.bf16.gmra.mxu0 %v2428
    %v3544 = vpop.f32.mrf.mxu0
    %v3545 = vadd.f32 0.0, %v3544
    %v3546 = vpop.f32.mrf.mxu0
    %v3547 = vpop.f32.mrf.mxu0
    %v3548 = vadd.f32 0.0, %v3547
    %v3549 = vpop.f32.mrf.mxu0
    %3550 = vmatprep.mubr.bf16.mxu0 %v2441
    %3551 = vmatmul.mubr.bf16.gmra.mxu0 %v2440
    %v3552 = vpop.f32.mrf.mxu0
    %v3553 = vadd.f32 0.0, %v3552
    %v3554 = vpop.f32.mrf.mxu0
    %v3555 = vpop.f32.mrf.mxu0
    %v3556 = vadd.f32 0.0, %v3555
    %v3557 = vpop.f32.mrf.mxu0
    %3558 = vdwg.mxu0
    %3559 = vmatprep.subr.bf16.mxu0 0
    %3560 = vmatpush1.bf16.msra.mxu0 %v2613
    %3561 = vmatprep.subr.bf16.mxu0 0
    %3562 = vmatpush1.bf16.msra.mxu0 %v2612
    %3563 = vmatprep.subr.bf16.mxu0 0
    %3564 = vmatpush1.bf16.msra.mxu0 %v2611
    %3565 = vmatprep.subr.bf16.mxu0 0
    %3566 = vmatpush1.bf16.msra.mxu0 %v2610
    %3567 = vmatprep.subr.bf16.mxu0 0
    %3568 = vmatpush1.bf16.msra.mxu0 %v2609
    %3569 = vmatprep.subr.bf16.mxu0 0
    %3570 = vmatpush1.bf16.msra.mxu0 %v2608
    %3571 = vmatprep.subr.bf16.mxu0 0
    %3572 = vmatpush1.bf16.msra.mxu0 %v2607
    %3573 = vmatprep.subr.bf16.mxu0 0
    %3574 = vmatpush1.bf16.msra.mxu0 %v2606
    %3575 = vmatprep.subr.bf16.mxu0 0
    %3576 = vmatpush2.bf16.msra.mxu0 0
    %3577 = vmatprep.subr.bf16.mxu0 0
    %3578 = vmatpush2.bf16.msra.mxu0 0
    %3579 = vmatprep.subr.bf16.mxu0 0
    %3580 = vmatpush2.bf16.msra.mxu0 0
    %3581 = vmatprep.subr.bf16.mxu0 0
    %3582 = vmatpush2.bf16.msra.mxu0 0
    %3583 = vmatprep.subr.bf16.mxu0 0
    %3584 = vmatpush2.bf16.msra.mxu0 0
    %3585 = vmatprep.subr.bf16.mxu0 0
    %3586 = vmatpush2.bf16.msra.mxu0 0
    %3587 = vmatprep.subr.bf16.mxu0 0
    %3588 = vmatpush2.bf16.msra.mxu0 0
    %3589 = vmatprep.subr.bf16.mxu0 0
    %3590 = vmatpush2.bf16.msra.mxu0 0
    %3591 = vmatprep.mubr.bf16.mxu0 0
    %3592 = vmatmul.mubr.bf16.gmra.mxu0 %v2238
    %v3593 = vpop.f32.mrf.mxu0
    %v3594 = vadd.f32 %v3417, %v3593
    %v3595 = vpop.f32.mrf.mxu0
    %v3596 = vpop.f32.mrf.mxu0
    %v3597 = vadd.f32 %v3420, %v3596
    %v3598 = vpop.f32.mrf.mxu0
    %3599 = vmatprep.mubr.bf16.mxu0 0
    %3600 = vmatmul.mubr.bf16.gmra.mxu0 %v2250
    %v3601 = vpop.f32.mrf.mxu0
    %v3602 = vadd.f32 %v3425, %v3601
    %v3603 = vpop.f32.mrf.mxu0
    %v3604 = vpop.f32.mrf.mxu0
    %v3605 = vadd.f32 %v3428, %v3604
    %v3606 = vpop.f32.mrf.mxu0
    %3607 = vmatprep.mubr.bf16.mxu0 0
    %3608 = vmatmul.mubr.bf16.gmra.mxu0 %v2262
    %v3609 = vpop.f32.mrf.mxu0
    %v3610 = vadd.f32 %v3433, %v3609
    %v3611 = vpop.f32.mrf.mxu0
    %v3612 = vpop.f32.mrf.mxu0
    %v3613 = vadd.f32 %v3436, %v3612
    %v3614 = vpop.f32.mrf.mxu0
    %3615 = vmatprep.mubr.bf16.mxu0 0
    %3616 = vmatmul.mubr.bf16.gmra.mxu0 %v2274
    %v3617 = vpop.f32.mrf.mxu0
    %v3618 = vadd.f32 %v3441, %v3617
    %v3619 = vpop.f32.mrf.mxu0
    %v3620 = vpop.f32.mrf.mxu0
    %v3621 = vadd.f32 %v3444, %v3620
    %v3622 = vpop.f32.mrf.mxu0
    %3623 = vmatprep.mubr.bf16.mxu0 0
    %3624 = vmatmul.mubr.bf16.gmra.mxu0 %v2286
    %v3625 = vpop.f32.mrf.mxu0
    %v3626 = vadd.f32 %v3449, %v3625
    %v3627 = vpop.f32.mrf.mxu0
    %v3628 = vpop.f32.mrf.mxu0
    %v3629 = vadd.f32 %v3452, %v3628
    %v3630 = vpop.f32.mrf.mxu0
    %3631 = vmatprep.mubr.bf16.mxu0 0
    %3632 = vmatmul.mubr.bf16.gmra.mxu0 %v2298
    %v3633 = vpop.f32.mrf.mxu0
    %v3634 = vadd.f32 %v3457, %v3633
    %v3635 = vpop.f32.mrf.mxu0
    %v3636 = vpop.f32.mrf.mxu0
    %v3637 = vadd.f32 %v3460, %v3636
    %v3638 = vpop.f32.mrf.mxu0
    %3639 = vmatprep.mubr.bf16.mxu0 0
    %3640 = vmatmul.mubr.bf16.gmra.mxu0 %v2310
    %v3641 = vpop.f32.mrf.mxu0
    %v3642 = vadd.f32 %v3465, %v3641
    %v3643 = vpop.f32.mrf.mxu0
    %v3644 = vpop.f32.mrf.mxu0
    %v3645 = vadd.f32 %v3468, %v3644
    %v3646 = vpop.f32.mrf.mxu0
    %3647 = vmatprep.mubr.bf16.mxu0 0
    %3648 = vmatmul.mubr.bf16.gmra.mxu0 %v2322
    %v3649 = vpop.f32.mrf.mxu0
    %v3650 = vadd.f32 %v3473, %v3649
    %v3651 = vpop.f32.mrf.mxu0
    %v3652 = vpop.f32.mrf.mxu0
    %v3653 = vadd.f32 %v3476, %v3652
    %v3654 = vpop.f32.mrf.mxu0
    %3655 = vmatprep.mubr.bf16.mxu0 0
    %3656 = vmatmul.mubr.bf16.gmra.mxu0 %v2334
    %v3657 = vpop.f32.mrf.mxu0
    %v3658 = vadd.f32 %v3481, %v3657
    %v3659 = vpop.f32.mrf.mxu0
    %v3660 = vpop.f32.mrf.mxu0
    %v3661 = vadd.f32 %v3484, %v3660
    %v3662 = vpop.f32.mrf.mxu0
    %3663 = vmatprep.mubr.bf16.mxu0 0
    %3664 = vmatmul.mubr.bf16.gmra.mxu0 %v2346
    %v3665 = vpop.f32.mrf.mxu0
    %v3666 = vadd.f32 %v3489, %v3665
    %v3667 = vpop.f32.mrf.mxu0
    %v3668 = vpop.f32.mrf.mxu0
    %v3669 = vadd.f32 %v3492, %v3668
    %v3670 = vpop.f32.mrf.mxu0
    %3671 = vmatprep.mubr.bf16.mxu0 0
    %3672 = vmatmul.mubr.bf16.gmra.mxu0 %v2358
    %v3673 = vpop.f32.mrf.mxu0
    %v3674 = vadd.f32 %v3497, %v3673
    %v3675 = vpop.f32.mrf.mxu0
    %v3676 = vpop.f32.mrf.mxu0
    %v3677 = vadd.f32 %v3500, %v3676
    %v3678 = vpop.f32.mrf.mxu0
    %3679 = vmatprep.mubr.bf16.mxu0 0
    %3680 = vmatmul.mubr.bf16.gmra.mxu0 %v2370
    %v3681 = vpop.f32.mrf.mxu0
    %v3682 = vadd.f32 %v3505, %v3681
    %v3683 = vpop.f32.mrf.mxu0
    %v3684 = vpop.f32.mrf.mxu0
    %v3685 = vadd.f32 %v3508, %v3684
    %v3686 = vpop.f32.mrf.mxu0
    %3687 = vmatprep.mubr.bf16.mxu0 0
    %3688 = vmatmul.mubr.bf16.gmra.mxu0 %v2382
    %v3689 = vpop.f32.mrf.mxu0
    %v3690 = vadd.f32 %v3513, %v3689
    %v3691 = vpop.f32.mrf.mxu0
    %v3692 = vpop.f32.mrf.mxu0
    %v3693 = vadd.f32 %v3516, %v3692
    %v3694 = vpop.f32.mrf.mxu0
    %3695 = vmatprep.mubr.bf16.mxu0 0
    %3696 = vmatmul.mubr.bf16.gmra.mxu0 %v2394
    %v3697 = vpop.f32.mrf.mxu0
    %v3698 = vadd.f32 %v3521, %v3697
    %v3699 = vpop.f32.mrf.mxu0
    %v3700 = vpop.f32.mrf.mxu0
    %v3701 = vadd.f32 %v3524, %v3700
    %v3702 = vpop.f32.mrf.mxu0
    %3703 = vmatprep.mubr.bf16.mxu0 0
    %3704 = vmatmul.mubr.bf16.gmra.mxu0 %v2406
    %v3705 = vpop.f32.mrf.mxu0
    %v3706 = vadd.f32 %v3529, %v3705
    %v3707 = vpop.f32.mrf.mxu0
    %v3708 = vpop.f32.mrf.mxu0
    %v3709 = vadd.f32 %v3532, %v3708
    %v3710 = vpop.f32.mrf.mxu0
    %3711 = vmatprep.mubr.bf16.mxu0 0
    %3712 = vmatmul.mubr.bf16.gmra.mxu0 %v2418
    %v3713 = vpop.f32.mrf.mxu0
    %v3714 = vadd.f32 %v3537, %v3713
    %v3715 = vpop.f32.mrf.mxu0
    %v3716 = vpop.f32.mrf.mxu0
    %v3717 = vadd.f32 %v3540, %v3716
    %v3718 = vpop.f32.mrf.mxu0
    %3719 = vmatprep.mubr.bf16.mxu0 0
    %3720 = vmatmul.mubr.bf16.gmra.mxu0 %v2430
    %v3721 = vpop.f32.mrf.mxu0
    %v3722 = vadd.f32 %v3545, %v3721
    %v3723 = vpop.f32.mrf.mxu0
    %v3724 = vpop.f32.mrf.mxu0
    %v3725 = vadd.f32 %v3548, %v3724
    %v3726 = vpop.f32.mrf.mxu0
    %3727 = vmatprep.mubr.bf16.mxu0 0
    %3728 = vmatmul.mubr.bf16.gmra.mxu0 %v2442
    %v3729 = vpop.f32.mrf.mxu0
    %v3730 = vadd.f32 %v3553, %v3729
    %v3731 = vpop.f32.mrf.mxu0
    %v3732 = vpop.f32.mrf.mxu0
    %v3733 = vadd.f32 %v3556, %v3732
    %v3734 = vpop.f32.mrf.mxu0
    %3735 = vdwg.mxu0
    %v3736 = vmax.f32 %v3346, %v3594
    %v3737 = vmax.f32 %v3347, %v3597
    %v3738 = vmax.f32 %v3348, %v3602
    %v3739 = vmax.f32 %v3349, %v3605
    %v3740 = vmax.f32 %v3350, %v3610
    %v3741 = vmax.f32 %v3351, %v3613
    %v3742 = vmax.f32 %v3352, %v3618
    %v3743 = vmax.f32 %v3353, %v3621
    %v3744 = vmax.f32 %v3354, %v3626
    %v3745 = vmax.f32 %v3355, %v3629
    %v3746 = vmax.f32 %v3356, %v3634
    %v3747 = vmax.f32 %v3357, %v3637
    %v3748 = vmax.f32 %v3358, %v3642
    %v3749 = vmax.f32 %v3359, %v3645
    %v3750 = vmax.f32 %v3360, %v3650
    %v3751 = vmax.f32 %v3361, %v3653
    %v3752 = vmax.f32 %v3362, %v3658
    %v3753 = vmax.f32 %v3363, %v3661
    %v3754 = vmax.f32 %v3364, %v3666
    %v3755 = vmax.f32 %v3365, %v3669
    %v3756 = vmax.f32 %v3366, %v3674
    %v3757 = vmax.f32 %v3367, %v3677
    %v3758 = vmax.f32 %v3368, %v3682
    %v3759 = vmax.f32 %v3369, %v3685
    %v3760 = vmax.f32 %v3370, %v3690
    %v3761 = vmax.f32 %v3371, %v3693
    %v3762 = vmax.f32 %v3372, %v3698
    %v3763 = vmax.f32 %v3373, %v3701
    %v3764 = vmax.f32 %v3374, %v3706
    %v3765 = vmax.f32 %v3375, %v3709
    %v3766 = vmax.f32 %v3376, %v3714
    %v3767 = vmax.f32 %v3377, %v3717
    %v3768 = vmax.f32 %v3378, %v3722
    %v3769 = vmax.f32 %v3379, %v3725
    %v3770 = vmax.f32 %v3380, %v3730
    %v3771 = vmax.f32 %v3381, %v3733
    %3772 = vmatprep.subr.bf16.mxu0 0
    %3773 = vmatpush1.bf16.msra.mxu0 %v2597
    %3774 = vmatprep.subr.bf16.mxu0 0
    %3775 = vmatpush1.bf16.msra.mxu0 %v2596
    %3776 = vmatprep.subr.bf16.mxu0 0
    %3777 = vmatpush1.bf16.msra.mxu0 %v2595
    %3778 = vmatprep.subr.bf16.mxu0 0
    %3779 = vmatpush1.bf16.msra.mxu0 %v2594
    %3780 = vmatprep.subr.bf16.mxu0 0
    %3781 = vmatpush1.bf16.msra.mxu0 %v2593
    %3782 = vmatprep.subr.bf16.mxu0 0
    %3783 = vmatpush1.bf16.msra.mxu0 %v2592
    %3784 = vmatprep.subr.bf16.mxu0 0
    %3785 = vmatpush1.bf16.msra.mxu0 %v2591
    %3786 = vmatprep.subr.bf16.mxu0 0
    %3787 = vmatpush1.bf16.msra.mxu0 %v2590
    %3788 = vmatprep.subr.bf16.mxu0 0
    %3789 = vmatpush2.bf16.msra.mxu0 %v2605
    %3790 = vmatprep.subr.bf16.mxu0 0
    %3791 = vmatpush2.bf16.msra.mxu0 %v2604
    %3792 = vmatprep.subr.bf16.mxu0 0
    %3793 = vmatpush2.bf16.msra.mxu0 %v2603
    %3794 = vmatprep.subr.bf16.mxu0 0
    %3795 = vmatpush2.bf16.msra.mxu0 %v2602
    %3796 = vmatprep.subr.bf16.mxu0 0
    %3797 = vmatpush2.bf16.msra.mxu0 %v2601
    %3798 = vmatprep.subr.bf16.mxu0 0
    %3799 = vmatpush2.bf16.msra.mxu0 %v2600
    %3800 = vmatprep.subr.bf16.mxu0 0
    %3801 = vmatpush2.bf16.msra.mxu0 %v2599
    %3802 = vmatprep.subr.bf16.mxu0 0
    %3803 = vmatpush2.bf16.msra.mxu0 %v2598
    %3804 = vmatprep.mubr.bf16.mxu0 %v2240
    %3805 = vmatmul.mubr.bf16.gmra.mxu0 %v2239
    %v3806 = vpop.f32.mrf.mxu0
    %v3807 = vadd.f32 0.0, %v3806
    %v3808 = vpop.f32.mrf.mxu0
    %v3809 = vpop.f32.mrf.mxu0
    %v3810 = vadd.f32 0.0, %v3809
    %v3811 = vpop.f32.mrf.mxu0
    %3812 = vmatprep.mubr.bf16.mxu0 %v2252
    %3813 = vmatmul.mubr.bf16.gmra.mxu0 %v2251
    %v3814 = vpop.f32.mrf.mxu0
    %v3815 = vadd.f32 0.0, %v3814
    %v3816 = vpop.f32.mrf.mxu0
    %v3817 = vpop.f32.mrf.mxu0
    %v3818 = vadd.f32 0.0, %v3817
    %v3819 = vpop.f32.mrf.mxu0
    %3820 = vmatprep.mubr.bf16.mxu0 %v2264
    %3821 = vmatmul.mubr.bf16.gmra.mxu0 %v2263
    %v3822 = vpop.f32.mrf.mxu0
    %v3823 = vadd.f32 0.0, %v3822
    %v3824 = vpop.f32.mrf.mxu0
    %v3825 = vpop.f32.mrf.mxu0
    %v3826 = vadd.f32 0.0, %v3825
    %v3827 = vpop.f32.mrf.mxu0
    %3828 = vmatprep.mubr.bf16.mxu0 %v2276
    %3829 = vmatmul.mubr.bf16.gmra.mxu0 %v2275
    %v3830 = vpop.f32.mrf.mxu0
    %v3831 = vadd.f32 0.0, %v3830
    %v3832 = vpop.f32.mrf.mxu0
    %v3833 = vpop.f32.mrf.mxu0
    %v3834 = vadd.f32 0.0, %v3833
    %v3835 = vpop.f32.mrf.mxu0
    %3836 = vmatprep.mubr.bf16.mxu0 %v2288
    %3837 = vmatmul.mubr.bf16.gmra.mxu0 %v2287
    %v3838 = vpop.f32.mrf.mxu0
    %v3839 = vadd.f32 0.0, %v3838
    %v3840 = vpop.f32.mrf.mxu0
    %v3841 = vpop.f32.mrf.mxu0
    %v3842 = vadd.f32 0.0, %v3841
    %v3843 = vpop.f32.mrf.mxu0
    %3844 = vmatprep.mubr.bf16.mxu0 %v2300
    %3845 = vmatmul.mubr.bf16.gmra.mxu0 %v2299
    %v3846 = vpop.f32.mrf.mxu0
    %v3847 = vadd.f32 0.0, %v3846
    %v3848 = vpop.f32.mrf.mxu0
    %v3849 = vpop.f32.mrf.mxu0
    %v3850 = vadd.f32 0.0, %v3849
    %v3851 = vpop.f32.mrf.mxu0
    %3852 = vmatprep.mubr.bf16.mxu0 %v2312
    %3853 = vmatmul.mubr.bf16.gmra.mxu0 %v2311
    %v3854 = vpop.f32.mrf.mxu0
    %v3855 = vadd.f32 0.0, %v3854
    %v3856 = vpop.f32.mrf.mxu0
    %v3857 = vpop.f32.mrf.mxu0
    %v3858 = vadd.f32 0.0, %v3857
    %v3859 = vpop.f32.mrf.mxu0
    %3860 = vmatprep.mubr.bf16.mxu0 %v2324
    %3861 = vmatmul.mubr.bf16.gmra.mxu0 %v2323
    %v3862 = vpop.f32.mrf.mxu0
    %v3863 = vadd.f32 0.0, %v3862
    %v3864 = vpop.f32.mrf.mxu0
    %v3865 = vpop.f32.mrf.mxu0
    %v3866 = vadd.f32 0.0, %v3865
    %v3867 = vpop.f32.mrf.mxu0
    %3868 = vmatprep.mubr.bf16.mxu0 %v2336
    %3869 = vmatmul.mubr.bf16.gmra.mxu0 %v2335
    %v3870 = vpop.f32.mrf.mxu0
    %v3871 = vadd.f32 0.0, %v3870
    %v3872 = vpop.f32.mrf.mxu0
    %v3873 = vpop.f32.mrf.mxu0
    %v3874 = vadd.f32 0.0, %v3873
    %v3875 = vpop.f32.mrf.mxu0
    %3876 = vmatprep.mubr.bf16.mxu0 %v2348
    %3877 = vmatmul.mubr.bf16.gmra.mxu0 %v2347
    %v3878 = vpop.f32.mrf.mxu0
    %v3879 = vadd.f32 0.0, %v3878
    %v3880 = vpop.f32.mrf.mxu0
    %v3881 = vpop.f32.mrf.mxu0
    %v3882 = vadd.f32 0.0, %v3881
    %v3883 = vpop.f32.mrf.mxu0
    %3884 = vmatprep.mubr.bf16.mxu0 %v2360
    %3885 = vmatmul.mubr.bf16.gmra.mxu0 %v2359
    %v3886 = vpop.f32.mrf.mxu0
    %v3887 = vadd.f32 0.0, %v3886
    %v3888 = vpop.f32.mrf.mxu0
    %v3889 = vpop.f32.mrf.mxu0
    %v3890 = vadd.f32 0.0, %v3889
    %v3891 = vpop.f32.mrf.mxu0
    %3892 = vmatprep.mubr.bf16.mxu0 %v2372
    %3893 = vmatmul.mubr.bf16.gmra.mxu0 %v2371
    %v3894 = vpop.f32.mrf.mxu0
    %v3895 = vadd.f32 0.0, %v3894
    %v3896 = vpop.f32.mrf.mxu0
    %v3897 = vpop.f32.mrf.mxu0
    %v3898 = vadd.f32 0.0, %v3897
    %v3899 = vpop.f32.mrf.mxu0
    %3900 = vmatprep.mubr.bf16.mxu0 %v2384
    %3901 = vmatmul.mubr.bf16.gmra.mxu0 %v2383
    %v3902 = vpop.f32.mrf.mxu0
    %v3903 = vadd.f32 0.0, %v3902
    %v3904 = vpop.f32.mrf.mxu0
    %v3905 = vpop.f32.mrf.mxu0
    %v3906 = vadd.f32 0.0, %v3905
    %v3907 = vpop.f32.mrf.mxu0
    %3908 = vmatprep.mubr.bf16.mxu0 %v2396
    %3909 = vmatmul.mubr.bf16.gmra.mxu0 %v2395
    %v3910 = vpop.f32.mrf.mxu0
    %v3911 = vadd.f32 0.0, %v3910
    %v3912 = vpop.f32.mrf.mxu0
    %v3913 = vpop.f32.mrf.mxu0
    %v3914 = vadd.f32 0.0, %v3913
    %v3915 = vpop.f32.mrf.mxu0
    %3916 = vmatprep.mubr.bf16.mxu0 %v2408
    %3917 = vmatmul.mubr.bf16.gmra.mxu0 %v2407
    %v3918 = vpop.f32.mrf.mxu0
    %v3919 = vadd.f32 0.0, %v3918
    %v3920 = vpop.f32.mrf.mxu0
    %v3921 = vpop.f32.mrf.mxu0
    %v3922 = vadd.f32 0.0, %v3921
    %v3923 = vpop.f32.mrf.mxu0
    %3924 = vmatprep.mubr.bf16.mxu0 %v2420
    %3925 = vmatmul.mubr.bf16.gmra.mxu0 %v2419
    %v3926 = vpop.f32.mrf.mxu0
    %v3927 = vadd.f32 0.0, %v3926
    %v3928 = vpop.f32.mrf.mxu0
    %v3929 = vpop.f32.mrf.mxu0
    %v3930 = vadd.f32 0.0, %v3929
    %v3931 = vpop.f32.mrf.mxu0
    %3932 = vmatprep.mubr.bf16.mxu0 %v2432
    %3933 = vmatmul.mubr.bf16.gmra.mxu0 %v2431
    %v3934 = vpop.f32.mrf.mxu0
    %v3935 = vadd.f32 0.0, %v3934
    %v3936 = vpop.f32.mrf.mxu0
    %v3937 = vpop.f32.mrf.mxu0
    %v3938 = vadd.f32 0.0, %v3937
    %v3939 = vpop.f32.mrf.mxu0
    %3940 = vmatprep.mubr.bf16.mxu0 %v2444
    %3941 = vmatmul.mubr.bf16.gmra.mxu0 %v2443
    %v3942 = vpop.f32.mrf.mxu0
    %v3943 = vadd.f32 0.0, %v3942
    %v3944 = vpop.f32.mrf.mxu0
    %v3945 = vpop.f32.mrf.mxu0
    %v3946 = vadd.f32 0.0, %v3945
    %v3947 = vpop.f32.mrf.mxu0
    %3948 = vdwg.mxu0
    %3949 = vmatprep.subr.bf16.mxu0 0
    %3950 = vmatpush1.bf16.msra.mxu0 %v2613
    %3951 = vmatprep.subr.bf16.mxu0 0
    %3952 = vmatpush1.bf16.msra.mxu0 %v2612
    %3953 = vmatprep.subr.bf16.mxu0 0
    %3954 = vmatpush1.bf16.msra.mxu0 %v2611
    %3955 = vmatprep.subr.bf16.mxu0 0
    %3956 = vmatpush1.bf16.msra.mxu0 %v2610
    %3957 = vmatprep.subr.bf16.mxu0 0
    %3958 = vmatpush1.bf16.msra.mxu0 %v2609
    %3959 = vmatprep.subr.bf16.mxu0 0
    %3960 = vmatpush1.bf16.msra.mxu0 %v2608
    %3961 = vmatprep.subr.bf16.mxu0 0
    %3962 = vmatpush1.bf16.msra.mxu0 %v2607
    %3963 = vmatprep.subr.bf16.mxu0 0
    %3964 = vmatpush1.bf16.msra.mxu0 %v2606
    %3965 = vmatprep.subr.bf16.mxu0 0
    %3966 = vmatpush2.bf16.msra.mxu0 0
    %3967 = vmatprep.subr.bf16.mxu0 0
    %3968 = vmatpush2.bf16.msra.mxu0 0
    %3969 = vmatprep.subr.bf16.mxu0 0
    %3970 = vmatpush2.bf16.msra.mxu0 0
    %3971 = vmatprep.subr.bf16.mxu0 0
    %3972 = vmatpush2.bf16.msra.mxu0 0
    %3973 = vmatprep.subr.bf16.mxu0 0
    %3974 = vmatpush2.bf16.msra.mxu0 0
    %3975 = vmatprep.subr.bf16.mxu0 0
    %3976 = vmatpush2.bf16.msra.mxu0 0
    %3977 = vmatprep.subr.bf16.mxu0 0
    %3978 = vmatpush2.bf16.msra.mxu0 0
    %3979 = vmatprep.subr.bf16.mxu0 0
    %3980 = vmatpush2.bf16.msra.mxu0 0
    %3981 = vmatprep.mubr.bf16.mxu0 0
    %3982 = vmatmul.mubr.bf16.gmra.mxu0 %v2241
    %v3983 = vpop.f32.mrf.mxu0
    %v3984 = vadd.f32 %v3807, %v3983
    %v3985 = vpop.f32.mrf.mxu0
    %v3986 = vpop.f32.mrf.mxu0
    %v3987 = vadd.f32 %v3810, %v3986
    %v3988 = vpop.f32.mrf.mxu0
    %3989 = vmatprep.mubr.bf16.mxu0 0
    %3990 = vmatmul.mubr.bf16.gmra.mxu0 %v2253
    %v3991 = vpop.f32.mrf.mxu0
    %v3992 = vadd.f32 %v3815, %v3991
    %v3993 = vpop.f32.mrf.mxu0
    %v3994 = vpop.f32.mrf.mxu0
    %v3995 = vadd.f32 %v3818, %v3994
    %v3996 = vpop.f32.mrf.mxu0
    %3997 = vmatprep.mubr.bf16.mxu0 0
    %3998 = vmatmul.mubr.bf16.gmra.mxu0 %v2265
    %v3999 = vpop.f32.mrf.mxu0
    %v4000 = vadd.f32 %v3823, %v3999
    %v4001 = vpop.f32.mrf.mxu0
    %v4002 = vpop.f32.mrf.mxu0
    %v4003 = vadd.f32 %v3826, %v4002
    %v4004 = vpop.f32.mrf.mxu0
    %4005 = vmatprep.mubr.bf16.mxu0 0
    %4006 = vmatmul.mubr.bf16.gmra.mxu0 %v2277
    %v4007 = vpop.f32.mrf.mxu0
    %v4008 = vadd.f32 %v3831, %v4007
    %v4009 = vpop.f32.mrf.mxu0
    %v4010 = vpop.f32.mrf.mxu0
    %v4011 = vadd.f32 %v3834, %v4010
    %v4012 = vpop.f32.mrf.mxu0
    %4013 = vmatprep.mubr.bf16.mxu0 0
    %4014 = vmatmul.mubr.bf16.gmra.mxu0 %v2289
    %v4015 = vpop.f32.mrf.mxu0
    %v4016 = vadd.f32 %v3839, %v4015
    %v4017 = vpop.f32.mrf.mxu0
    %v4018 = vpop.f32.mrf.mxu0
    %v4019 = vadd.f32 %v3842, %v4018
    %v4020 = vpop.f32.mrf.mxu0
    %4021 = vmatprep.mubr.bf16.mxu0 0
    %4022 = vmatmul.mubr.bf16.gmra.mxu0 %v2301
    %v4023 = vpop.f32.mrf.mxu0
    %v4024 = vadd.f32 %v3847, %v4023
    %v4025 = vpop.f32.mrf.mxu0
    %v4026 = vpop.f32.mrf.mxu0
    %v4027 = vadd.f32 %v3850, %v4026
    %v4028 = vpop.f32.mrf.mxu0
    %4029 = vmatprep.mubr.bf16.mxu0 0
    %4030 = vmatmul.mubr.bf16.gmra.mxu0 %v2313
    %v4031 = vpop.f32.mrf.mxu0
    %v4032 = vadd.f32 %v3855, %v4031
    %v4033 = vpop.f32.mrf.mxu0
    %v4034 = vpop.f32.mrf.mxu0
    %v4035 = vadd.f32 %v3858, %v4034
    %v4036 = vpop.f32.mrf.mxu0
    %4037 = vmatprep.mubr.bf16.mxu0 0
    %4038 = vmatmul.mubr.bf16.gmra.mxu0 %v2325
    %v4039 = vpop.f32.mrf.mxu0
    %v4040 = vadd.f32 %v3863, %v4039
    %v4041 = vpop.f32.mrf.mxu0
    %v4042 = vpop.f32.mrf.mxu0
    %v4043 = vadd.f32 %v3866, %v4042
    %v4044 = vpop.f32.mrf.mxu0
    %4045 = vmatprep.mubr.bf16.mxu0 0
    %4046 = vmatmul.mubr.bf16.gmra.mxu0 %v2337
    %v4047 = vpop.f32.mrf.mxu0
    %v4048 = vadd.f32 %v3871, %v4047
    %v4049 = vpop.f32.mrf.mxu0
    %v4050 = vpop.f32.mrf.mxu0
    %v4051 = vadd.f32 %v3874, %v4050
    %v4052 = vpop.f32.mrf.mxu0
    %4053 = vmatprep.mubr.bf16.mxu0 0
    %4054 = vmatmul.mubr.bf16.gmra.mxu0 %v2349
    %v4055 = vpop.f32.mrf.mxu0
    %v4056 = vadd.f32 %v3879, %v4055
    %v4057 = vpop.f32.mrf.mxu0
    %v4058 = vpop.f32.mrf.mxu0
    %v4059 = vadd.f32 %v3882, %v4058
    %v4060 = vpop.f32.mrf.mxu0
    %4061 = vmatprep.mubr.bf16.mxu0 0
    %4062 = vmatmul.mubr.bf16.gmra.mxu0 %v2361
    %v4063 = vpop.f32.mrf.mxu0
    %v4064 = vadd.f32 %v3887, %v4063
    %v4065 = vpop.f32.mrf.mxu0
    %v4066 = vpop.f32.mrf.mxu0
    %v4067 = vadd.f32 %v3890, %v4066
    %v4068 = vpop.f32.mrf.mxu0
    %4069 = vmatprep.mubr.bf16.mxu0 0
    %4070 = vmatmul.mubr.bf16.gmra.mxu0 %v2373
    %v4071 = vpop.f32.mrf.mxu0
    %v4072 = vadd.f32 %v3895, %v4071
    %v4073 = vpop.f32.mrf.mxu0
    %v4074 = vpop.f32.mrf.mxu0
    %v4075 = vadd.f32 %v3898, %v4074
    %v4076 = vpop.f32.mrf.mxu0
    %4077 = vmatprep.mubr.bf16.mxu0 0
    %4078 = vmatmul.mubr.bf16.gmra.mxu0 %v2385
    %v4079 = vpop.f32.mrf.mxu0
    %v4080 = vadd.f32 %v3903, %v4079
    %v4081 = vpop.f32.mrf.mxu0
    %v4082 = vpop.f32.mrf.mxu0
    %v4083 = vadd.f32 %v3906, %v4082
    %v4084 = vpop.f32.mrf.mxu0
    %4085 = vmatprep.mubr.bf16.mxu0 0
    %4086 = vmatmul.mubr.bf16.gmra.mxu0 %v2397
    %v4087 = vpop.f32.mrf.mxu0
    %v4088 = vadd.f32 %v3911, %v4087
    %v4089 = vpop.f32.mrf.mxu0
    %v4090 = vpop.f32.mrf.mxu0
    %v4091 = vadd.f32 %v3914, %v4090
    %v4092 = vpop.f32.mrf.mxu0
    %4093 = vmatprep.mubr.bf16.mxu0 0
    %4094 = vmatmul.mubr.bf16.gmra.mxu0 %v2409
    %v4095 = vpop.f32.mrf.mxu0
    %v4096 = vadd.f32 %v3919, %v4095
    %v4097 = vpop.f32.mrf.mxu0
    %v4098 = vpop.f32.mrf.mxu0
    %v4099 = vadd.f32 %v3922, %v4098
    %v4100 = vpop.f32.mrf.mxu0
    %4101 = vmatprep.mubr.bf16.mxu0 0
    %4102 = vmatmul.mubr.bf16.gmra.mxu0 %v2421
    %v4103 = vpop.f32.mrf.mxu0
    %v4104 = vadd.f32 %v3927, %v4103
    %v4105 = vpop.f32.mrf.mxu0
    %v4106 = vpop.f32.mrf.mxu0
    %v4107 = vadd.f32 %v3930, %v4106
    %v4108 = vpop.f32.mrf.mxu0
    %4109 = vmatprep.mubr.bf16.mxu0 0
    %4110 = vmatmul.mubr.bf16.gmra.mxu0 %v2433
    %v4111 = vpop.f32.mrf.mxu0
    %v4112 = vadd.f32 %v3935, %v4111
    %v4113 = vpop.f32.mrf.mxu0
    %v4114 = vpop.f32.mrf.mxu0
    %v4115 = vadd.f32 %v3938, %v4114
    %v4116 = vpop.f32.mrf.mxu0
    %4117 = vmatprep.mubr.bf16.mxu0 0
    %4118 = vmatmul.mubr.bf16.gmra.mxu0 %v2445
    %v4119 = vpop.f32.mrf.mxu0
    %v4120 = vadd.f32 %v3943, %v4119
    %v4121 = vpop.f32.mrf.mxu0
    %v4122 = vpop.f32.mrf.mxu0
    %v4123 = vadd.f32 %v3946, %v4122
    %v4124 = vpop.f32.mrf.mxu0
    %4125 = vdwg.mxu0
    %v4126 = vmax.f32 %v3736, %v3984
    %v4127 = vmax.f32 %v3737, %v3987
    %v4128 = vmax.f32 %v3738, %v3992
    %v4129 = vmax.f32 %v3739, %v3995
    %v4130 = vmax.f32 %v3740, %v4000
    %v4131 = vmax.f32 %v3741, %v4003
    %v4132 = vmax.f32 %v3742, %v4008
    %v4133 = vmax.f32 %v3743, %v4011
    %v4134 = vmax.f32 %v3744, %v4016
    %v4135 = vmax.f32 %v3745, %v4019
    %v4136 = vmax.f32 %v3746, %v4024
    %v4137 = vmax.f32 %v3747, %v4027
    %v4138 = vmax.f32 %v3748, %v4032
    %v4139 = vmax.f32 %v3749, %v4035
    %v4140 = vmax.f32 %v3750, %v4040
    %v4141 = vmax.f32 %v3751, %v4043
    %v4142 = vmax.f32 %v3752, %v4048
    %v4143 = vmax.f32 %v3753, %v4051
    %v4144 = vmax.f32 %v3754, %v4056
    %v4145 = vmax.f32 %v3755, %v4059
    %v4146 = vmax.f32 %v3756, %v4064
    %v4147 = vmax.f32 %v3757, %v4067
    %v4148 = vmax.f32 %v3758, %v4072
    %v4149 = vmax.f32 %v3759, %v4075
    %v4150 = vmax.f32 %v3760, %v4080
    %v4151 = vmax.f32 %v3761, %v4083
    %v4152 = vmax.f32 %v3762, %v4088
    %v4153 = vmax.f32 %v3763, %v4091
    %v4154 = vmax.f32 %v3764, %v4096
    %v4155 = vmax.f32 %v3765, %v4099
    %v4156 = vmax.f32 %v3766, %v4104
    %v4157 = vmax.f32 %v3767, %v4107
    %v4158 = vmax.f32 %v3768, %v4112
    %v4159 = vmax.f32 %v3769, %v4115
    %v4160 = vmax.f32 %v3770, %v4120
    %v4161 = vmax.f32 %v3771, %v4123
    %v4162 = vld [vmem:[#allocation6] sm:$0x1]
    %v4164 = vlaneseq
    %v4165 = vshrl.u32 %v4164, 7
    %v4166 = vsub.s32 0, %v4165
    %v4167 = vrot.slane %v4162, %v4166
    %v4169 = vadd.f32 %v4126, %v4167
    %v4170 = vadd.f32 %v4127, %v4167
    %v4171 = vadd.f32 %v4128, %v4167
    %v4172 = vadd.f32 %v4129, %v4167
    %v4173 = vadd.f32 %v4130, %v4167
    %v4174 = vadd.f32 %v4131, %v4167
    %v4175 = vadd.f32 %v4132, %v4167
    %v4176 = vadd.f32 %v4133, %v4167
    %v4177 = vadd.f32 %v4134, %v4167
    %v4178 = vadd.f32 %v4135, %v4167
    %v4179 = vadd.f32 %v4136, %v4167
    %v4180 = vadd.f32 %v4137, %v4167
    %v4181 = vadd.f32 %v4138, %v4167
    %v4182 = vadd.f32 %v4139, %v4167
    %v4183 = vadd.f32 %v4140, %v4167
    %v4184 = vadd.f32 %v4141, %v4167
    %v4185 = vadd.f32 %v4142, %v4167
    %v4186 = vadd.f32 %v4143, %v4167
    %v4187 = vadd.f32 %v4144, %v4167
    %v4188 = vadd.f32 %v4145, %v4167
    %v4189 = vadd.f32 %v4146, %v4167
    %v4190 = vadd.f32 %v4147, %v4167
    %v4191 = vadd.f32 %v4148, %v4167
    %v4192 = vadd.f32 %v4149, %v4167
    %v4193 = vadd.f32 %v4150, %v4167
    %v4194 = vadd.f32 %v4151, %v4167
    %v4195 = vadd.f32 %v4152, %v4167
    %v4196 = vadd.f32 %v4153, %v4167
    %v4197 = vadd.f32 %v4154, %v4167
    %v4198 = vadd.f32 %v4155, %v4167
    %v4199 = vadd.f32 %v4156, %v4167
    %v4200 = vadd.f32 %v4157, %v4167
    %v4201 = vadd.f32 %v4158, %v4167
    %v4202 = vadd.f32 %v4159, %v4167
    %v4203 = vadd.f32 %v4160, %v4167
    %v4204 = vadd.f32 %v4161, %v4167
    %v4205 = vmax.f32 %v4169, 0.0
    %v4206 = vmax.f32 %v4170, 0.0
    %v4207 = vmax.f32 %v4171, 0.0
    %v4208 = vmax.f32 %v4172, 0.0
    %v4209 = vmax.f32 %v4173, 0.0
    %v4210 = vmax.f32 %v4174, 0.0
    %v4211 = vmax.f32 %v4175, 0.0
    %v4212 = vmax.f32 %v4176, 0.0
    %v4213 = vmax.f32 %v4177, 0.0
    %v4214 = vmax.f32 %v4178, 0.0
    %v4215 = vmax.f32 %v4179, 0.0
    %v4216 = vmax.f32 %v4180, 0.0
    %v4217 = vmax.f32 %v4181, 0.0
    %v4218 = vmax.f32 %v4182, 0.0
    %v4219 = vmax.f32 %v4183, 0.0
    %v4220 = vmax.f32 %v4184, 0.0
    %v4221 = vmax.f32 %v4185, 0.0
    %v4222 = vmax.f32 %v4186, 0.0
    %v4223 = vmax.f32 %v4187, 0.0
    %v4224 = vmax.f32 %v4188, 0.0
    %v4225 = vmax.f32 %v4189, 0.0
    %v4226 = vmax.f32 %v4190, 0.0
    %v4227 = vmax.f32 %v4191, 0.0
    %v4228 = vmax.f32 %v4192, 0.0
    %v4229 = vmax.f32 %v4193, 0.0
    %v4230 = vmax.f32 %v4194, 0.0
    %v4231 = vmax.f32 %v4195, 0.0
    %v4232 = vmax.f32 %v4196, 0.0
    %v4233 = vmax.f32 %v4197, 0.0
    %v4234 = vmax.f32 %v4198, 0.0
    %v4235 = vmax.f32 %v4199, 0.0
    %v4236 = vmax.f32 %v4200, 0.0
    %v4237 = vmax.f32 %v4201, 0.0
    %v4238 = vmax.f32 %v4202, 0.0
    %v4239 = vmax.f32 %v4203, 0.0
    %v4240 = vmax.f32 %v4204, 0.0
    %v4241 = vpack.c.bf16 %v4206, %v4205
    %v4242 = vpack.c.bf16 %v4208, %v4207
    %v4243 = vpack.c.bf16 %v4210, %v4209
    %v4244 = vpack.c.bf16 %v4212, %v4211
    %v4245 = vpack.c.bf16 %v4214, %v4213
    %v4246 = vpack.c.bf16 %v4216, %v4215
    %v4247 = vpack.c.bf16 %v4218, %v4217
    %v4248 = vpack.c.bf16 %v4220, %v4219
    %v4249 = vpack.c.bf16 %v4222, %v4221
    %v4250 = vpack.c.bf16 %v4224, %v4223
    %v4251 = vpack.c.bf16 %v4226, %v4225
    %v4252 = vpack.c.bf16 %v4228, %v4227
    %v4253 = vpack.c.bf16 %v4230, %v4229
    %v4254 = vpack.c.bf16 %v4232, %v4231
    %v4255 = vpack.c.bf16 %v4234, %v4233
    %v4256 = vpack.c.bf16 %v4236, %v4235
    %v4257 = vpack.c.bf16 %v4238, %v4237
    %v4258 = vpack.c.bf16 %v4240, %v4239
    %v4277 = vunpack.c.l.b16 %v4241
    %v4278 = vunpack.c.h.b16 %v4241
    %v4279 = vunpack.c.l.b16 %v4242
    %v4280 = vunpack.c.h.b16 %v4242
    %v4281 = vunpack.c.l.b16 %v4243
    %v4282 = vunpack.c.h.b16 %v4243
    %v4283 = vunpack.c.l.b16 %v4244
    %v4284 = vunpack.c.h.b16 %v4244
    %v4285 = vunpack.c.l.b16 %v4245
    %v4286 = vunpack.c.h.b16 %v4245
    %v4287 = vunpack.c.l.b16 %v4246
    %v4288 = vunpack.c.h.b16 %v4246
    %v4289 = vunpack.c.l.b16 %v4247
    %v4290 = vunpack.c.h.b16 %v4247
    %v4291 = vunpack.c.l.b16 %v4248
    %v4292 = vunpack.c.h.b16 %v4248
    %v4293 = vunpack.c.l.b16 %v4249
    %v4294 = vunpack.c.h.b16 %v4249
    %v4295 = vunpack.c.l.b16 %v4250
    %v4296 = vunpack.c.h.b16 %v4250
    %v4297 = vunpack.c.l.b16 %v4251
    %v4298 = vunpack.c.h.b16 %v4251
    %v4299 = vunpack.c.l.b16 %v4252
    %v4300 = vunpack.c.h.b16 %v4252
    %v4301 = vunpack.c.l.b16 %v4253
    %v4302 = vunpack.c.h.b16 %v4253
    %v4303 = vunpack.c.l.b16 %v4254
    %v4304 = vunpack.c.h.b16 %v4254
    %v4305 = vunpack.c.l.b16 %v4255
    %v4306 = vunpack.c.h.b16 %v4255
    %v4307 = vunpack.c.l.b16 %v4256
    %v4308 = vunpack.c.h.b16 %v4256
    %v4309 = vunpack.c.l.b16 %v4257
    %v4310 = vunpack.c.h.b16 %v4257
    %v4311 = vunpack.c.l.b16 %v4258
    %v4312 = vunpack.c.h.b16 %v4258
    %v4313 = vpack.c.b16 %v4277, %v4277
    %v4314 = vpack.c.b16 %v4278, %v4278
    %v4315 = vpack.c.b16 %v4279, %v4279
    %v4316 = vpack.c.b16 %v4280, %v4280
    %v4317 = vpack.c.b16 %v4281, %v4281
    %v4318 = vpack.c.b16 %v4282, %v4282
    %v4319 = vpack.c.b16 %v4283, %v4283
    %v4320 = vpack.c.b16 %v4284, %v4284
    %v4321 = vpack.c.b16 %v4285, %v4285
    %v4322 = vpack.c.b16 %v4286, %v4286
    %v4323 = vpack.c.b16 %v4287, %v4287
    %v4324 = vpack.c.b16 %v4288, %v4288
    %v4325 = vpack.c.b16 %v4289, %v4289
    %v4326 = vpack.c.b16 %v4290, %v4290
    %v4327 = vpack.c.b16 %v4291, %v4291
    %v4328 = vpack.c.b16 %v4292, %v4292
    %v4329 = vpack.c.b16 %v4293, %v4293
    %v4330 = vpack.c.b16 %v4294, %v4294
    %v4331 = vpack.c.b16 %v4295, %v4295
    %v4332 = vpack.c.b16 %v4296, %v4296
    %v4333 = vpack.c.b16 %v4297, %v4297
    %v4334 = vpack.c.b16 %v4298, %v4298
    %v4335 = vpack.c.b16 %v4299, %v4299
    %v4336 = vpack.c.b16 %v4300, %v4300
    %v4337 = vpack.c.b16 %v4301, %v4301
    %v4338 = vpack.c.b16 %v4302, %v4302
    %v4339 = vpack.c.b16 %v4303, %v4303
    %v4340 = vpack.c.b16 %v4304, %v4304
    %v4341 = vpack.c.b16 %v4305, %v4305
    %v4342 = vpack.c.b16 %v4306, %v4306
    %v4343 = vpack.c.b16 %v4307, %v4307
    %v4344 = vpack.c.b16 %v4308, %v4308
    %v4345 = vpack.c.b16 %v4309, %v4309
    %v4346 = vpack.c.b16 %v4310, %v4310
    %v4347 = vpack.c.b16 %v4311, %v4311
    %v4348 = vpack.c.b16 %v4312, %v4312
    %vm4385 = vcmask 519168
    %4386 = vst.msk [vmem:[%s5] sm:$0xf] %vm4385, %v4313
    %4387 = vst.msk [vmem:[%s5 + $0x4] sm:$0xf] %vm4385, %v4314
    %4388 = vst.msk [vmem:[%s5 + $0x8] sm:$0xf] %vm4385, %v4315
    %4389 = vst.msk [vmem:[%s5 + $0xc] sm:$0xf] %vm4385, %v4316
    %4390 = vst.msk [vmem:[%s5 + $0x10] sm:$0xf] %vm4385, %v4317
    %4391 = vst.msk [vmem:[%s5 + $0x14] sm:$0xf] %vm4385, %v4318
    %4392 = vst.msk [vmem:[%s5 + $0x18] sm:$0xf] %vm4385, %v4319
    %4393 = vst.msk [vmem:[%s5 + $0x1c] sm:$0xf] %vm4385, %v4320
    %4394 = vst.msk [vmem:[%s5 + $0x20] sm:$0xf] %vm4385, %v4321
    %4395 = vst.msk [vmem:[%s5 + $0x24] sm:$0xf] %vm4385, %v4322
    %4396 = vst.msk [vmem:[%s5 + $0x28] sm:$0xf] %vm4385, %v4323
    %4397 = vst.msk [vmem:[%s5 + $0x2c] sm:$0xf] %vm4385, %v4324
    %4398 = vst.msk [vmem:[%s5 + $0x30] sm:$0xf] %vm4385, %v4325
    %4399 = vst.msk [vmem:[%s5 + $0x34] sm:$0xf] %vm4385, %v4326
    %4400 = vst.msk [vmem:[%s5 + $0x38] sm:$0xf] %vm4385, %v4327
    %4401 = vst.msk [vmem:[%s5 + $0x3c] sm:$0xf] %vm4385, %v4328
    %4402 = vst.msk [vmem:[%s5 + $0x40] sm:$0xf] %vm4385, %v4329
    %4403 = vst.msk [vmem:[%s5 + $0x44] sm:$0xf] %vm4385, %v4330
    %4404 = vst.msk [vmem:[%s5 + $0x48] sm:$0xf] %vm4385, %v4331
    %4405 = vst.msk [vmem:[%s5 + $0x4c] sm:$0xf] %vm4385, %v4332
    %4406 = vst.msk [vmem:[%s5 + $0x50] sm:$0xf] %vm4385, %v4333
    %4407 = vst.msk [vmem:[%s5 + $0x54] sm:$0xf] %vm4385, %v4334
    %4408 = vst.msk [vmem:[%s5 + $0x58] sm:$0xf] %vm4385, %v4335
    %4409 = vst.msk [vmem:[%s5 + $0x5c] sm:$0xf] %vm4385, %v4336
    %4410 = vst.msk [vmem:[%s5 + $0x60] sm:$0xf] %vm4385, %v4337
    %4411 = vst.msk [vmem:[%s5 + $0x64] sm:$0xf] %vm4385, %v4338
    %4412 = vst.msk [vmem:[%s5 + $0x68] sm:$0xf] %vm4385, %v4339
    %4413 = vst.msk [vmem:[%s5 + $0x6c] sm:$0xf] %vm4385, %v4340
    %4414 = vst.msk [vmem:[%s5 + $0x70] sm:$0xf] %vm4385, %v4341
    %4415 = vst.msk [vmem:[%s5 + $0x74] sm:$0xf] %vm4385, %v4342
    %4416 = vst.msk [vmem:[%s5 + $0x78] sm:$0xf] %vm4385, %v4343
    %4417 = vst.msk [vmem:[%s5 + $0x7c] sm:$0xf] %vm4385, %v4344
    %4418 = vst.msk [vmem:[%s5 + $0x80] sm:$0xf] %vm4385, %v4345
    %4419 = vst.msk [vmem:[%s5 + $0x84] sm:$0xf] %vm4385, %v4346
    %4420 = vst.msk [vmem:[%s5 + $0x88] sm:$0xf] %vm4385, %v4347
    %4421 = vst.msk [vmem:[%s5 + $0x8c] sm:$0xf] %vm4385, %v4348
    // Predicated region
    $region34: #{zknn_conv_forward.2} parent=1 // pred_check
      _
    $region35: #{zknn_conv_forward.2} parent=1 // pred_check_branch
      %4423 = sbr.rel (0) target = $region37
    $region36: #{zknn_conv_forward.2} parent=1 // pred_region
      _
    $region37: #{zknn_conv_forward.2} parent=1 // pred_fallthru
      _
    // Predicated region
    $region38: #{zknn_conv_forward.2} parent=1 // pred_check
      _
    $region39: #{zknn_conv_forward.2} parent=1 // pred_check_branch
      %4425 = sbr.rel (0) target = $region41
    $region40: #{zknn_conv_forward.2} parent=1 // pred_region
      _
    $region41: #{zknn_conv_forward.2} parent=1 // pred_fallthru
      _
    %4426 = vsyncpa [#allocation3], 1
    %4427 = vsyncpa [#allocation5], 1

</llo_original>
